<compile_context>
chip_gen: v5e
topology: v5e:2x2
jax: 0.10.0
libtpu: 0.0.40
codegen_flags: <defaults>
</compile_context>

<pallas_src>
import functools

import jax
import jax.numpy as jnp
import numpy as np
from jax.experimental import pallas as pl
from jax.experimental.pallas import tpu as pltpu

# Near-exact f32 matmuls for the (tiny) in-kernel RNN dots and the pure-JAX
# reference, so the numerical comparison is meaningful.  The hot bf16
# projection dot overrides this with an explicit Precision.DEFAULT.
jax.config.update("jax_default_matmul_precision", "highest")


# ----------------------------------------------------------------------------
# Fused kernel: embedding gather + dot-product attention + RNN(tanh) cell
# (grid step 0 only) and one vocab tile of the output projection (every step).
# ----------------------------------------------------------------------------
def _decoder_step_kernel(ids_ref,                       # SMEM (B,) int32
                         emb_hbm,                       # HBM  (V, E)
                         h_prev_ref,                    # VMEM (B, H)
                         enc_ref,                       # VMEM (B, S, H)
                         w_emb_ref,                     # VMEM (E, H)
                         w_ctx_ref,                     # VMEM (H, H)
                         w_hh_ref,                      # VMEM (H, H)
                         b_rnn_ref,                     # VMEM (1, H)
                         w_out_ref,                     # VMEM (H, tn) bf16
                         b_out_ref,                     # VMEM (1, tn)
                         logits_ref,                    # out  (B, tn)
                         hnew_ref,                      # out  (B, H)  resident
                         alpha_ref,                     # out  (B, S)  resident
                         emb_buf,                       # scratch VMEM (B, E)
                         h_bf_buf,                      # scratch VMEM (B, H) bf16
                         emb_sem):                      # scratch DMA sems (B,)
    j = pl.program_id(0)

    @pl.when(j == 0)
    def _attention_and_rnn():
        B = emb_buf.shape[0]

        # -- start the embedding row gathers; overlap with attention compute.
        for b in range(B):
            pltpu.make_async_copy(
                emb_hbm.at[pl.ds(ids_ref[b], 1), :],
                emb_buf.at[pl.ds(b, 1), :],
                emb_sem.at[b]).start()

        h_prev = h_prev_ref[...]                           # (B, H)
        enc = enc_ref[...]                                 # (B, S, H)

        # -- Luong dot-product attention on the (otherwise idle) VPU/XLU.
        scores = jnp.sum(h_prev[:, None, :] * enc, axis=-1)       # (B, S)
        m = jnp.max(scores, axis=-1, keepdims=True)
        e = jnp.exp(scores - m)
        alpha = e / jnp.sum(e, axis=-1, keepdims=True)             # exact div
        alpha_ref[...] = alpha
        ctx = jnp.sum(alpha[:, :, None] * enc, axis=1)             # (B, H)

        # -- finish the gather, then the RNN(tanh) cell.
        for b in range(B):
            pltpu.make_async_copy(
                emb_hbm.at[pl.ds(ids_ref[b], 1), :],
                emb_buf.at[pl.ds(b, 1), :],
                emb_sem.at[b]).wait()
        emb = emb_buf[...]                                 # (B, E)

        pre = (jnp.dot(emb, w_emb_ref[...], preferred_element_type=jnp.float32)
               + jnp.dot(ctx, w_ctx_ref[...], preferred_element_type=jnp.float32)
               + jnp.dot(h_prev, w_hh_ref[...], preferred_element_type=jnp.float32)
               + b_rnn_ref[...])                           # (B, H)
        h_new = jnp.tanh(pre)
        hnew_ref[...] = h_new
        h_bf_buf[...] = h_new.astype(jnp.bfloat16)         # cast once for MXU

    # -- output projection of this vocab tile (every grid step).
    logits_ref[...] = (jnp.dot(h_bf_buf[...], w_out_ref[...],
                               preferred_element_type=jnp.float32,
                               precision=jax.lax.Precision.DEFAULT)
                       + b_out_ref[...])


def _pick_vocab_tile(v_pad, max_tile=4096):
    """Largest multiple of 256 that divides v_pad and is <= max_tile.

    v_pad is always a multiple of 256 (padded at init), so 256 always works.
    """
    best = 256
    t = 256
    while t <= min(v_pad, max_tile):
        if v_pad % t == 0:
            best = t
        t += 256
    return best


# ----------------------------------------------------------------------------
# Forward wrapper
# ----------------------------------------------------------------------------
@functools.partial(jax.jit, static_argnames=("vocab_tile",))
def decoder_with_attention_forward(inputs, hidden, encoder_output, params,
                                   vocab_tile=None):
    """Single-step decoder forward (cell_type='rnn', unidirectional).

    inputs:          (B, 1) int32 token ids
    hidden:          (num_layers=1, B, H) float32
    encoder_output:  (B, S, H) float32
    returns (output (B,1,V), hidden_state (1,B,H), alpha (B,1,S))
    """
    B, T = inputs.shape
    assert T == 1, "decoder consumes one token per step"
    S, H = encoder_output.shape[1], encoder_output.shape[2]
    E = params["w_emb_t"].shape[0]
    V = params["embedding"].shape[0]
    V_pad = params["w_out_t"].shape[1]

    ids = inputs[:, 0].astype(jnp.int32)              # (B,) scalar prefetch
    h_prev = hidden[-1]                                # (B, H)

    tn = vocab_tile if vocab_tile is not None else _pick_vocab_tile(V_pad)
    assert V_pad % tn == 0 and tn % 256 == 0, "vocab tile must divide padded V"

    grid_spec = pltpu.PrefetchScalarGridSpec(
        num_scalar_prefetch=1,
        grid=(V_pad // tn,),
        in_specs=[
            pl.BlockSpec(memory_space=pl.ANY),                      # embedding (HBM)
            pl.BlockSpec((B, H), lambda j, ids: (0, 0)),            # h_prev (resident)
            pl.BlockSpec((B, S, H), lambda j, ids: (0, 0, 0)),      # encoder_output
            pl.BlockSpec((E, H), lambda j, ids: (0, 0)),            # W_ih[:, :E]^T
            pl.BlockSpec((H, H), lambda j, ids: (0, 0)),            # W_ih[:, E:]^T
            pl.BlockSpec((H, H), lambda j, ids: (0, 0)),            # W_hh^T
            pl.BlockSpec((1, H), lambda j, ids: (0, 0)),            # b_ih + b_hh
            pl.BlockSpec((H, tn), lambda j, ids: (0, j)),           # W_out^T tile (bf16)
            pl.BlockSpec((1, tn), lambda j, ids: (0, j)),           # b_out tile
        ],
        out_specs=(
            pl.BlockSpec((B, tn), lambda j, ids: (0, j)),           # logits tile
            pl.BlockSpec((B, H), lambda j, ids: (0, 0)),            # h_new (resident)
            pl.BlockSpec((B, S), lambda j, ids: (0, 0)),            # alpha (resident)
        ),
        scratch_shapes=[
            pltpu.VMEM((B, E), jnp.float32),        # gathered embedding rows
            pltpu.VMEM((B, H), jnp.bfloat16),       # h_new cast once for the MXU
            pltpu.SemaphoreType.DMA((B,)),          # one sem per gathered row
        ],
    )

    logits_pad, h_new, alpha = pl.pallas_call(
        _decoder_step_kernel,
        grid_spec=grid_spec,
        out_shape=(
            jax.ShapeDtypeStruct((B, V_pad), jnp.float32),
            jax.ShapeDtypeStruct((B, H), jnp.float32),
            jax.ShapeDtypeStruct((B, S), jnp.float32),
        ),
        compiler_params=pltpu.CompilerParams(
            # h_new/alpha are computed at step 0 and reused by every vocab
            # tile, so the grid axis must stay sequential.
            dimension_semantics=("arbitrary",)),
    )(ids, params["embedding"], h_prev, encoder_output,
      params["w_emb_t"], params["w_ctx_t"], params["w_hh_t"], params["b_rnn"],
      params["w_out_t"], params["b_out"])

    output = logits_pad[:, :V][:, None, :]     # (B, 1, V)  drop vocab padding
    hidden_state = h_new[None, :, :]           # (1, B, H)
    alpha = alpha[:, None, :]                  # (B, 1, S)
    return output, hidden_state, alpha


# ----------------------------------------------------------------------------
# Deterministic parameter init (shapes follow the nn.Module __init__)
# ----------------------------------------------------------------------------
def init_params(key, output_size, hidden_size, embedding_size):
    H, E, V = hidden_size, embedding_size, output_size
    ks = jax.random.split(key, 7)
    s = 1.0 / np.sqrt(H)

    # nn.Embedding(output_size, embedding_size): N(0, 1)
    embedding = jax.random.normal(ks[0], (V, E), jnp.float32)

    # nn.RNN: weight_ih_l0 (H, E+H) acting on [embedded ; context],
    #         weight_hh_l0 (H, H) acting on h_prev, biases (H,)
    w_ih = jax.random.uniform(ks[1], (H, E + H), jnp.float32, -s, s)
    w_hh = jax.random.uniform(ks[2], (H, H), jnp.float32, -s, s)
    b_ih = jax.random.uniform(ks[3], (H,), jnp.float32, -s, s)
    b_hh = jax.random.uniform(ks[4], (H,), jnp.float32, -s, s)

    # nn.Linear(H, V): weight (V, H), bias (V,)
    w_out = jax.random.uniform(ks[5], (V, H), jnp.float32, -s, s)
    b_out = jax.random.uniform(ks[6], (V,), jnp.float32, -s, s)

    # Pad the vocab dim to a multiple of 256 so the projection always tiles
    # cleanly (no tn=V fallback); store W_out^T in bf16 for HBM streaming.
    V_pad = ((V + 255) // 256) * 256
    w_out_t = jnp.zeros((H, V_pad), jnp.bfloat16)
    w_out_t = w_out_t.at[:, :V].set(jnp.transpose(w_out).astype(jnp.bfloat16))
    b_out_p = jnp.zeros((1, V_pad), jnp.float32)
    b_out_p = b_out_p.at[:, :V].set(b_out[None, :])

    return {
        "embedding": embedding,
        "w_emb_t": jnp.transpose(w_ih[:, :E]),   # (E, H) acts on embedded
        "w_ctx_t": jnp.transpose(w_ih[:, E:]),   # (H, H) acts on context
        "w_hh_t": jnp.transpose(w_hh),           # (H, H) acts on h_prev
        "b_rnn": (b_ih + b_hh)[None, :],         # (1, H)
        "w_out_t": w_out_t,                      # (H, V_pad) bf16, zero-padded
        "b_out": b_out_p,                        # (1, V_pad) f32, zero-padded
    }


# ----------------------------------------------------------------------------
# Pure-JAX reference for verification
# ----------------------------------------------------------------------------
def reference_forward(inputs, hidden, encoder_output, params):
    V = params["embedding"].shape[0]
    emb = jnp.take(params["embedding"], inputs[:, 0], axis=0)
    h_prev = hidden[-1]
    scores = jnp.einsum("bh,bsh->bs", h_prev, encoder_output)
    alpha = jax.nn.softmax(scores, axis=-1)
    context = jnp.einsum("bs,bsh->bh", alpha, encoder_output)
    pre = (emb @ params["w_emb_t"] + context @ params["w_ctx_t"]
           + h_prev @ params["w_hh_t"] + params["b_rnn"])
    h_new = jnp.tanh(pre)
    logits = h_new @ params["w_out_t"].astype(jnp.float32) + params["b_out"]
    return logits[:, :V][:, None, :], h_new[None], alpha[:, None, :]


if __name__ == "__main__":
    # B fills the 8 sublanes, S/H/E are 128-multiples; V=1000 exercises the
    # padding to V_pad=1024 and vocab_tile=256 exercises the multi-tile grid.
    B, S, H, E, V = 8, 128, 128, 128, 1000
    key = jax.random.PRNGKey(0)
    k_p, k_tok, k_hid, k_enc = jax.random.split(key, 4)

    params = init_params(k_p, output_size=V, hidden_size=H, embedding_size=E)

    inputs = jax.random.randint(k_tok, (B, 1), 0, V, dtype=jnp.int32)
    hidden = jax.random.normal(k_hid, (1, B, H), jnp.float32)
    encoder_output = jax.random.normal(k_enc, (B, S, H), jnp.float32)

    out, h_state, alpha = decoder_with_attention_forward(
        inputs, hidden, encoder_output, params, vocab_tile=256)
    jax.block_until_ready((out, h_state, alpha))

    ref_out, ref_h, ref_a = reference_forward(inputs, hidden, encoder_output,
                                              params)
    # alpha / hidden are full-f32 paths; logits tolerance absorbs the bf16
    # cast of h_new and the native-bf16 MXU projection.
    np.testing.assert_allclose(np.asarray(alpha), np.asarray(ref_a),
                               rtol=5e-3, atol=5e-3)
    np.testing.assert_allclose(np.asarray(h_state), np.asarray(ref_h),
                               rtol=5e-3, atol=5e-3)
    np.testing.assert_allclose(np.asarray(out), np.asarray(ref_out),
                               rtol=2e-2, atol=2e-2)

    print("KERNEL_OK")
</pallas_src>

<mosaic_0001>
module attributes {stable_mosaic.version = 11 : i64} {
  func.func @_decoder_step_kernel(%arg0: i32, %arg1: memref<8xi32, #tpu.memory_space<smem>>, %arg2: memref<1000x128xf32, #tpu.memory_space<any>>, %arg3: memref<8x128xf32, #tpu.memory_space<vmem>>, %arg4: memref<8x128x128xf32, #tpu.memory_space<vmem>>, %arg5: memref<128x128xf32, #tpu.memory_space<vmem>>, %arg6: memref<128x128xf32, #tpu.memory_space<vmem>>, %arg7: memref<128x128xf32, #tpu.memory_space<vmem>>, %arg8: memref<1x128xf32, #tpu.memory_space<vmem>>, %arg9: memref<128x256xbf16, #tpu.memory_space<vmem>>, %arg10: memref<1x256xf32, #tpu.memory_space<vmem>>, %arg11: memref<8x256xf32, #tpu.memory_space<vmem>>, %arg12: memref<8x128xf32, #tpu.memory_space<vmem>>, %arg13: memref<8x128xf32, #tpu.memory_space<vmem>>, %arg14: memref<8x128xf32, #tpu.memory_space<vmem>>, %arg15: memref<8x128xbf16, #tpu.memory_space<vmem>>, %arg16: memref<8x!tpu.dma_semaphore, #tpu.memory_space<semaphore_mem>>) attributes {dimension_semantics = [#tpu.dimension_semantics<arbitrary>], iteration_bounds = array<i64: 4>, scalar_prefetch = 1 : i64, scratch_operands = 3 : i64, tpu.core_type = #tpu.core_type<tc>, window_params = [{}, {pipeline_mode = #tpu.pipeline_mode<synchronous>, transform_indices = @transform_1, window_bounds = array<i64: 8, 128>}, {pipeline_mode = #tpu.pipeline_mode<synchronous>, transform_indices = @transform_2, window_bounds = array<i64: 8, 128, 128>}, {pipeline_mode = #tpu.pipeline_mode<synchronous>, transform_indices = @transform_3, window_bounds = array<i64: 128, 128>}, {pipeline_mode = #tpu.pipeline_mode<synchronous>, transform_indices = @transform_4, window_bounds = array<i64: 128, 128>}, {pipeline_mode = #tpu.pipeline_mode<synchronous>, transform_indices = @transform_5, window_bounds = array<i64: 128, 128>}, {pipeline_mode = #tpu.pipeline_mode<synchronous>, transform_indices = @transform_6, window_bounds = array<i64: 1, 128>}, {transform_indices = @transform_7, window_bounds = array<i64: 128, 256>}, {transform_indices = @transform_8, window_bounds = array<i64: 1, 256>}, {transform_indices = @transform_9, window_bounds = array<i64: 8, 256>}, {pipeline_mode = #tpu.pipeline_mode<synchronous>, transform_indices = @transform_10, window_bounds = array<i64: 8, 128>}, {pipeline_mode = #tpu.pipeline_mode<synchronous>, transform_indices = @transform_11, window_bounds = array<i64: 8, 128>}]} {
    %c0_i32 = arith.constant 0 : i32
    %0 = arith.cmpi eq, %arg0, %c0_i32 : i32
    %1 = arith.extui %0 : i1 to i32
    %c0_i32_0 = arith.constant 0 : i32
    %2 = arith.cmpi ne, %1, %c0_i32_0 : i32
    scf.if %2 {
      %c0_8 = arith.constant 0 : index
      %10 = memref.load %arg1[%c0_8] : memref<8xi32, #tpu.memory_space<smem>>
      %c0_i32_9 = arith.constant 0 : i32
      %c0_i32_10 = arith.constant 0 : i32
      %11 = tpu.memref_slice %arg2[%10, %c0_i32_10] : memref<1000x128xf32, #tpu.memory_space<any>> -> memref<1x128xf32, #tpu.memory_space<any>>
      %c0_i32_11 = arith.constant 0 : i32
      %c0_i32_12 = arith.constant 0 : i32
      %12 = tpu.memref_slice %arg14[%c0_i32_11, %c0_i32_12] : memref<8x128xf32, #tpu.memory_space<vmem>> -> memref<1x128xf32, #tpu.memory_space<vmem>>
      %13 = tpu.memref_slice %arg16[%c0_i32_9] : memref<8x!tpu.dma_semaphore, #tpu.memory_space<semaphore_mem>> -> memref<1x!tpu.dma_semaphore, #tpu.memory_space<semaphore_mem>>
      %14 = tpu.memref_squeeze %13 : memref<1x!tpu.dma_semaphore, #tpu.memory_space<semaphore_mem>> -> memref<!tpu.dma_semaphore, #tpu.memory_space<semaphore_mem>>
      tpu.enqueue_dma source(%11 : memref<1x128xf32, #tpu.memory_space<any>>) target(%12 : memref<1x128xf32, #tpu.memory_space<vmem>>) target_semaphore(%14 : memref<!tpu.dma_semaphore, #tpu.memory_space<semaphore_mem>>)
      %c1 = arith.constant 1 : index
      %15 = memref.load %arg1[%c1] : memref<8xi32, #tpu.memory_space<smem>>
      %c1_i32 = arith.constant 1 : i32
      %c0_i32_13 = arith.constant 0 : i32
      %16 = tpu.memref_slice %arg2[%15, %c0_i32_13] : memref<1000x128xf32, #tpu.memory_space<any>> -> memref<1x128xf32, #tpu.memory_space<any>>
      %c1_i32_14 = arith.constant 1 : i32
      %c0_i32_15 = arith.constant 0 : i32
      %17 = tpu.memref_slice %arg14[%c1_i32_14, %c0_i32_15] : memref<8x128xf32, #tpu.memory_space<vmem>> -> memref<1x128xf32, #tpu.memory_space<vmem>>
      %18 = tpu.memref_slice %arg16[%c1_i32] : memref<8x!tpu.dma_semaphore, #tpu.memory_space<semaphore_mem>> -> memref<1x!tpu.dma_semaphore, #tpu.memory_space<semaphore_mem>>
      %19 = tpu.memref_squeeze %18 : memref<1x!tpu.dma_semaphore, #tpu.memory_space<semaphore_mem>> -> memref<!tpu.dma_semaphore, #tpu.memory_space<semaphore_mem>>
      tpu.enqueue_dma source(%16 : memref<1x128xf32, #tpu.memory_space<any>>) target(%17 : memref<1x128xf32, #tpu.memory_space<vmem>>) target_semaphore(%19 : memref<!tpu.dma_semaphore, #tpu.memory_space<semaphore_mem>>)
      %c2 = arith.constant 2 : index
      %20 = memref.load %arg1[%c2] : memref<8xi32, #tpu.memory_space<smem>>
      %c2_i32 = arith.constant 2 : i32
      %c0_i32_16 = arith.constant 0 : i32
      %21 = tpu.memref_slice %arg2[%20, %c0_i32_16] : memref<1000x128xf32, #tpu.memory_space<any>> -> memref<1x128xf32, #tpu.memory_space<any>>
      %c2_i32_17 = arith.constant 2 : i32
      %c0_i32_18 = arith.constant 0 : i32
      %22 = tpu.memref_slice %arg14[%c2_i32_17, %c0_i32_18] : memref<8x128xf32, #tpu.memory_space<vmem>> -> memref<1x128xf32, #tpu.memory_space<vmem>>
      %23 = tpu.memref_slice %arg16[%c2_i32] : memref<8x!tpu.dma_semaphore, #tpu.memory_space<semaphore_mem>> -> memref<1x!tpu.dma_semaphore, #tpu.memory_space<semaphore_mem>>
      %24 = tpu.memref_squeeze %23 : memref<1x!tpu.dma_semaphore, #tpu.memory_space<semaphore_mem>> -> memref<!tpu.dma_semaphore, #tpu.memory_space<semaphore_mem>>
      tpu.enqueue_dma source(%21 : memref<1x128xf32, #tpu.memory_space<any>>) target(%22 : memref<1x128xf32, #tpu.memory_space<vmem>>) target_semaphore(%24 : memref<!tpu.dma_semaphore, #tpu.memory_space<semaphore_mem>>)
      %c3 = arith.constant 3 : index
      %25 = memref.load %arg1[%c3] : memref<8xi32, #tpu.memory_space<smem>>
      %c3_i32 = arith.constant 3 : i32
      %c0_i32_19 = arith.constant 0 : i32
      %26 = tpu.memref_slice %arg2[%25, %c0_i32_19] : memref<1000x128xf32, #tpu.memory_space<any>> -> memref<1x128xf32, #tpu.memory_space<any>>
      %c3_i32_20 = arith.constant 3 : i32
      %c0_i32_21 = arith.constant 0 : i32
      %27 = tpu.memref_slice %arg14[%c3_i32_20, %c0_i32_21] : memref<8x128xf32, #tpu.memory_space<vmem>> -> memref<1x128xf32, #tpu.memory_space<vmem>>
      %28 = tpu.memref_slice %arg16[%c3_i32] : memref<8x!tpu.dma_semaphore, #tpu.memory_space<semaphore_mem>> -> memref<1x!tpu.dma_semaphore, #tpu.memory_space<semaphore_mem>>
      %29 = tpu.memref_squeeze %28 : memref<1x!tpu.dma_semaphore, #tpu.memory_space<semaphore_mem>> -> memref<!tpu.dma_semaphore, #tpu.memory_space<semaphore_mem>>
      tpu.enqueue_dma source(%26 : memref<1x128xf32, #tpu.memory_space<any>>) target(%27 : memref<1x128xf32, #tpu.memory_space<vmem>>) target_semaphore(%29 : memref<!tpu.dma_semaphore, #tpu.memory_space<semaphore_mem>>)
      %c4 = arith.constant 4 : index
      %30 = memref.load %arg1[%c4] : memref<8xi32, #tpu.memory_space<smem>>
      %c4_i32 = arith.constant 4 : i32
      %c0_i32_22 = arith.constant 0 : i32
      %31 = tpu.memref_slice %arg2[%30, %c0_i32_22] : memref<1000x128xf32, #tpu.memory_space<any>> -> memref<1x128xf32, #tpu.memory_space<any>>
      %c4_i32_23 = arith.constant 4 : i32
      %c0_i32_24 = arith.constant 0 : i32
      %32 = tpu.memref_slice %arg14[%c4_i32_23, %c0_i32_24] : memref<8x128xf32, #tpu.memory_space<vmem>> -> memref<1x128xf32, #tpu.memory_space<vmem>>
      %33 = tpu.memref_slice %arg16[%c4_i32] : memref<8x!tpu.dma_semaphore, #tpu.memory_space<semaphore_mem>> -> memref<1x!tpu.dma_semaphore, #tpu.memory_space<semaphore_mem>>
      %34 = tpu.memref_squeeze %33 : memref<1x!tpu.dma_semaphore, #tpu.memory_space<semaphore_mem>> -> memref<!tpu.dma_semaphore, #tpu.memory_space<semaphore_mem>>
      tpu.enqueue_dma source(%31 : memref<1x128xf32, #tpu.memory_space<any>>) target(%32 : memref<1x128xf32, #tpu.memory_space<vmem>>) target_semaphore(%34 : memref<!tpu.dma_semaphore, #tpu.memory_space<semaphore_mem>>)
      %c5 = arith.constant 5 : index
      %35 = memref.load %arg1[%c5] : memref<8xi32, #tpu.memory_space<smem>>
      %c5_i32 = arith.constant 5 : i32
      %c0_i32_25 = arith.constant 0 : i32
      %36 = tpu.memref_slice %arg2[%35, %c0_i32_25] : memref<1000x128xf32, #tpu.memory_space<any>> -> memref<1x128xf32, #tpu.memory_space<any>>
      %c5_i32_26 = arith.constant 5 : i32
      %c0_i32_27 = arith.constant 0 : i32
      %37 = tpu.memref_slice %arg14[%c5_i32_26, %c0_i32_27] : memref<8x128xf32, #tpu.memory_space<vmem>> -> memref<1x128xf32, #tpu.memory_space<vmem>>
      %38 = tpu.memref_slice %arg16[%c5_i32] : memref<8x!tpu.dma_semaphore, #tpu.memory_space<semaphore_mem>> -> memref<1x!tpu.dma_semaphore, #tpu.memory_space<semaphore_mem>>
      %39 = tpu.memref_squeeze %38 : memref<1x!tpu.dma_semaphore, #tpu.memory_space<semaphore_mem>> -> memref<!tpu.dma_semaphore, #tpu.memory_space<semaphore_mem>>
      tpu.enqueue_dma source(%36 : memref<1x128xf32, #tpu.memory_space<any>>) target(%37 : memref<1x128xf32, #tpu.memory_space<vmem>>) target_semaphore(%39 : memref<!tpu.dma_semaphore, #tpu.memory_space<semaphore_mem>>)
      %c6 = arith.constant 6 : index
      %40 = memref.load %arg1[%c6] : memref<8xi32, #tpu.memory_space<smem>>
      %c6_i32 = arith.constant 6 : i32
      %c0_i32_28 = arith.constant 0 : i32
      %41 = tpu.memref_slice %arg2[%40, %c0_i32_28] : memref<1000x128xf32, #tpu.memory_space<any>> -> memref<1x128xf32, #tpu.memory_space<any>>
      %c6_i32_29 = arith.constant 6 : i32
      %c0_i32_30 = arith.constant 0 : i32
      %42 = tpu.memref_slice %arg14[%c6_i32_29, %c0_i32_30] : memref<8x128xf32, #tpu.memory_space<vmem>> -> memref<1x128xf32, #tpu.memory_space<vmem>>
      %43 = tpu.memref_slice %arg16[%c6_i32] : memref<8x!tpu.dma_semaphore, #tpu.memory_space<semaphore_mem>> -> memref<1x!tpu.dma_semaphore, #tpu.memory_space<semaphore_mem>>
      %44 = tpu.memref_squeeze %43 : memref<1x!tpu.dma_semaphore, #tpu.memory_space<semaphore_mem>> -> memref<!tpu.dma_semaphore, #tpu.memory_space<semaphore_mem>>
      tpu.enqueue_dma source(%41 : memref<1x128xf32, #tpu.memory_space<any>>) target(%42 : memref<1x128xf32, #tpu.memory_space<vmem>>) target_semaphore(%44 : memref<!tpu.dma_semaphore, #tpu.memory_space<semaphore_mem>>)
      %c7 = arith.constant 7 : index
      %45 = memref.load %arg1[%c7] : memref<8xi32, #tpu.memory_space<smem>>
      %c7_i32 = arith.constant 7 : i32
      %c0_i32_31 = arith.constant 0 : i32
      %46 = tpu.memref_slice %arg2[%45, %c0_i32_31] : memref<1000x128xf32, #tpu.memory_space<any>> -> memref<1x128xf32, #tpu.memory_space<any>>
      %c7_i32_32 = arith.constant 7 : i32
      %c0_i32_33 = arith.constant 0 : i32
      %47 = tpu.memref_slice %arg14[%c7_i32_32, %c0_i32_33] : memref<8x128xf32, #tpu.memory_space<vmem>> -> memref<1x128xf32, #tpu.memory_space<vmem>>
      %48 = tpu.memref_slice %arg16[%c7_i32] : memref<8x!tpu.dma_semaphore, #tpu.memory_space<semaphore_mem>> -> memref<1x!tpu.dma_semaphore, #tpu.memory_space<semaphore_mem>>
      %49 = tpu.memref_squeeze %48 : memref<1x!tpu.dma_semaphore, #tpu.memory_space<semaphore_mem>> -> memref<!tpu.dma_semaphore, #tpu.memory_space<semaphore_mem>>
      tpu.enqueue_dma source(%46 : memref<1x128xf32, #tpu.memory_space<any>>) target(%47 : memref<1x128xf32, #tpu.memory_space<vmem>>) target_semaphore(%49 : memref<!tpu.dma_semaphore, #tpu.memory_space<semaphore_mem>>)
      %c0_34 = arith.constant 0 : index
      %c0_35 = arith.constant 0 : index
      %50 = vector.load %arg3[%c0_34, %c0_35] : memref<8x128xf32, #tpu.memory_space<vmem>>, vector<8x128xf32>
      %c0_36 = arith.constant 0 : index
      %c0_37 = arith.constant 0 : index
      %c0_38 = arith.constant 0 : index
      %51 = vector.load %arg4[%c0_36, %c0_37, %c0_38] : memref<8x128x128xf32, #tpu.memory_space<vmem>>, vector<8x128x128xf32>
      %52 = vector.shape_cast %50 : vector<8x128xf32> to vector<8x1x128xf32>
      %53 = vector.broadcast %52 : vector<8x1x128xf32> to vector<8x128x128xf32>
      %54 = arith.mulf %53, %51 : vector<8x128x128xf32>
      %cst_39 = arith.constant dense<0.000000e+00> : vector<8x128xf32>
      %55 = vector.multi_reduction <add>, %54, %cst_39 [2] : vector<8x128x128xf32> to vector<8x128xf32>
      %cst_40 = arith.constant dense<0xFF800000> : vector<8xf32>
      %56 = vector.multi_reduction <maximumf>, %55, %cst_40 [1] : vector<8x128xf32> to vector<8xf32>
      %57 = vector.shape_cast %56 : vector<8xf32> to vector<8x1xf32>
      %58 = vector.broadcast %57 : vector<8x1xf32> to vector<8x128xf32>
      %59 = arith.subf %55, %58 : vector<8x128xf32>
      %60 = math.exp %59 : vector<8x128xf32>
      %cst_41 = arith.constant dense<0.000000e+00> : vector<8xf32>
      %61 = vector.multi_reduction <add>, %60, %cst_41 [1] : vector<8x128xf32> to vector<8xf32>
      %62 = vector.shape_cast %61 : vector<8xf32> to vector<8x1xf32>
      %63 = vector.broadcast %62 : vector<8x1xf32> to vector<8x128xf32>
      %64 = arith.divf %60, %63 : vector<8x128xf32>
      %c0_42 = arith.constant 0 : index
      %c0_43 = arith.constant 0 : index
      %65 = vector.load %arg13[%c0_42, %c0_43] : memref<8x128xf32, #tpu.memory_space<vmem>>, vector<8x128xf32>
      tpu.vector_store %arg13[%c0_42, %c0_43], %64 {strides = array<i32>} : memref<8x128xf32, #tpu.memory_space<vmem>>, vector<8x128xf32>,
      %66 = vector.shape_cast %64 : vector<8x128xf32> to vector<8x128x1xf32>
      %67 = vector.broadcast %66 : vector<8x128x1xf32> to vector<8x128x128xf32>
      %68 = arith.mulf %67, %51 : vector<8x128x128xf32>
      %cst_44 = arith.constant dense<0.000000e+00> : vector<8x128xf32>
      %69 = vector.multi_reduction <add>, %68, %cst_44 [1] : vector<8x128x128xf32> to vector<8x128xf32>
      %c0_45 = arith.constant 0 : index
      %70 = memref.load %arg1[%c0_45] : memref<8xi32, #tpu.memory_space<smem>>
      %c0_i32_46 = arith.constant 0 : i32
      %c0_i32_47 = arith.constant 0 : i32
      %71 = tpu.memref_slice %arg2[%70, %c0_i32_47] : memref<1000x128xf32, #tpu.memory_space<any>> -> memref<1x128xf32, #tpu.memory_space<any>>
      %c0_i32_48 = arith.constant 0 : i32
      %c0_i32_49 = arith.constant 0 : i32
      %72 = tpu.memref_slice %arg14[%c0_i32_48, %c0_i32_49] : memref<8x128xf32, #tpu.memory_space<vmem>> -> memref<1x128xf32, #tpu.memory_space<vmem>>
      %73 = tpu.memref_slice %arg16[%c0_i32_46] : memref<8x!tpu.dma_semaphore, #tpu.memory_space<semaphore_mem>> -> memref<1x!tpu.dma_semaphore, #tpu.memory_space<semaphore_mem>>
      %74 = tpu.memref_squeeze %73 : memref<1x!tpu.dma_semaphore, #tpu.memory_space<semaphore_mem>> -> memref<!tpu.dma_semaphore, #tpu.memory_space<semaphore_mem>>
      tpu.wait_dma2 semaphore(%74 : memref<!tpu.dma_semaphore, #tpu.memory_space<semaphore_mem>>) src(%71 : memref<1x128xf32, #tpu.memory_space<any>>) dst(%72 : memref<1x128xf32, #tpu.memory_space<vmem>>)
      %c1_50 = arith.constant 1 : index
      %75 = memref.load %arg1[%c1_50] : memref<8xi32, #tpu.memory_space<smem>>
      %c1_i32_51 = arith.constant 1 : i32
      %c0_i32_52 = arith.constant 0 : i32
      %76 = tpu.memref_slice %arg2[%75, %c0_i32_52] : memref<1000x128xf32, #tpu.memory_space<any>> -> memref<1x128xf32, #tpu.memory_space<any>>
      %c1_i32_53 = arith.constant 1 : i32
      %c0_i32_54 = arith.constant 0 : i32
      %77 = tpu.memref_slice %arg14[%c1_i32_53, %c0_i32_54] : memref<8x128xf32, #tpu.memory_space<vmem>> -> memref<1x128xf32, #tpu.memory_space<vmem>>
      %78 = tpu.memref_slice %arg16[%c1_i32_51] : memref<8x!tpu.dma_semaphore, #tpu.memory_space<semaphore_mem>> -> memref<1x!tpu.dma_semaphore, #tpu.memory_space<semaphore_mem>>
      %79 = tpu.memref_squeeze %78 : memref<1x!tpu.dma_semaphore, #tpu.memory_space<semaphore_mem>> -> memref<!tpu.dma_semaphore, #tpu.memory_space<semaphore_mem>>
      tpu.wait_dma2 semaphore(%79 : memref<!tpu.dma_semaphore, #tpu.memory_space<semaphore_mem>>) src(%76 : memref<1x128xf32, #tpu.memory_space<any>>) dst(%77 : memref<1x128xf32, #tpu.memory_space<vmem>>)
      %c2_55 = arith.constant 2 : index
      %80 = memref.load %arg1[%c2_55] : memref<8xi32, #tpu.memory_space<smem>>
      %c2_i32_56 = arith.constant 2 : i32
      %c0_i32_57 = arith.constant 0 : i32
      %81 = tpu.memref_slice %arg2[%80, %c0_i32_57] : memref<1000x128xf32, #tpu.memory_space<any>> -> memref<1x128xf32, #tpu.memory_space<any>>
      %c2_i32_58 = arith.constant 2 : i32
      %c0_i32_59 = arith.constant 0 : i32
      %82 = tpu.memref_slice %arg14[%c2_i32_58, %c0_i32_59] : memref<8x128xf32, #tpu.memory_space<vmem>> -> memref<1x128xf32, #tpu.memory_space<vmem>>
      %83 = tpu.memref_slice %arg16[%c2_i32_56] : memref<8x!tpu.dma_semaphore, #tpu.memory_space<semaphore_mem>> -> memref<1x!tpu.dma_semaphore, #tpu.memory_space<semaphore_mem>>
      %84 = tpu.memref_squeeze %83 : memref<1x!tpu.dma_semaphore, #tpu.memory_space<semaphore_mem>> -> memref<!tpu.dma_semaphore, #tpu.memory_space<semaphore_mem>>
      tpu.wait_dma2 semaphore(%84 : memref<!tpu.dma_semaphore, #tpu.memory_space<semaphore_mem>>) src(%81 : memref<1x128xf32, #tpu.memory_space<any>>) dst(%82 : memref<1x128xf32, #tpu.memory_space<vmem>>)
      %c3_60 = arith.constant 3 : index
      %85 = memref.load %arg1[%c3_60] : memref<8xi32, #tpu.memory_space<smem>>
      %c3_i32_61 = arith.constant 3 : i32
      %c0_i32_62 = arith.constant 0 : i32
      %86 = tpu.memref_slice %arg2[%85, %c0_i32_62] : memref<1000x128xf32, #tpu.memory_space<any>> -> memref<1x128xf32, #tpu.memory_space<any>>
      %c3_i32_63 = arith.constant 3 : i32
      %c0_i32_64 = arith.constant 0 : i32
      %87 = tpu.memref_slice %arg14[%c3_i32_63, %c0_i32_64] : memref<8x128xf32, #tpu.memory_space<vmem>> -> memref<1x128xf32, #tpu.memory_space<vmem>>
      %88 = tpu.memref_slice %arg16[%c3_i32_61] : memref<8x!tpu.dma_semaphore, #tpu.memory_space<semaphore_mem>> -> memref<1x!tpu.dma_semaphore, #tpu.memory_space<semaphore_mem>>
      %89 = tpu.memref_squeeze %88 : memref<1x!tpu.dma_semaphore, #tpu.memory_space<semaphore_mem>> -> memref<!tpu.dma_semaphore, #tpu.memory_space<semaphore_mem>>
      tpu.wait_dma2 semaphore(%89 : memref<!tpu.dma_semaphore, #tpu.memory_space<semaphore_mem>>) src(%86 : memref<1x128xf32, #tpu.memory_space<any>>) dst(%87 : memref<1x128xf32, #tpu.memory_space<vmem>>)
      %c4_65 = arith.constant 4 : index
      %90 = memref.load %arg1[%c4_65] : memref<8xi32, #tpu.memory_space<smem>>
      %c4_i32_66 = arith.constant 4 : i32
      %c0_i32_67 = arith.constant 0 : i32
      %91 = tpu.memref_slice %arg2[%90, %c0_i32_67] : memref<1000x128xf32, #tpu.memory_space<any>> -> memref<1x128xf32, #tpu.memory_space<any>>
      %c4_i32_68 = arith.constant 4 : i32
      %c0_i32_69 = arith.constant 0 : i32
      %92 = tpu.memref_slice %arg14[%c4_i32_68, %c0_i32_69] : memref<8x128xf32, #tpu.memory_space<vmem>> -> memref<1x128xf32, #tpu.memory_space<vmem>>
      %93 = tpu.memref_slice %arg16[%c4_i32_66] : memref<8x!tpu.dma_semaphore, #tpu.memory_space<semaphore_mem>> -> memref<1x!tpu.dma_semaphore, #tpu.memory_space<semaphore_mem>>
      %94 = tpu.memref_squeeze %93 : memref<1x!tpu.dma_semaphore, #tpu.memory_space<semaphore_mem>> -> memref<!tpu.dma_semaphore, #tpu.memory_space<semaphore_mem>>
      tpu.wait_dma2 semaphore(%94 : memref<!tpu.dma_semaphore, #tpu.memory_space<semaphore_mem>>) src(%91 : memref<1x128xf32, #tpu.memory_space<any>>) dst(%92 : memref<1x128xf32, #tpu.memory_space<vmem>>)
      %c5_70 = arith.constant 5 : index
      %95 = memref.load %arg1[%c5_70] : memref<8xi32, #tpu.memory_space<smem>>
      %c5_i32_71 = arith.constant 5 : i32
      %c0_i32_72 = arith.constant 0 : i32
      %96 = tpu.memref_slice %arg2[%95, %c0_i32_72] : memref<1000x128xf32, #tpu.memory_space<any>> -> memref<1x128xf32, #tpu.memory_space<any>>
      %c5_i32_73 = arith.constant 5 : i32
      %c0_i32_74 = arith.constant 0 : i32
      %97 = tpu.memref_slice %arg14[%c5_i32_73, %c0_i32_74] : memref<8x128xf32, #tpu.memory_space<vmem>> -> memref<1x128xf32, #tpu.memory_space<vmem>>
      %98 = tpu.memref_slice %arg16[%c5_i32_71] : memref<8x!tpu.dma_semaphore, #tpu.memory_space<semaphore_mem>> -> memref<1x!tpu.dma_semaphore, #tpu.memory_space<semaphore_mem>>
      %99 = tpu.memref_squeeze %98 : memref<1x!tpu.dma_semaphore, #tpu.memory_space<semaphore_mem>> -> memref<!tpu.dma_semaphore, #tpu.memory_space<semaphore_mem>>
      tpu.wait_dma2 semaphore(%99 : memref<!tpu.dma_semaphore, #tpu.memory_space<semaphore_mem>>) src(%96 : memref<1x128xf32, #tpu.memory_space<any>>) dst(%97 : memref<1x128xf32, #tpu.memory_space<vmem>>)
      %c6_75 = arith.constant 6 : index
      %100 = memref.load %arg1[%c6_75] : memref<8xi32, #tpu.memory_space<smem>>
      %c6_i32_76 = arith.constant 6 : i32
      %c0_i32_77 = arith.constant 0 : i32
      %101 = tpu.memref_slice %arg2[%100, %c0_i32_77] : memref<1000x128xf32, #tpu.memory_space<any>> -> memref<1x128xf32, #tpu.memory_space<any>>
      %c6_i32_78 = arith.constant 6 : i32
      %c0_i32_79 = arith.constant 0 : i32
      %102 = tpu.memref_slice %arg14[%c6_i32_78, %c0_i32_79] : memref<8x128xf32, #tpu.memory_space<vmem>> -> memref<1x128xf32, #tpu.memory_space<vmem>>
      %103 = tpu.memref_slice %arg16[%c6_i32_76] : memref<8x!tpu.dma_semaphore, #tpu.memory_space<semaphore_mem>> -> memref<1x!tpu.dma_semaphore, #tpu.memory_space<semaphore_mem>>
      %104 = tpu.memref_squeeze %103 : memref<1x!tpu.dma_semaphore, #tpu.memory_space<semaphore_mem>> -> memref<!tpu.dma_semaphore, #tpu.memory_space<semaphore_mem>>
      tpu.wait_dma2 semaphore(%104 : memref<!tpu.dma_semaphore, #tpu.memory_space<semaphore_mem>>) src(%101 : memref<1x128xf32, #tpu.memory_space<any>>) dst(%102 : memref<1x128xf32, #tpu.memory_space<vmem>>)
      %c7_80 = arith.constant 7 : index
      %105 = memref.load %arg1[%c7_80] : memref<8xi32, #tpu.memory_space<smem>>
      %c7_i32_81 = arith.constant 7 : i32
      %c0_i32_82 = arith.constant 0 : i32
      %106 = tpu.memref_slice %arg2[%105, %c0_i32_82] : memref<1000x128xf32, #tpu.memory_space<any>> -> memref<1x128xf32, #tpu.memory_space<any>>
      %c7_i32_83 = arith.constant 7 : i32
      %c0_i32_84 = arith.constant 0 : i32
      %107 = tpu.memref_slice %arg14[%c7_i32_83, %c0_i32_84] : memref<8x128xf32, #tpu.memory_space<vmem>> -> memref<1x128xf32, #tpu.memory_space<vmem>>
      %108 = tpu.memref_slice %arg16[%c7_i32_81] : memref<8x!tpu.dma_semaphore, #tpu.memory_space<semaphore_mem>> -> memref<1x!tpu.dma_semaphore, #tpu.memory_space<semaphore_mem>>
      %109 = tpu.memref_squeeze %108 : memref<1x!tpu.dma_semaphore, #tpu.memory_space<semaphore_mem>> -> memref<!tpu.dma_semaphore, #tpu.memory_space<semaphore_mem>>
      tpu.wait_dma2 semaphore(%109 : memref<!tpu.dma_semaphore, #tpu.memory_space<semaphore_mem>>) src(%106 : memref<1x128xf32, #tpu.memory_space<any>>) dst(%107 : memref<1x128xf32, #tpu.memory_space<vmem>>)
      %c0_85 = arith.constant 0 : index
      %c0_86 = arith.constant 0 : index
      %110 = vector.load %arg14[%c0_85, %c0_86] : memref<8x128xf32, #tpu.memory_space<vmem>>, vector<8x128xf32>
      %c0_87 = arith.constant 0 : index
      %c0_88 = arith.constant 0 : index
      %111 = vector.load %arg5[%c0_87, %c0_88] : memref<128x128xf32, #tpu.memory_space<vmem>>, vector<128x128xf32>
      %cst_89 = arith.constant dense<0.000000e+00> : vector<8x128xf32>
      %112 = tpu.matmul %110, %111, %cst_89 {dimension_numbers = #tpu.dot_dimension_numbers<[1], [0], [0], [1], [0, 0, 1, 1], [], []>, precision = #tpu.contract_precision<fp32>} : vector<8x128xf32>, vector<128x128xf32>, vector<8x128xf32> -> vector<8x128xf32>
      %c0_90 = arith.constant 0 : index
      %c0_91 = arith.constant 0 : index
      %113 = vector.load %arg6[%c0_90, %c0_91] : memref<128x128xf32, #tpu.memory_space<vmem>>, vector<128x128xf32>
      %cst_92 = arith.constant dense<0.000000e+00> : vector<8x128xf32>
      %114 = tpu.matmul %69, %113, %cst_92 {dimension_numbers = #tpu.dot_dimension_numbers<[1], [0], [0], [1], [0, 0, 1, 1], [], []>, precision = #tpu.contract_precision<fp32>} : vector<8x128xf32>, vector<128x128xf32>, vector<8x128xf32> -> vector<8x128xf32>
      %115 = arith.addf %112, %114 : vector<8x128xf32>
      %c0_93 = arith.constant 0 : index
      %c0_94 = arith.constant 0 : index
      %116 = vector.load %arg7[%c0_93, %c0_94] : memref<128x128xf32, #tpu.memory_space<vmem>>, vector<128x128xf32>
      %cst_95 = arith.constant dense<0.000000e+00> : vector<8x128xf32>
      %117 = tpu.matmul %50, %116, %cst_95 {dimension_numbers = #tpu.dot_dimension_numbers<[1], [0], [0], [1], [0, 0, 1, 1], [], []>, precision = #tpu.contract_precision<fp32>} : vector<8x128xf32>, vector<128x128xf32>, vector<8x128xf32> -> vector<8x128xf32>
      %118 = arith.addf %115, %117 : vector<8x128xf32>
      %c0_96 = arith.constant 0 : index
      %c0_97 = arith.constant 0 : index
      %119 = vector.load %arg8[%c0_96, %c0_97] : memref<1x128xf32, #tpu.memory_space<vmem>>, vector<1x128xf32>
      %120 = vector.broadcast %119 : vector<1x128xf32> to vector<8x128xf32>
      %121 = arith.addf %118, %120 : vector<8x128xf32>
      %122 = math.tanh %121 : vector<8x128xf32>
      %c0_98 = arith.constant 0 : index
      %c0_99 = arith.constant 0 : index
      %123 = vector.load %arg12[%c0_98, %c0_99] : memref<8x128xf32, #tpu.memory_space<vmem>>, vector<8x128xf32>
      tpu.vector_store %arg12[%c0_98, %c0_99], %122 {strides = array<i32>} : memref<8x128xf32, #tpu.memory_space<vmem>>, vector<8x128xf32>,
      %124 = arith.truncf %122 : vector<8x128xf32> to vector<8x128xbf16>
      %c0_100 = arith.constant 0 : index
      %c0_101 = arith.constant 0 : index
      %125 = vector.load %arg15[%c0_100, %c0_101] : memref<8x128xbf16, #tpu.memory_space<vmem>>, vector<8x128xbf16>
      tpu.vector_store %arg15[%c0_100, %c0_101], %124 {strides = array<i32>} : memref<8x128xbf16, #tpu.memory_space<vmem>>, vector<8x128xbf16>,
    } else {
    }
    %c0 = arith.constant 0 : index
    %c0_1 = arith.constant 0 : index
    %3 = vector.load %arg15[%c0, %c0_1] : memref<8x128xbf16, #tpu.memory_space<vmem>>, vector<8x128xbf16>
    %c0_2 = arith.constant 0 : index
    %c0_3 = arith.constant 0 : index
    %4 = vector.load %arg9[%c0_2, %c0_3] : memref<128x256xbf16, #tpu.memory_space<vmem>>, vector<128x256xbf16>
    %cst = arith.constant dense<0.000000e+00> : vector<8x256xf32>
    %5 = tpu.matmul %3, %4, %cst {dimension_numbers = #tpu.dot_dimension_numbers<[1], [0], [0], [1], [0, 0, 1, 1], [], []>} : vector<8x128xbf16>, vector<128x256xbf16>, vector<8x256xf32> -> vector<8x256xf32>
    %c0_4 = arith.constant 0 : index
    %c0_5 = arith.constant 0 : index
    %6 = vector.load %arg10[%c0_4, %c0_5] : memref<1x256xf32, #tpu.memory_space<vmem>>, vector<1x256xf32>
    %7 = vector.broadcast %6 : vector<1x256xf32> to vector<8x256xf32>
    %8 = arith.addf %5, %7 : vector<8x256xf32>
    %c0_6 = arith.constant 0 : index
    %c0_7 = arith.constant 0 : index
    %9 = vector.load %arg11[%c0_6, %c0_7] : memref<8x256xf32, #tpu.memory_space<vmem>>, vector<8x256xf32>
    tpu.vector_store %arg11[%c0_6, %c0_7], %8 {strides = array<i32>} : memref<8x256xf32, #tpu.memory_space<vmem>>, vector<8x256xf32>,
    return
  }
  func.func @transform_1(%arg0: i32, %arg1: memref<8xi32, #tpu.memory_space<smem>>) -> (i32, i32) {
    %c0_i32 = arith.constant 0 : i32
    %c0_i32_0 = arith.constant 0 : i32
    %c0_i32_1 = arith.constant 0 : i32
    return %c0_i32, %c0_i32_0 : i32, i32
  }
  func.func @transform_2(%arg0: i32, %arg1: memref<8xi32, #tpu.memory_space<smem>>) -> (i32, i32, i32) {
    %c0_i32 = arith.constant 0 : i32
    %c0_i32_0 = arith.constant 0 : i32
    %c0_i32_1 = arith.constant 0 : i32
    %c0_i32_2 = arith.constant 0 : i32
    return %c0_i32, %c0_i32_0, %c0_i32_1 : i32, i32, i32
  }
  func.func @transform_3(%arg0: i32, %arg1: memref<8xi32, #tpu.memory_space<smem>>) -> (i32, i32) {
    %c0_i32 = arith.constant 0 : i32
    %c0_i32_0 = arith.constant 0 : i32
    %c0_i32_1 = arith.constant 0 : i32
    return %c0_i32, %c0_i32_0 : i32, i32
  }
  func.func @transform_4(%arg0: i32, %arg1: memref<8xi32, #tpu.memory_space<smem>>) -> (i32, i32) {
    %c0_i32 = arith.constant 0 : i32
    %c0_i32_0 = arith.constant 0 : i32
    %c0_i32_1 = arith.constant 0 : i32
    return %c0_i32, %c0_i32_0 : i32, i32
  }
  func.func @transform_5(%arg0: i32, %arg1: memref<8xi32, #tpu.memory_space<smem>>) -> (i32, i32) {
    %c0_i32 = arith.constant 0 : i32
    %c0_i32_0 = arith.constant 0 : i32
    %c0_i32_1 = arith.constant 0 : i32
    return %c0_i32, %c0_i32_0 : i32, i32
  }
  func.func @transform_6(%arg0: i32, %arg1: memref<8xi32, #tpu.memory_space<smem>>) -> (i32, i32) {
    %c0_i32 = arith.constant 0 : i32
    %c0_i32_0 = arith.constant 0 : i32
    %c0_i32_1 = arith.constant 0 : i32
    return %c0_i32, %c0_i32_0 : i32, i32
  }
  func.func @transform_7(%arg0: i32, %arg1: memref<8xi32, #tpu.memory_space<smem>>) -> (i32, i32) {
    %c0_i32 = arith.constant 0 : i32
    %c0_i32_0 = arith.constant 0 : i32
    return %c0_i32, %arg0 : i32, i32
  }
  func.func @transform_8(%arg0: i32, %arg1: memref<8xi32, #tpu.memory_space<smem>>) -> (i32, i32) {
    %c0_i32 = arith.constant 0 : i32
    %c0_i32_0 = arith.constant 0 : i32
    return %c0_i32, %arg0 : i32, i32
  }
  func.func @transform_9(%arg0: i32, %arg1: memref<8xi32, #tpu.memory_space<smem>>) -> (i32, i32) {
    %c0_i32 = arith.constant 0 : i32
    %c0_i32_0 = arith.constant 0 : i32
    return %c0_i32, %arg0 : i32, i32
  }
  func.func @transform_10(%arg0: i32, %arg1: memref<8xi32, #tpu.memory_space<smem>>) -> (i32, i32) {
    %c0_i32 = arith.constant 0 : i32
    %c0_i32_0 = arith.constant 0 : i32
    %c0_i32_1 = arith.constant 0 : i32
    return %c0_i32, %c0_i32_0 : i32, i32
  }
  func.func @transform_11(%arg0: i32, %arg1: memref<8xi32, #tpu.memory_space<smem>>) -> (i32, i32) {
    %c0_i32 = arith.constant 0 : i32
    %c0_i32_0 = arith.constant 0 : i32
    %c0_i32_1 = arith.constant 0 : i32
    return %c0_i32, %c0_i32_0 : i32, i32
  }
}

</mosaic_0001>

<llo_original>
// kernel: decoder_with_attention_forward.1
$region0: #{decoder_with_attention_forward.1}
  #allocation0 [shape = 'u32[]', space=smem, size = 0x4, offset = 0x4, fixed_abs, tag = 'smem constant byte address 0x4 - core index']
  #allocation1 [shape = 'u32[72,128]{1,0:T(1,128)}', space=vmem, size = 0x9000, scoped, tag = 'internal scratch']
  #allocation2 [shape = 'f32[8,128]{1,0:T(8,128)}', space=vmem, size = 0x1000, scoped, tag = 'scratch operand']
  #allocation3 [shape = 'bf16[8,128]{1,0:T(8,128)(2,1)}', space=vmem, size = 0x800, scoped, tag = 'scratch operand']
  #allocation4 [shape = 's32[8]{0}', space=sflag, size = 0x20, scoped, tag = 'scratch operand']
  #allocation5 [shape = 's32[1]{0}', space=sflag, size = 0x4, scoped, tag = 'scoped memory for decoder_with_attention_forward.1']
  #allocation6 [shape = 'u8[512]{0}', space=smem, size = 0x200, scoped, tag = 'prefetched SMEM operand 0']
  #allocation22 [shape = 's32[]', space=sflag, size = 0x4, offset = 0, fixed_abs, tag = 'sflag constant byte address 0x0 - dummy sync flag']
  #allocation23 [shape = 's32[]', space=sflag, size = 0x4, offset = 0, fixed_abs, tag = 'sflag constant byte address 0x0 - dummy sync flag']
  #allocation24 [shape = 'u32[]', space=smem, size = 0x4, offset = 0x44, fixed_abs, tag = 'smem constant byte address 0x44 - assertion arg 0']
  #allocation25 [shape = 'u32[]', space=smem, size = 0x4, offset = 0x48, fixed_abs, tag = 'smem constant byte address 0x48 - assertion arg 1']
  #allocation26 [shape = 's32[]', space=sflag, size = 0x4, offset = 0, fixed_abs, tag = 'sflag constant byte address 0x0 - dummy sync flag']
  #allocation27 [shape = 's32[]', space=sflag, size = 0x4, offset = 0, fixed_abs, tag = 'sflag constant byte address 0x0 - dummy sync flag']
  #allocation28 [shape = 's32[]', space=sflag, size = 0x4, offset = 0, fixed_abs, tag = 'sflag constant byte address 0x0 - dummy sync flag']
  #allocation29 [shape = 's32[]', space=sflag, size = 0x4, offset = 0, fixed_abs, tag = 'sflag constant byte address 0x0 - dummy sync flag']
  #allocation30 [shape = 's32[]', space=sflag, size = 0x4, offset = 0, fixed_abs, tag = 'sflag constant byte address 0x0 - dummy sync flag']
  #allocation31 [shape = 's32[]', space=sflag, size = 0x4, offset = 0, fixed_abs, tag = 'sflag constant byte address 0x0 - dummy sync flag']
  #allocation32 [shape = 's32[]', space=sflag, size = 0x4, offset = 0, fixed_abs, tag = 'sflag constant byte address 0x0 - dummy sync flag']
  #allocation33 [shape = 's32[]', space=sflag, size = 0x4, offset = 0, fixed_abs, tag = 'sflag constant byte address 0x0 - dummy sync flag']
  #allocation34 [shape = 's32[]', space=sflag, size = 0x4, offset = 0, fixed_abs, tag = 'sflag constant byte address 0x0 - dummy sync flag']
  #allocation35 [shape = 's32[]', space=sflag, size = 0x4, offset = 0, fixed_abs, tag = 'sflag constant byte address 0x0 - dummy sync flag']
  #allocation36 [shape = 's32[]', space=sflag, size = 0x4, offset = 0, fixed_abs, tag = 'sflag constant byte address 0x0 - dummy sync flag']
  #allocation37 [shape = 's32[]', space=sflag, size = 0x4, offset = 0, fixed_abs, tag = 'sflag constant byte address 0x0 - dummy sync flag']
  #allocation38 [shape = 's32[]', space=sflag, size = 0x4, offset = 0, fixed_abs, tag = 'sflag constant byte address 0x0 - dummy sync flag']
  #allocation39 [shape = 's32[]', space=sflag, size = 0x4, offset = 0, fixed_abs, tag = 'sflag constant byte address 0x0 - dummy sync flag']
  %s0 = inlined_call_operand.vmem [shape: s32[8], index: 0, kind: input, shape index: {}]
  %s1 = inlined_call_operand.hbm [shape: f32[1000,128], index: 1, kind: input, shape index: {}]
  %s2 = inlined_call_operand.hbm [shape: f32[8,128], index: 2, kind: input, shape index: {}]
  %s3 = inlined_call_operand.hbm [shape: f32[8,128,128], index: 3, kind: input, shape index: {}]
  %s4 = inlined_call_operand.hbm [shape: f32[128,128], index: 4, kind: input, shape index: {}]
  %s5 = inlined_call_operand.hbm [shape: f32[128,128], index: 5, kind: input, shape index: {}]
  %s6 = inlined_call_operand.hbm [shape: f32[128,128], index: 6, kind: input, shape index: {}]
  %s7 = inlined_call_operand.vmem [shape: f32[1,128], index: 7, kind: input, shape index: {}]
  %s8 = inlined_call_operand.hbm [shape: bf16[128,1024], index: 8, kind: input, shape index: {}]
  %s9 = inlined_call_operand.hbm [shape: f32[1,1024], index: 9, kind: input, shape index: {}]
  %s10 = inlined_call_operand.vmem [shape: f32[8,1024], index: 10, kind: output, shape index: {0}]
  %s11 = inlined_call_operand.hbm [shape: f32[8,128], index: 11, kind: output, shape index: {1}]
  %s12 = inlined_call_operand.hbm [shape: f32[8,128], index: 12, kind: output, shape index: {2}]
  %13 = xla_tuple %s10, %s11, %s12
  %s14 = sld [smem:[#allocation0]]
  $region145: #{decoder_with_attention_forward.1} parent=0
    _
  %s16 = ssub.s32 1, %s14
  %s17 = scalar_select 0, %s16, %s14
  %s19 = sshll.u32 %s0, 4
  %s20 = int_to_ptr.vmem [resolvable:$true] %s19
  %22 = dma.vmem_to_smem %s20, 16, [#allocation6], [#allocation5]
  %24 = dma.done [#allocation5], 16
  %25 = sfence
  $region1: #{decoder_with_attention_forward.1} parent=0
    #allocation7 [shape = 'u8[4096]{0}', space=vmem, size = 0x1000, scoped, tag = 'input window, operand 2, single buffered']
    #allocation8 [shape = 's32[2]{0}', space=sflag, size = 0x8, scoped, tag = 'scoped memory for decoder_with_attention_forward.1']
    #allocation9 [shape = 's32[2]{0}', space=sflag, size = 0x8, scoped, tag = 'scoped memory for decoder_with_attention_forward.1']
    #allocation10 [shape = 'u8[524288]{0}', space=vmem, size = 0x80000, scoped, tag = 'input window, operand 3, single buffered']
    #allocation11 [shape = 's32[1]{0}', space=sflag, size = 0x4, scoped, tag = 'scoped memory for decoder_with_attention_forward.1']
    #allocation12 [shape = 'u8[65536]{0}', space=vmem, size = 0x10000, scoped, tag = 'input window, operand 4, single buffered']
    #allocation13 [shape = 'u8[65536]{0}', space=vmem, size = 0x10000, scoped, tag = 'input window, operand 5, single buffered']
    #allocation14 [shape = 's32[1]{0}', space=sflag, size = 0x4, scoped, tag = 'scoped memory for decoder_with_attention_forward.1']
    #allocation15 [shape = 'u8[65536]{0}', space=vmem, size = 0x10000, scoped, tag = 'input window, operand 6, single buffered']
    #allocation16 [shape = 'u8[131072]{0}', space=vmem, size = 0x20000, scoped, tag = 'input window, operand 8']
    #allocation17 [shape = 's32[2]{0}', space=sflag, size = 0x8, scoped, tag = 'scoped memory for decoder_with_attention_forward.1']
    #allocation18 [shape = 'u8[2048]{0}', space=vmem, size = 0x800, scoped, tag = 'input window, operand 9']
    #allocation19 [shape = 'u8[4096]{0}', space=vmem, size = 0x1000, scoped, tag = 'output window, operand 1, single buffered']
    #allocation20 [shape = 'u8[4096]{0}', space=vmem, size = 0x1000, scoped, tag = 'output window, operand 2, single buffered']
    #allocation21 [shape = 's32[1]{0}', space=sflag, size = 0x4, scoped, tag = 'scoped memory for decoder_with_attention_forward.1']
    %26 = vsyncpa [#allocation8], 0
    %27 = vsyncpa [#allocation11], 0
    %28 = vsyncpa [#allocation14], 0
    %29 = vsyncpa [#allocation17], 0
    %s30 = scalar_lea.sflag [#allocation17], 1
    %31 = vsyncpa %s30, 0
    %32 = vsyncpa [#allocation9], 0
    %33 = vsyncpa [#allocation21], 0
    loop: start=0, step=1, limit=6
    $region2: #{decoder_with_attention_forward.1} parent=1 // loop_pre_header
      _
    $region3: #{decoder_with_attention_forward.1} parent=1 // loop_header
      %s35 = sphi 0, %s39
      %p36 = scmp.ge.s32.totalorder %s35, 6
      %s43 = sphi 0, %s43
      %s45 = sphi 0, %s43
      %s46 = sphi 0, %s45
      %s60 = sphi 0, %s46
      %s64 = sphi 0, %s64
      %s66 = sphi 0, %s64
      %s67 = sphi 0, %s66
      %s81 = sphi 0, %s67
      %s85 = sphi 0, %s85
      %s87 = sphi 0, %s85
      %s88 = sphi 0, %s87
      %s102 = sphi 0, %s88
      %s106 = sphi 0, %s106
      %s108 = sphi 0, %s106
      %s109 = sphi 0, %s108
      %s123 = sphi 0, %s109
      %s127 = sphi 0, %s127
      %s129 = sphi 0, %s127
      %s130 = sphi 0, %s129
      %s144 = sphi 0, %s130
      %s148 = sphi 0, %s148
      %s150 = sphi 0, %s148
      %s151 = sphi 0, %s150
      %s165 = sphi 0, %s151
      %s171 = sphi 0, %s173
      %s174 = sphi 0, %s171
      %s175 = sphi 0, %s174
      %s191 = sphi 0, %s175
      %s197 = sphi 0, %s199
      %s200 = sphi 0, %s197
      %s201 = sphi 0, %s200
      %s217 = sphi 0, %s201
      %s223 = sphi 0, %s225
      %s226 = sphi 0, %s223
      %s227 = sphi 0, %s226
      %s243 = sphi 0, %s227
      %s247 = sphi 0, %s247
      %s249 = sphi 0, %s247
      %s250 = sphi 0, %s249
      %s264 = sphi 0, %s250
      %s268 = sphi 0, %s268
      %s270 = sphi 0, %s268
      %s271 = sphi 0, %s270
      %s285 = sphi 0, %s271
    $region4: #{decoder_with_attention_forward.1} parent=1 // loop_header_branch
      %38 = sbr.rel (%p36) target = $region8
    $region5: #{decoder_with_attention_forward.1} parent=1 // loop_body
      %s40 = ssub.s32 %s35, 1
      %s41 = ssub.s32 %s35, 2
      %s42 = sadd.s32 %s35, 1
      %s44 = sadd.s32 %s43, 1
      %p47 = scmp.eq.s32.totalorder %s35, 3
      %p48 = scmp.ne.s32.totalorder %s43, %s45
      %p49 = scmp.eq.s32.totalorder %s35, 0
      %p50 = por %p48, %p49
      %p51 = scmp.ne.s32.totalorder %s43, %s45
      %p52 = scmp.eq.s32.totalorder %s40, 3
      %p53 = por %p51, %p52
      %p54 = scmp.ne.s32.totalorder %s45, %s46
      %p55 = scmp.eq.s32.totalorder %s40, 0
      %p56 = por %p54, %p55
      %p57 = scmp.ne.s32.totalorder %s45, %s46
      %p58 = scmp.eq.s32.totalorder %s41, 3
      %p59 = por %p57, %p58
      %p61 = scmp.ne.s32.totalorder %s46, %s60
      %p62 = scmp.eq.s32.totalorder %s41, 0
      %p63 = por %p61, %p62
      %s65 = sadd.s32 %s64, 1
      %p68 = scmp.eq.s32.totalorder %s35, 3
      %p69 = scmp.ne.s32.totalorder %s64, %s66
      %p70 = scmp.eq.s32.totalorder %s35, 0
      %p71 = por %p69, %p70
      %p72 = scmp.ne.s32.totalorder %s64, %s66
      %p73 = scmp.eq.s32.totalorder %s40, 3
      %p74 = por %p72, %p73
      %p75 = scmp.ne.s32.totalorder %s66, %s67
      %p76 = scmp.eq.s32.totalorder %s40, 0
      %p77 = por %p75, %p76
      %p78 = scmp.ne.s32.totalorder %s66, %s67
      %p79 = scmp.eq.s32.totalorder %s41, 3
      %p80 = por %p78, %p79
      %p82 = scmp.ne.s32.totalorder %s67, %s81
      %p83 = scmp.eq.s32.totalorder %s41, 0
      %p84 = por %p82, %p83
      %s86 = sadd.s32 %s85, 1
      %p89 = scmp.eq.s32.totalorder %s35, 3
      %p90 = scmp.ne.s32.totalorder %s85, %s87
      %p91 = scmp.eq.s32.totalorder %s35, 0
      %p92 = por %p90, %p91
      %p93 = scmp.ne.s32.totalorder %s85, %s87
      %p94 = scmp.eq.s32.totalorder %s40, 3
      %p95 = por %p93, %p94
      %p96 = scmp.ne.s32.totalorder %s87, %s88
      %p97 = scmp.eq.s32.totalorder %s40, 0
      %p98 = por %p96, %p97
      %p99 = scmp.ne.s32.totalorder %s87, %s88
      %p100 = scmp.eq.s32.totalorder %s41, 3
      %p101 = por %p99, %p100
      %p103 = scmp.ne.s32.totalorder %s88, %s102
      %p104 = scmp.eq.s32.totalorder %s41, 0
      %p105 = por %p103, %p104
      %s107 = sadd.s32 %s106, 1
      %p110 = scmp.eq.s32.totalorder %s35, 3
      %p111 = scmp.ne.s32.totalorder %s106, %s108
      %p112 = scmp.eq.s32.totalorder %s35, 0
      %p113 = por %p111, %p112
      %p114 = scmp.ne.s32.totalorder %s106, %s108
      %p115 = scmp.eq.s32.totalorder %s40, 3
      %p116 = por %p114, %p115
      %p117 = scmp.ne.s32.totalorder %s108, %s109
      %p118 = scmp.eq.s32.totalorder %s40, 0
      %p119 = por %p117, %p118
      %p120 = scmp.ne.s32.totalorder %s108, %s109
      %p121 = scmp.eq.s32.totalorder %s41, 3
      %p122 = por %p120, %p121
      %p124 = scmp.ne.s32.totalorder %s109, %s123
      %p125 = scmp.eq.s32.totalorder %s41, 0
      %p126 = por %p124, %p125
      %s128 = sadd.s32 %s127, 1
      %p131 = scmp.eq.s32.totalorder %s35, 3
      %p132 = scmp.ne.s32.totalorder %s127, %s129
      %p133 = scmp.eq.s32.totalorder %s35, 0
      %p134 = por %p132, %p133
      %p135 = scmp.ne.s32.totalorder %s127, %s129
      %p136 = scmp.eq.s32.totalorder %s40, 3
      %p137 = por %p135, %p136
      %p138 = scmp.ne.s32.totalorder %s129, %s130
      %p139 = scmp.eq.s32.totalorder %s40, 0
      %p140 = por %p138, %p139
      %p141 = scmp.ne.s32.totalorder %s129, %s130
      %p142 = scmp.eq.s32.totalorder %s41, 3
      %p143 = por %p141, %p142
      %p145 = scmp.ne.s32.totalorder %s130, %s144
      %p146 = scmp.eq.s32.totalorder %s41, 0
      %p147 = por %p145, %p146
      %s149 = sadd.s32 %s148, 1
      %p152 = scmp.eq.s32.totalorder %s35, 3
      %p153 = scmp.ne.s32.totalorder %s148, %s150
      %p154 = scmp.eq.s32.totalorder %s35, 0
      %p155 = por %p153, %p154
      %p156 = scmp.ne.s32.totalorder %s148, %s150
      %p157 = scmp.eq.s32.totalorder %s40, 3
      %p158 = por %p156, %p157
      %p159 = scmp.ne.s32.totalorder %s150, %s151
      %p160 = scmp.eq.s32.totalorder %s40, 0
      %p161 = por %p159, %p160
      %p162 = scmp.ne.s32.totalorder %s150, %s151
      %p163 = scmp.eq.s32.totalorder %s41, 3
      %p164 = por %p162, %p163
      %p166 = scmp.ne.s32.totalorder %s151, %s165
      %p167 = scmp.eq.s32.totalorder %s41, 0
      %p168 = por %p166, %p167
      %s169 = ssub.s32 %s35, %s42
      %p170 = scmp.eq.s32.totalorder %s169, 0
      %s172 = sadd.s32 %s171, 1
      %s173 = scalar_select %p170, %s171, %s172
      %p176 = pneg %p170
      %p177 = scmp.eq.s32.totalorder %s35, 3
      %p178 = por %p176, %p177
      %p179 = scmp.ne.s32.totalorder %s171, %s174
      %p180 = scmp.eq.s32.totalorder %s35, 0
      %p181 = por %p179, %p180
      %p182 = scmp.ne.s32.totalorder %s171, %s174
      %p183 = scmp.eq.s32.totalorder %s40, 3
      %p184 = por %p182, %p183
      %p185 = scmp.ne.s32.totalorder %s174, %s175
      %p186 = scmp.eq.s32.totalorder %s40, 0
      %p187 = por %p185, %p186
      %p188 = scmp.ne.s32.totalorder %s174, %s175
      %p189 = scmp.eq.s32.totalorder %s41, 3
      %p190 = por %p188, %p189
      %p192 = scmp.ne.s32.totalorder %s175, %s191
      %p193 = scmp.eq.s32.totalorder %s41, 0
      %p194 = por %p192, %p193
      %s195 = ssub.s32 %s35, %s42
      %p196 = scmp.eq.s32.totalorder %s195, 0
      %s198 = sadd.s32 %s197, 1
      %s199 = scalar_select %p196, %s197, %s198
      %p202 = pneg %p196
      %p203 = scmp.eq.s32.totalorder %s35, 3
      %p204 = por %p202, %p203
      %p205 = scmp.ne.s32.totalorder %s197, %s200
      %p206 = scmp.eq.s32.totalorder %s35, 0
      %p207 = por %p205, %p206
      %p208 = scmp.ne.s32.totalorder %s197, %s200
      %p209 = scmp.eq.s32.totalorder %s40, 3
      %p210 = por %p208, %p209
      %p211 = scmp.ne.s32.totalorder %s200, %s201
      %p212 = scmp.eq.s32.totalorder %s40, 0
      %p213 = por %p211, %p212
      %p214 = scmp.ne.s32.totalorder %s200, %s201
      %p215 = scmp.eq.s32.totalorder %s41, 3
      %p216 = por %p214, %p215
      %p218 = scmp.ne.s32.totalorder %s201, %s217
      %p219 = scmp.eq.s32.totalorder %s41, 0
      %p220 = por %p218, %p219
      %s221 = ssub.s32 %s35, %s42
      %p222 = scmp.eq.s32.totalorder %s221, 0
      %s224 = sadd.s32 %s223, 1
      %s225 = scalar_select %p222, %s223, %s224
      %p228 = pneg %p222
      %p229 = scmp.eq.s32.totalorder %s35, 3
      %p230 = por %p228, %p229
      %p231 = scmp.ne.s32.totalorder %s223, %s226
      %p232 = scmp.eq.s32.totalorder %s35, 0
      %p233 = por %p231, %p232
      %p234 = scmp.ne.s32.totalorder %s223, %s226
      %p235 = scmp.eq.s32.totalorder %s40, 3
      %p236 = por %p234, %p235
      %p237 = scmp.ne.s32.totalorder %s226, %s227
      %p238 = scmp.eq.s32.totalorder %s40, 0
      %p239 = por %p237, %p238
      %p240 = scmp.ne.s32.totalorder %s226, %s227
      %p241 = scmp.eq.s32.totalorder %s41, 3
      %p242 = por %p240, %p241
      %p244 = scmp.ne.s32.totalorder %s227, %s243
      %p245 = scmp.eq.s32.totalorder %s41, 0
      %p246 = por %p244, %p245
      %s248 = sadd.s32 %s247, 1
      %p251 = scmp.eq.s32.totalorder %s35, 3
      %p252 = scmp.ne.s32.totalorder %s247, %s249
      %p253 = scmp.eq.s32.totalorder %s35, 0
      %p254 = por %p252, %p253
      %p255 = scmp.ne.s32.totalorder %s247, %s249
      %p256 = scmp.eq.s32.totalorder %s40, 3
      %p257 = por %p255, %p256
      %p258 = scmp.ne.s32.totalorder %s249, %s250
      %p259 = scmp.eq.s32.totalorder %s40, 0
      %p260 = por %p258, %p259
      %p261 = scmp.ne.s32.totalorder %s249, %s250
      %p262 = scmp.eq.s32.totalorder %s41, 3
      %p263 = por %p261, %p262
      %p265 = scmp.ne.s32.totalorder %s250, %s264
      %p266 = scmp.eq.s32.totalorder %s41, 0
      %p267 = por %p265, %p266
      %s269 = sadd.s32 %s268, 1
      %p272 = scmp.eq.s32.totalorder %s35, 3
      %p273 = scmp.ne.s32.totalorder %s268, %s270
      %p274 = scmp.eq.s32.totalorder %s35, 0
      %p275 = por %p273, %p274
      %p276 = scmp.ne.s32.totalorder %s268, %s270
      %p277 = scmp.eq.s32.totalorder %s40, 3
      %p278 = por %p276, %p277
      %p279 = scmp.ne.s32.totalorder %s270, %s271
      %p280 = scmp.eq.s32.totalorder %s40, 0
      %p281 = por %p279, %p280
      %p282 = scmp.ne.s32.totalorder %s270, %s271
      %p283 = scmp.eq.s32.totalorder %s41, 3
      %p284 = por %p282, %p283
      %p286 = scmp.ne.s32.totalorder %s271, %s285
      %p287 = scmp.eq.s32.totalorder %s41, 0
      %p288 = por %p286, %p287
      %p289 = scmp.le.s32.totalorder 1, %s35
      %p290 = scmp.lt.s32.totalorder %s35, 5
      %p291 = pnand %p289, %p290
      %p292 = pneg %p291
      // Predicated region
      $region9: #{decoder_with_attention_forward.1} parent=5 // pred_check
        _
      $region10: #{decoder_with_attention_forward.1} parent=5 // pred_check_branch
        %294 = sbr.rel (%p291) target = $region12
      $region11: #{decoder_with_attention_forward.1} parent=5 // pred_region
        %s295 = ssub.s32 %s35, 1
        // Predicated region
        $region13: #{decoder_with_attention_forward.1} parent=11 // pred_check
          %p296 = pneg %p56
        $region14: #{decoder_with_attention_forward.1} parent=11 // pred_check_branch
          %298 = sbr.rel (%p296) target = $region16
        $region15: #{decoder_with_attention_forward.1} parent=11 // pred_region
          %300 = vsyncadd [#allocation8], 0
          %s302 = sshll.u32 %s2, 4
          %s303 = int_to_ptr.hbm [resolvable:$true] %s302
          %s304 = sshll.u32 [#allocation7], 4
          %s305 = int_to_ptr.vmem [resolvable:$true] %s304
          %307 = dma.hbm_to_vmem [thread:$0]  %s303, 128, %s305, [#allocation8]
        $region16: #{decoder_with_attention_forward.1} parent=11 // pred_fallthru
          _
        // Predicated region
        $region17: #{decoder_with_attention_forward.1} parent=11 // pred_check
          %p308 = pneg %p77
        $region18: #{decoder_with_attention_forward.1} parent=11 // pred_check_branch
          %310 = sbr.rel (%p308) target = $region20
        $region19: #{decoder_with_attention_forward.1} parent=11 // pred_region
          %312 = vsyncadd [#allocation11], 0
          %s313 = sshll.u32 %s3, 4
          %s314 = int_to_ptr.hbm [resolvable:$true] %s313
          %s315 = sshll.u32 [#allocation10], 4
          %s316 = int_to_ptr.vmem [resolvable:$true] %s315
          %321 = dma.hbm_to_vmem [thread:$0]  %s314, 16384, %s316, [#allocation11], 128, 128, 8
        $region20: #{decoder_with_attention_forward.1} parent=11 // pred_fallthru
          _
        // Predicated region
        $region21: #{decoder_with_attention_forward.1} parent=11 // pred_check
          %p322 = pneg %p98
        $region22: #{decoder_with_attention_forward.1} parent=11 // pred_check_branch
          %324 = sbr.rel (%p322) target = $region24
        $region23: #{decoder_with_attention_forward.1} parent=11 // pred_region
          %326 = vsyncadd [#allocation11], 0
          %s327 = sshll.u32 %s4, 4
          %s328 = int_to_ptr.hbm [resolvable:$true] %s327
          %s329 = sshll.u32 [#allocation12], 4
          %s330 = int_to_ptr.vmem [resolvable:$true] %s329
          %335 = dma.hbm_to_vmem [thread:$0]  %s328, 2048, %s330, [#allocation11], 128, 128, 8
        $region24: #{decoder_with_attention_forward.1} parent=11 // pred_fallthru
          _
        // Predicated region
        $region25: #{decoder_with_attention_forward.1} parent=11 // pred_check
          %p336 = pneg %p119
        $region26: #{decoder_with_attention_forward.1} parent=11 // pred_check_branch
          %338 = sbr.rel (%p336) target = $region28
        $region27: #{decoder_with_attention_forward.1} parent=11 // pred_region
          %340 = vsyncadd [#allocation14], 0
          %s341 = sshll.u32 %s5, 4
          %s342 = int_to_ptr.hbm [resolvable:$true] %s341
          %s343 = sshll.u32 [#allocation13], 4
          %s344 = int_to_ptr.vmem [resolvable:$true] %s343
          %349 = dma.hbm_to_vmem [thread:$0]  %s342, 2048, %s344, [#allocation14], 128, 128, 8
        $region28: #{decoder_with_attention_forward.1} parent=11 // pred_fallthru
          _
        // Predicated region
        $region29: #{decoder_with_attention_forward.1} parent=11 // pred_check
          %p350 = pneg %p140
        $region30: #{decoder_with_attention_forward.1} parent=11 // pred_check_branch
          %352 = sbr.rel (%p350) target = $region32
        $region31: #{decoder_with_attention_forward.1} parent=11 // pred_region
          %354 = vsyncadd [#allocation14], 0
          %s355 = sshll.u32 %s6, 4
          %s356 = int_to_ptr.hbm [resolvable:$true] %s355
          %s357 = sshll.u32 [#allocation15], 4
          %s358 = int_to_ptr.vmem [resolvable:$true] %s357
          %363 = dma.hbm_to_vmem [thread:$0]  %s356, 2048, %s358, [#allocation14], 128, 128, 8
        $region32: #{decoder_with_attention_forward.1} parent=11 // pred_fallthru
          _
        // Predicated region
        $region33: #{decoder_with_attention_forward.1} parent=11 // pred_check
          %p364 = pneg %p161
        $region34: #{decoder_with_attention_forward.1} parent=11 // pred_check_branch
          %366 = sbr.rel (%p364) target = $region36
        $region35: #{decoder_with_attention_forward.1} parent=11 // pred_region
          _
        $region36: #{decoder_with_attention_forward.1} parent=11 // pred_fallthru
          _
      $region12: #{decoder_with_attention_forward.1} parent=5 // pred_fallthru
        _
      %p367 = scmp.lt.s32.totalorder %s35, 4
      // Predicated region
      $region37: #{decoder_with_attention_forward.1} parent=5 // pred_check
        %p368 = pneg %p367
      $region38: #{decoder_with_attention_forward.1} parent=5 // pred_check_branch
        %370 = sbr.rel (%p368) target = $region40
      $region39: #{decoder_with_attention_forward.1} parent=5 // pred_region
        // Predicated region
        $region41: #{decoder_with_attention_forward.1} parent=39 // pred_check
          %p371 = pneg %p181
        $region42: #{decoder_with_attention_forward.1} parent=39 // pred_check_branch
          %373 = sbr.rel (%p371) target = $region44
        $region43: #{decoder_with_attention_forward.1} parent=39 // pred_region
          %s374 = sand.u32 %s35, 1
          %s375 = scalar_lea.sflag [#allocation17], %s374
          %s376 = sand.u32 %s171, 1
          %s377 = smul.addr %s376, 128
          %s378 = scalar_lea.vmem [#allocation16], %s377
          %s379 = smul.u32 2, %s35
          %381 = vsyncadd %s375, 0
          %s382 = smul.addr %s379, 4
          %s383 = scalar_lea.hbm %s8, %s382
          %s384 = sshll.u32 %s383, 4
          %s385 = int_to_ptr.hbm [resolvable:$true] %s384
          %s386 = sshll.u32 %s378, 4
          %s387 = int_to_ptr.vmem [resolvable:$true] %s386
          %392 = dma.hbm_to_vmem [thread:$0]  %s385, 2048, %s387, %s375, 512, 128, 8
        $region44: #{decoder_with_attention_forward.1} parent=39 // pred_fallthru
          _
        // Predicated region
        $region45: #{decoder_with_attention_forward.1} parent=39 // pred_check
          %p393 = pneg %p207
        $region46: #{decoder_with_attention_forward.1} parent=39 // pred_check_branch
          %395 = sbr.rel (%p393) target = $region48
        $region47: #{decoder_with_attention_forward.1} parent=39 // pred_region
          %s396 = sand.u32 %s35, 1
          %s397 = scalar_lea.sflag [#allocation17], %s396
          %s398 = sand.u32 %s197, 1
          %s399 = smul.addr %s398, 2
          %s400 = scalar_lea.vmem [#allocation18], %s399
          %s401 = smul.u32 2, %s35
          %403 = vsyncadd %s397, 0
          %s404 = scalar_lea.hbm %s9, %s401
          %s406 = sshll.u32 %s404, 4
          %s407 = int_to_ptr.hbm [resolvable:$true] %s406
          %s408 = sshll.u32 %s400, 4
          %s409 = int_to_ptr.vmem [resolvable:$true] %s408
          %411 = dma.hbm_to_vmem [thread:$0]  %s407, 32, %s409, %s397
        $region48: #{decoder_with_attention_forward.1} parent=39 // pred_fallthru
          _
      $region40: #{decoder_with_attention_forward.1} parent=5 // pred_fallthru
        _
      %p412 = scmp.le.s32.totalorder 1, %s35
      %p413 = scmp.lt.s32.totalorder %s35, 5
      %p414 = pnand %p412, %p413
      %p415 = pneg %p414
      // Predicated region
      $region49: #{decoder_with_attention_forward.1} parent=5 // pred_check
        _
      $region50: #{decoder_with_attention_forward.1} parent=5 // pred_check_branch
        %417 = sbr.rel (%p414) target = $region52
      $region51: #{decoder_with_attention_forward.1} parent=5 // pred_region
        %s418 = ssub.s32 %s35, 1
        // Predicated region
        $region53: #{decoder_with_attention_forward.1} parent=51 // pred_check
          %p419 = pneg %p56
        $region54: #{decoder_with_attention_forward.1} parent=51 // pred_check_branch
          %421 = sbr.rel (%p419) target = $region56
        $region55: #{decoder_with_attention_forward.1} parent=51 // pred_region
          %423 = dma.done [#allocation8], 128
        $region56: #{decoder_with_attention_forward.1} parent=51 // pred_fallthru
          _
        // Predicated region
        $region57: #{decoder_with_attention_forward.1} parent=51 // pred_check
          %p424 = pneg %p77
        $region58: #{decoder_with_attention_forward.1} parent=51 // pred_check_branch
          %426 = sbr.rel (%p424) target = $region60
        $region59: #{decoder_with_attention_forward.1} parent=51 // pred_region
          %428 = dma.done [#allocation11], 16384
        $region60: #{decoder_with_attention_forward.1} parent=51 // pred_fallthru
          _
        // Predicated region
        $region61: #{decoder_with_attention_forward.1} parent=51 // pred_check
          %p429 = pneg %p98
        $region62: #{decoder_with_attention_forward.1} parent=51 // pred_check_branch
          %431 = sbr.rel (%p429) target = $region64
        $region63: #{decoder_with_attention_forward.1} parent=51 // pred_region
          %433 = dma.done [#allocation11], 2048
        $region64: #{decoder_with_attention_forward.1} parent=51 // pred_fallthru
          _
        // Predicated region
        $region65: #{decoder_with_attention_forward.1} parent=51 // pred_check
          %p434 = pneg %p119
        $region66: #{decoder_with_attention_forward.1} parent=51 // pred_check_branch
          %436 = sbr.rel (%p434) target = $region68
        $region67: #{decoder_with_attention_forward.1} parent=51 // pred_region
          %438 = dma.done [#allocation14], 2048
        $region68: #{decoder_with_attention_forward.1} parent=51 // pred_fallthru
          _
        // Predicated region
        $region69: #{decoder_with_attention_forward.1} parent=51 // pred_check
          %p439 = pneg %p140
        $region70: #{decoder_with_attention_forward.1} parent=51 // pred_check_branch
          %441 = sbr.rel (%p439) target = $region72
        $region71: #{decoder_with_attention_forward.1} parent=51 // pred_region
          %443 = dma.done [#allocation14], 2048
        $region72: #{decoder_with_attention_forward.1} parent=51 // pred_fallthru
          _
        %s444 = sand.u32 %s40, 1
        %s445 = scalar_lea.sflag [#allocation17], %s444
        %s446 = sand.u32 %s174, 1
        %s447 = smul.addr %s446, 128
        %s448 = scalar_lea.vmem [#allocation16], %s447
        // Predicated region
        $region73: #{decoder_with_attention_forward.1} parent=51 // pred_check
          %p449 = pneg %p187
        $region74: #{decoder_with_attention_forward.1} parent=51 // pred_check_branch
          %451 = sbr.rel (%p449) target = $region76
        $region75: #{decoder_with_attention_forward.1} parent=51 // pred_region
          %453 = dma.done %s445, 2048
        $region76: #{decoder_with_attention_forward.1} parent=51 // pred_fallthru
          _
        %s454 = sand.u32 %s40, 1
        %s455 = scalar_lea.sflag [#allocation17], %s454
        %s456 = sand.u32 %s200, 1
        %s457 = smul.addr %s456, 2
        %s458 = scalar_lea.vmem [#allocation18], %s457
        // Predicated region
        $region77: #{decoder_with_attention_forward.1} parent=51 // pred_check
          %p459 = pneg %p213
        $region78: #{decoder_with_attention_forward.1} parent=51 // pred_check_branch
          %461 = sbr.rel (%p459) target = $region80
        $region79: #{decoder_with_attention_forward.1} parent=51 // pred_region
          %463 = dma.done %s455, 32
        $region80: #{decoder_with_attention_forward.1} parent=51 // pred_fallthru
          _
        %p464 = pneg %p56
        %p465 = pneg %p53
        %p466 = pneg %p77
        %p467 = pneg %p74
        %p468 = pneg %p98
        %p469 = pneg %p95
        %p470 = pneg %p119
        %p471 = pneg %p116
        %p472 = pneg %p140
        %p473 = pneg %p137
        %p474 = pneg %p161
        %p475 = pneg %p158
        %s476 = sand.u32 %s40, 1
        %s477 = scalar_lea.sflag [#allocation17], %s476
        %s478 = sand.u32 %s174, 1
        %s479 = smul.addr %s478, 128
        %s480 = scalar_lea.vmem [#allocation16], %s479
        %p481 = pneg %p187
        %p482 = pneg %p184
        %s483 = sand.u32 %s40, 1
        %s484 = scalar_lea.sflag [#allocation17], %s483
        %s485 = sand.u32 %s200, 1
        %s486 = smul.addr %s485, 2
        %s487 = scalar_lea.vmem [#allocation18], %s486
        %p488 = pneg %p213
        %p489 = pneg %p210
        %p490 = pneg %p239
        %p491 = pneg %p236
        %s492 = smul.u32 2, %s40
        %p493 = scmp.lt.s32.totalorder %s492, 7
        %s494 = scalar_select %p493, %s492, 7
        %s495 = smul.addr %s494, 8
        %s496 = scalar_lea.vmem %s10, %s495
        %p497 = pneg %p260
        %p498 = pneg %p257
        %p499 = pneg %p281
        %p500 = pneg %p278
        %s501 = smul.u32 2, %s40
        %s502 = smul.u32 2, %s40
        %s503 = smul.u32 2, %s40
        %p504 = scmp.lt.s32.totalorder %s503, 7
        %s505 = scalar_select %p504, %s503, 7
        %s506 = smul.addr %s505, 8
        %s507 = scalar_lea.vmem %s10, %s506
        %s508 = smul.u32 2, %s40
        %p509 = scmp.eq.s32.totalorder %s40, 0
        // Predicated region
        $region81: #{decoder_with_attention_forward.1} parent=51 // pred_check
          %p510 = pneg %p509
        $region82: #{decoder_with_attention_forward.1} parent=51 // pred_check_branch
          %512 = sbr.rel (%p510) target = $region84
        $region83: #{decoder_with_attention_forward.1} parent=51 // pred_region
          %s513 = sld [smem:[#allocation6]]
          %s514 = scalar_lea.hbm %s1, %s513
          // Predicated region
          $region85: #{decoder_with_attention_forward.1} parent=83 // pred_check
            _
          $region86: #{decoder_with_attention_forward.1} parent=83 // pred_check_branch
            %516 = sbr.rel target = $region88
          $region87: #{decoder_with_attention_forward.1} parent=83 // pred_region
            %517 = sst [smem:[#allocation24]] [#allocation23]
            %518 = sst [smem:[#allocation25]] [#allocation22]
          $region88: #{decoder_with_attention_forward.1} parent=83 // pred_fallthru
            _
          %520 = shalt.err (0)
          %s522 = sshll.u32 %s514, 4
          %s523 = int_to_ptr.hbm [resolvable:$true] %s522
          %s524 = sshll.u32 [#allocation2], 4
          %s525 = int_to_ptr.vmem [resolvable:$true] %s524
          %527 = dma.hbm_to_vmem [thread:$0]  %s523, 16, %s525, [#allocation4]
          %s528 = sld [smem:[#allocation6 + $0x1]]
          %s529 = scalar_lea.hbm %s1, %s528
          %s530 = scalar_lea.vmem [#allocation2], 1
          %s531 = scalar_lea.sflag [#allocation4], 1
          // Predicated region
          $region89: #{decoder_with_attention_forward.1} parent=83 // pred_check
            _
          $region90: #{decoder_with_attention_forward.1} parent=83 // pred_check_branch
            %533 = sbr.rel target = $region92
          $region91: #{decoder_with_attention_forward.1} parent=83 // pred_region
            %534 = sst [smem:[#allocation24]] [#allocation27]
            %535 = sst [smem:[#allocation25]] [#allocation26]
          $region92: #{decoder_with_attention_forward.1} parent=83 // pred_fallthru
            _
          %537 = shalt.err (0)
          %s539 = sshll.u32 %s529, 4
          %s540 = int_to_ptr.hbm [resolvable:$true] %s539
          %s541 = sshll.u32 %s530, 4
          %s542 = int_to_ptr.vmem [resolvable:$true] %s541
          %544 = dma.hbm_to_vmem [thread:$0]  %s540, 16, %s542, %s531
          %s545 = sld [smem:[#allocation6 + $0x2]]
          %s546 = scalar_lea.hbm %s1, %s545
          %s547 = scalar_lea.vmem [#allocation2], 2
          %s548 = scalar_lea.sflag [#allocation4], 2
          // Predicated region
          $region93: #{decoder_with_attention_forward.1} parent=83 // pred_check
            _
          $region94: #{decoder_with_attention_forward.1} parent=83 // pred_check_branch
            %550 = sbr.rel target = $region96
          $region95: #{decoder_with_attention_forward.1} parent=83 // pred_region
            %551 = sst [smem:[#allocation24]] [#allocation29]
            %552 = sst [smem:[#allocation25]] [#allocation28]
          $region96: #{decoder_with_attention_forward.1} parent=83 // pred_fallthru
            _
          %554 = shalt.err (0)
          %s556 = sshll.u32 %s546, 4
          %s557 = int_to_ptr.hbm [resolvable:$true] %s556
          %s558 = sshll.u32 %s547, 4
          %s559 = int_to_ptr.vmem [resolvable:$true] %s558
          %561 = dma.hbm_to_vmem [thread:$0]  %s557, 16, %s559, %s548
          %s562 = sld [smem:[#allocation6 + $0x3]]
          %s563 = scalar_lea.hbm %s1, %s562
          %s564 = scalar_lea.vmem [#allocation2], 3
          %s565 = scalar_lea.sflag [#allocation4], 3
          // Predicated region
          $region97: #{decoder_with_attention_forward.1} parent=83 // pred_check
            _
          $region98: #{decoder_with_attention_forward.1} parent=83 // pred_check_branch
            %567 = sbr.rel target = $region100
          $region99: #{decoder_with_attention_forward.1} parent=83 // pred_region
            %568 = sst [smem:[#allocation24]] [#allocation31]
            %569 = sst [smem:[#allocation25]] [#allocation30]
          $region100: #{decoder_with_attention_forward.1} parent=83 // pred_fallthru
            _
          %571 = shalt.err (0)
          %s573 = sshll.u32 %s563, 4
          %s574 = int_to_ptr.hbm [resolvable:$true] %s573
          %s575 = sshll.u32 %s564, 4
          %s576 = int_to_ptr.vmem [resolvable:$true] %s575
          %578 = dma.hbm_to_vmem [thread:$0]  %s574, 16, %s576, %s565
          %s579 = sld [smem:[#allocation6 + $0x4]]
          %s580 = scalar_lea.hbm %s1, %s579
          %s581 = scalar_lea.vmem [#allocation2], 4
          %s582 = scalar_lea.sflag [#allocation4], 4
          // Predicated region
          $region101: #{decoder_with_attention_forward.1} parent=83 // pred_check
            _
          $region102: #{decoder_with_attention_forward.1} parent=83 // pred_check_branch
            %584 = sbr.rel target = $region104
          $region103: #{decoder_with_attention_forward.1} parent=83 // pred_region
            %585 = sst [smem:[#allocation24]] [#allocation33]
            %586 = sst [smem:[#allocation25]] [#allocation32]
          $region104: #{decoder_with_attention_forward.1} parent=83 // pred_fallthru
            _
          %588 = shalt.err (0)
          %s590 = sshll.u32 %s580, 4
          %s591 = int_to_ptr.hbm [resolvable:$true] %s590
          %s592 = sshll.u32 %s581, 4
          %s593 = int_to_ptr.vmem [resolvable:$true] %s592
          %595 = dma.hbm_to_vmem [thread:$0]  %s591, 16, %s593, %s582
          %s596 = sld [smem:[#allocation6 + $0x5]]
          %s597 = scalar_lea.hbm %s1, %s596
          %s598 = scalar_lea.vmem [#allocation2], 5
          %s599 = scalar_lea.sflag [#allocation4], 5
          // Predicated region
          $region105: #{decoder_with_attention_forward.1} parent=83 // pred_check
            _
          $region106: #{decoder_with_attention_forward.1} parent=83 // pred_check_branch
            %601 = sbr.rel target = $region108
          $region107: #{decoder_with_attention_forward.1} parent=83 // pred_region
            %602 = sst [smem:[#allocation24]] [#allocation35]
            %603 = sst [smem:[#allocation25]] [#allocation34]
          $region108: #{decoder_with_attention_forward.1} parent=83 // pred_fallthru
            _
          %605 = shalt.err (0)
          %s607 = sshll.u32 %s597, 4
          %s608 = int_to_ptr.hbm [resolvable:$true] %s607
          %s609 = sshll.u32 %s598, 4
          %s610 = int_to_ptr.vmem [resolvable:$true] %s609
          %612 = dma.hbm_to_vmem [thread:$0]  %s608, 16, %s610, %s599
          %s613 = sld [smem:[#allocation6 + $0x6]]
          %s614 = scalar_lea.hbm %s1, %s613
          %s615 = scalar_lea.vmem [#allocation2], 6
          %s616 = scalar_lea.sflag [#allocation4], 6
          // Predicated region
          $region109: #{decoder_with_attention_forward.1} parent=83 // pred_check
            _
          $region110: #{decoder_with_attention_forward.1} parent=83 // pred_check_branch
            %618 = sbr.rel target = $region112
          $region111: #{decoder_with_attention_forward.1} parent=83 // pred_region
            %619 = sst [smem:[#allocation24]] [#allocation37]
            %620 = sst [smem:[#allocation25]] [#allocation36]
          $region112: #{decoder_with_attention_forward.1} parent=83 // pred_fallthru
            _
          %622 = shalt.err (0)
          %s624 = sshll.u32 %s614, 4
          %s625 = int_to_ptr.hbm [resolvable:$true] %s624
          %s626 = sshll.u32 %s615, 4
          %s627 = int_to_ptr.vmem [resolvable:$true] %s626
          %629 = dma.hbm_to_vmem [thread:$0]  %s625, 16, %s627, %s616
          %s630 = sld [smem:[#allocation6 + $0x7]]
          %s631 = scalar_lea.hbm %s1, %s630
          %s632 = scalar_lea.vmem [#allocation2], 7
          %s633 = scalar_lea.sflag [#allocation4], 7
          // Predicated region
          $region113: #{decoder_with_attention_forward.1} parent=83 // pred_check
            _
          $region114: #{decoder_with_attention_forward.1} parent=83 // pred_check_branch
            %635 = sbr.rel target = $region116
          $region115: #{decoder_with_attention_forward.1} parent=83 // pred_region
            %636 = sst [smem:[#allocation24]] [#allocation39]
            %637 = sst [smem:[#allocation25]] [#allocation38]
          $region116: #{decoder_with_attention_forward.1} parent=83 // pred_fallthru
            _
          %639 = shalt.err (0)
          %s641 = sshll.u32 %s631, 4
          %s642 = int_to_ptr.hbm [resolvable:$true] %s641
          %s643 = sshll.u32 %s632, 4
          %s644 = int_to_ptr.vmem [resolvable:$true] %s643
          %646 = dma.hbm_to_vmem [thread:$0]  %s642, 16, %s644, %s633
          %v647 = vld [vmem:[#allocation7] sm:$0xff]
          %v648 = vld [vmem:[#allocation10] sm:$0xff]
          %v649 = vld [vmem:[#allocation10 + $0x8] sm:$0xff]
          %v650 = vld [vmem:[#allocation10 + $0x10] sm:$0xff]
          %v651 = vld [vmem:[#allocation10 + $0x18] sm:$0xff]
          %v652 = vld [vmem:[#allocation10 + $0x20] sm:$0xff]
          %v653 = vld [vmem:[#allocation10 + $0x28] sm:$0xff]
          %v654 = vld [vmem:[#allocation10 + $0x30] sm:$0xff]
          %v655 = vld [vmem:[#allocation10 + $0x38] sm:$0xff]
          %v656 = vld [vmem:[#allocation10 + $0x40] sm:$0xff]
          %v657 = vld [vmem:[#allocation10 + $0x48] sm:$0xff]
          %v658 = vld [vmem:[#allocation10 + $0x50] sm:$0xff]
          %v659 = vld [vmem:[#allocation10 + $0x58] sm:$0xff]
          %v660 = vld [vmem:[#allocation10 + $0x60] sm:$0xff]
          %v661 = vld [vmem:[#allocation10 + $0x68] sm:$0xff]
          %v662 = vld [vmem:[#allocation10 + $0x70] sm:$0xff]
          %v663 = vld [vmem:[#allocation10 + $0x78] sm:$0xff]
          %v664 = vld [vmem:[#allocation10 + $0x80] sm:$0xff]
          %v665 = vld [vmem:[#allocation10 + $0x88] sm:$0xff]
          %v666 = vld [vmem:[#allocation10 + $0x90] sm:$0xff]
          %v667 = vld [vmem:[#allocation10 + $0x98] sm:$0xff]
          %v668 = vld [vmem:[#allocation10 + $0xa0] sm:$0xff]
          %v669 = vld [vmem:[#allocation10 + $0xa8] sm:$0xff]
          %v670 = vld [vmem:[#allocation10 + $0xb0] sm:$0xff]
          %v671 = vld [vmem:[#allocation10 + $0xb8] sm:$0xff]
          %v672 = vld [vmem:[#allocation10 + $0xc0] sm:$0xff]
          %v673 = vld [vmem:[#allocation10 + $0xc8] sm:$0xff]
          %v674 = vld [vmem:[#allocation10 + $0xd0] sm:$0xff]
          %v675 = vld [vmem:[#allocation10 + $0xd8] sm:$0xff]
          %v676 = vld [vmem:[#allocation10 + $0xe0] sm:$0xff]
          %v677 = vld [vmem:[#allocation10 + $0xe8] sm:$0xff]
          %v678 = vld [vmem:[#allocation10 + $0xf0] sm:$0xff]
          %v679 = vld [vmem:[#allocation10 + $0xf8] sm:$0xff]
          %v680 = vld [vmem:[#allocation10 + $0x100] sm:$0xff]
          %v681 = vld [vmem:[#allocation10 + $0x108] sm:$0xff]
          %v682 = vld [vmem:[#allocation10 + $0x110] sm:$0xff]
          %v683 = vld [vmem:[#allocation10 + $0x118] sm:$0xff]
          %v684 = vld [vmem:[#allocation10 + $0x120] sm:$0xff]
          %v685 = vld [vmem:[#allocation10 + $0x128] sm:$0xff]
          %v686 = vld [vmem:[#allocation10 + $0x130] sm:$0xff]
          %v687 = vld [vmem:[#allocation10 + $0x138] sm:$0xff]
          %v688 = vld [vmem:[#allocation10 + $0x140] sm:$0xff]
          %v689 = vld [vmem:[#allocation10 + $0x148] sm:$0xff]
          %v690 = vld [vmem:[#allocation10 + $0x150] sm:$0xff]
          %v691 = vld [vmem:[#allocation10 + $0x158] sm:$0xff]
          %v692 = vld [vmem:[#allocation10 + $0x160] sm:$0xff]
          %v693 = vld [vmem:[#allocation10 + $0x168] sm:$0xff]
          %v694 = vld [vmem:[#allocation10 + $0x170] sm:$0xff]
          %v695 = vld [vmem:[#allocation10 + $0x178] sm:$0xff]
          %v696 = vld [vmem:[#allocation10 + $0x180] sm:$0xff]
          %v697 = vld [vmem:[#allocation10 + $0x188] sm:$0xff]
          %v698 = vld [vmem:[#allocation10 + $0x190] sm:$0xff]
          %v699 = vld [vmem:[#allocation10 + $0x198] sm:$0xff]
          %v700 = vld [vmem:[#allocation10 + $0x1a0] sm:$0xff]
          %v701 = vld [vmem:[#allocation10 + $0x1a8] sm:$0xff]
          %v702 = vld [vmem:[#allocation10 + $0x1b0] sm:$0xff]
          %v703 = vld [vmem:[#allocation10 + $0x1b8] sm:$0xff]
          %v704 = vld [vmem:[#allocation10 + $0x1c0] sm:$0xff]
          %v705 = vld [vmem:[#allocation10 + $0x1c8] sm:$0xff]
          %v706 = vld [vmem:[#allocation10 + $0x1d0] sm:$0xff]
          %v707 = vld [vmem:[#allocation10 + $0x1d8] sm:$0xff]
          %v708 = vld [vmem:[#allocation10 + $0x1e0] sm:$0xff]
          %v709 = vld [vmem:[#allocation10 + $0x1e8] sm:$0xff]
          %v710 = vld [vmem:[#allocation10 + $0x1f0] sm:$0xff]
          %v711 = vld [vmem:[#allocation10 + $0x1f8] sm:$0xff]
          %v712 = vld [vmem:[#allocation10 + $0x200] sm:$0xff]
          %v713 = vld [vmem:[#allocation10 + $0x208] sm:$0xff]
          %v714 = vld [vmem:[#allocation10 + $0x210] sm:$0xff]
          %v715 = vld [vmem:[#allocation10 + $0x218] sm:$0xff]
          %v716 = vld [vmem:[#allocation10 + $0x220] sm:$0xff]
          %v717 = vld [vmem:[#allocation10 + $0x228] sm:$0xff]
          %v718 = vld [vmem:[#allocation10 + $0x230] sm:$0xff]
          %v719 = vld [vmem:[#allocation10 + $0x238] sm:$0xff]
          %v720 = vld [vmem:[#allocation10 + $0x240] sm:$0xff]
          %v721 = vld [vmem:[#allocation10 + $0x248] sm:$0xff]
          %v722 = vld [vmem:[#allocation10 + $0x250] sm:$0xff]
          %v723 = vld [vmem:[#allocation10 + $0x258] sm:$0xff]
          %v724 = vld [vmem:[#allocation10 + $0x260] sm:$0xff]
          %v725 = vld [vmem:[#allocation10 + $0x268] sm:$0xff]
          %v726 = vld [vmem:[#allocation10 + $0x270] sm:$0xff]
          %v727 = vld [vmem:[#allocation10 + $0x278] sm:$0xff]
          %v728 = vld [vmem:[#allocation10 + $0x280] sm:$0xff]
          %v729 = vld [vmem:[#allocation10 + $0x288] sm:$0xff]
          %v730 = vld [vmem:[#allocation10 + $0x290] sm:$0xff]
          %v731 = vld [vmem:[#allocation10 + $0x298] sm:$0xff]
          %v732 = vld [vmem:[#allocation10 + $0x2a0] sm:$0xff]
          %v733 = vld [vmem:[#allocation10 + $0x2a8] sm:$0xff]
          %v734 = vld [vmem:[#allocation10 + $0x2b0] sm:$0xff]
          %v735 = vld [vmem:[#allocation10 + $0x2b8] sm:$0xff]
          %v736 = vld [vmem:[#allocation10 + $0x2c0] sm:$0xff]
          %v737 = vld [vmem:[#allocation10 + $0x2c8] sm:$0xff]
          %v738 = vld [vmem:[#allocation10 + $0x2d0] sm:$0xff]
          %v739 = vld [vmem:[#allocation10 + $0x2d8] sm:$0xff]
          %v740 = vld [vmem:[#allocation10 + $0x2e0] sm:$0xff]
          %v741 = vld [vmem:[#allocation10 + $0x2e8] sm:$0xff]
          %v742 = vld [vmem:[#allocation10 + $0x2f0] sm:$0xff]
          %v743 = vld [vmem:[#allocation10 + $0x2f8] sm:$0xff]
          %v744 = vld [vmem:[#allocation10 + $0x300] sm:$0xff]
          %v745 = vld [vmem:[#allocation10 + $0x308] sm:$0xff]
          %v746 = vld [vmem:[#allocation10 + $0x310] sm:$0xff]
          %v747 = vld [vmem:[#allocation10 + $0x318] sm:$0xff]
          %v748 = vld [vmem:[#allocation10 + $0x320] sm:$0xff]
          %v749 = vld [vmem:[#allocation10 + $0x328] sm:$0xff]
          %v750 = vld [vmem:[#allocation10 + $0x330] sm:$0xff]
          %v751 = vld [vmem:[#allocation10 + $0x338] sm:$0xff]
          %v752 = vld [vmem:[#allocation10 + $0x340] sm:$0xff]
          %v753 = vld [vmem:[#allocation10 + $0x348] sm:$0xff]
          %v754 = vld [vmem:[#allocation10 + $0x350] sm:$0xff]
          %v755 = vld [vmem:[#allocation10 + $0x358] sm:$0xff]
          %v756 = vld [vmem:[#allocation10 + $0x360] sm:$0xff]
          %v757 = vld [vmem:[#allocation10 + $0x368] sm:$0xff]
          %v758 = vld [vmem:[#allocation10 + $0x370] sm:$0xff]
          %v759 = vld [vmem:[#allocation10 + $0x378] sm:$0xff]
          %v760 = vld [vmem:[#allocation10 + $0x380] sm:$0xff]
          %v761 = vld [vmem:[#allocation10 + $0x388] sm:$0xff]
          %v762 = vld [vmem:[#allocation10 + $0x390] sm:$0xff]
          %v763 = vld [vmem:[#allocation10 + $0x398] sm:$0xff]
          %v764 = vld [vmem:[#allocation10 + $0x3a0] sm:$0xff]
          %v765 = vld [vmem:[#allocation10 + $0x3a8] sm:$0xff]
          %v766 = vld [vmem:[#allocation10 + $0x3b0] sm:$0xff]
          %v767 = vld [vmem:[#allocation10 + $0x3b8] sm:$0xff]
          %v768 = vld [vmem:[#allocation10 + $0x3c0] sm:$0xff]
          %v769 = vld [vmem:[#allocation10 + $0x3c8] sm:$0xff]
          %v770 = vld [vmem:[#allocation10 + $0x3d0] sm:$0xff]
          %v771 = vld [vmem:[#allocation10 + $0x3d8] sm:$0xff]
          %v772 = vld [vmem:[#allocation10 + $0x3e0] sm:$0xff]
          %v773 = vld [vmem:[#allocation10 + $0x3e8] sm:$0xff]
          %v774 = vld [vmem:[#allocation10 + $0x3f0] sm:$0xff]
          %v775 = vld [vmem:[#allocation10 + $0x3f8] sm:$0xff]
          %v777 = vrot.slane %v647, 1
          %v778 = vrot.slane %v647, 2
          %v779 = vrot.slane %v647, 3
          %v780 = vrot.slane %v647, 4
          %v781 = vrot.slane %v647, 5
          %v782 = vrot.slane %v647, 6
          %v783 = vrot.slane %v647, 7
          %v784 = vperm.slane %v647, 0
          %v785 = vperm.slane %v777, 0
          %v786 = vperm.slane %v778, 0
          %v787 = vperm.slane %v779, 0
          %v788 = vperm.slane %v780, 0
          %v789 = vperm.slane %v781, 0
          %v790 = vperm.slane %v782, 0
          %v791 = vperm.slane %v783, 0
          %v800 = vmul.f32 %v784, %v648
          %v801 = vmul.f32 %v784, %v649
          %v802 = vmul.f32 %v784, %v650
          %v803 = vmul.f32 %v784, %v651
          %v804 = vmul.f32 %v784, %v652
          %v805 = vmul.f32 %v784, %v653
          %v806 = vmul.f32 %v784, %v654
          %v807 = vmul.f32 %v784, %v655
          %v808 = vmul.f32 %v784, %v656
          %v809 = vmul.f32 %v784, %v657
          %v810 = vmul.f32 %v784, %v658
          %v811 = vmul.f32 %v784, %v659
          %v812 = vmul.f32 %v784, %v660
          %v813 = vmul.f32 %v784, %v661
          %v814 = vmul.f32 %v784, %v662
          %v815 = vmul.f32 %v784, %v663
          %v816 = vmul.f32 %v785, %v664
          %v817 = vmul.f32 %v785, %v665
          %v818 = vmul.f32 %v785, %v666
          %v819 = vmul.f32 %v785, %v667
          %v820 = vmul.f32 %v785, %v668
          %v821 = vmul.f32 %v785, %v669
          %v822 = vmul.f32 %v785, %v670
          %v823 = vmul.f32 %v785, %v671
          %v824 = vmul.f32 %v785, %v672
          %v825 = vmul.f32 %v785, %v673
          %v826 = vmul.f32 %v785, %v674
          %v827 = vmul.f32 %v785, %v675
          %v828 = vmul.f32 %v785, %v676
          %v829 = vmul.f32 %v785, %v677
          %v830 = vmul.f32 %v785, %v678
          %v831 = vmul.f32 %v785, %v679
          %v832 = vmul.f32 %v786, %v680
          %v833 = vmul.f32 %v786, %v681
          %v834 = vmul.f32 %v786, %v682
          %v835 = vmul.f32 %v786, %v683
          %v836 = vmul.f32 %v786, %v684
          %v837 = vmul.f32 %v786, %v685
          %v838 = vmul.f32 %v786, %v686
          %v839 = vmul.f32 %v786, %v687
          %v840 = vmul.f32 %v786, %v688
          %v841 = vmul.f32 %v786, %v689
          %v842 = vmul.f32 %v786, %v690
          %v843 = vmul.f32 %v786, %v691
          %v844 = vmul.f32 %v786, %v692
          %v845 = vmul.f32 %v786, %v693
          %v846 = vmul.f32 %v786, %v694
          %v847 = vmul.f32 %v786, %v695
          %v848 = vmul.f32 %v787, %v696
          %v849 = vmul.f32 %v787, %v697
          %v850 = vmul.f32 %v787, %v698
          %v851 = vmul.f32 %v787, %v699
          %v852 = vmul.f32 %v787, %v700
          %v853 = vmul.f32 %v787, %v701
          %v854 = vmul.f32 %v787, %v702
          %v855 = vmul.f32 %v787, %v703
          %v856 = vmul.f32 %v787, %v704
          %v857 = vmul.f32 %v787, %v705
          %v858 = vmul.f32 %v787, %v706
          %v859 = vmul.f32 %v787, %v707
          %v860 = vmul.f32 %v787, %v708
          %v861 = vmul.f32 %v787, %v709
          %v862 = vmul.f32 %v787, %v710
          %v863 = vmul.f32 %v787, %v711
          %v864 = vmul.f32 %v788, %v712
          %v865 = vmul.f32 %v788, %v713
          %v866 = vmul.f32 %v788, %v714
          %v867 = vmul.f32 %v788, %v715
          %v868 = vmul.f32 %v788, %v716
          %v869 = vmul.f32 %v788, %v717
          %v870 = vmul.f32 %v788, %v718
          %v871 = vmul.f32 %v788, %v719
          %v872 = vmul.f32 %v788, %v720
          %v873 = vmul.f32 %v788, %v721
          %v874 = vmul.f32 %v788, %v722
          %v875 = vmul.f32 %v788, %v723
          %v876 = vmul.f32 %v788, %v724
          %v877 = vmul.f32 %v788, %v725
          %v878 = vmul.f32 %v788, %v726
          %v879 = vmul.f32 %v788, %v727
          %v880 = vmul.f32 %v789, %v728
          %v881 = vmul.f32 %v789, %v729
          %v882 = vmul.f32 %v789, %v730
          %v883 = vmul.f32 %v789, %v731
          %v884 = vmul.f32 %v789, %v732
          %v885 = vmul.f32 %v789, %v733
          %v886 = vmul.f32 %v789, %v734
          %v887 = vmul.f32 %v789, %v735
          %v888 = vmul.f32 %v789, %v736
          %v889 = vmul.f32 %v789, %v737
          %v890 = vmul.f32 %v789, %v738
          %v891 = vmul.f32 %v789, %v739
          %v892 = vmul.f32 %v789, %v740
          %v893 = vmul.f32 %v789, %v741
          %v894 = vmul.f32 %v789, %v742
          %v895 = vmul.f32 %v789, %v743
          %v896 = vmul.f32 %v790, %v744
          %v897 = vmul.f32 %v790, %v745
          %v898 = vmul.f32 %v790, %v746
          %v899 = vmul.f32 %v790, %v747
          %v900 = vmul.f32 %v790, %v748
          %v901 = vmul.f32 %v790, %v749
          %v902 = vmul.f32 %v790, %v750
          %v903 = vmul.f32 %v790, %v751
          %v904 = vmul.f32 %v790, %v752
          %v905 = vmul.f32 %v790, %v753
          %v906 = vmul.f32 %v790, %v754
          %v907 = vmul.f32 %v790, %v755
          %v908 = vmul.f32 %v790, %v756
          %v909 = vmul.f32 %v790, %v757
          %v910 = vmul.f32 %v790, %v758
          %v911 = vmul.f32 %v790, %v759
          %v912 = vmul.f32 %v791, %v760
          %v913 = vmul.f32 %v791, %v761
          %v914 = vmul.f32 %v791, %v762
          %v915 = vmul.f32 %v791, %v763
          %v916 = vmul.f32 %v791, %v764
          %v917 = vmul.f32 %v791, %v765
          %v918 = vmul.f32 %v791, %v766
          %v919 = vmul.f32 %v791, %v767
          %v920 = vmul.f32 %v791, %v768
          %v921 = vmul.f32 %v791, %v769
          %v922 = vmul.f32 %v791, %v770
          %v923 = vmul.f32 %v791, %v771
          %v924 = vmul.f32 %v791, %v772
          %v925 = vmul.f32 %v791, %v773
          %v926 = vmul.f32 %v791, %v774
          %v927 = vmul.f32 %v791, %v775
          %928 = vadd.xlane.f32.xlu0 %v800
          %v929 = vpop.xlane.xlu0 %928
          %930 = vadd.xlane.f32.xlu0 %v801
          %v931 = vpop.xlane.xlu0 %930
          %932 = vadd.xlane.f32.xlu0 %v802
          %v933 = vpop.xlane.xlu0 %932
          %934 = vadd.xlane.f32.xlu0 %v803
          %v935 = vpop.xlane.xlu0 %934
          %936 = vadd.xlane.f32.xlu0 %v804
          %v937 = vpop.xlane.xlu0 %936
          %938 = vadd.xlane.f32.xlu0 %v805
          %v939 = vpop.xlane.xlu0 %938
          %940 = vadd.xlane.f32.xlu0 %v806
          %v941 = vpop.xlane.xlu0 %940
          %942 = vadd.xlane.f32.xlu0 %v807
          %v943 = vpop.xlane.xlu0 %942
          %944 = vadd.xlane.f32.xlu0 %v808
          %v945 = vpop.xlane.xlu0 %944
          %946 = vadd.xlane.f32.xlu0 %v809
          %v947 = vpop.xlane.xlu0 %946
          %948 = vadd.xlane.f32.xlu0 %v810
          %v949 = vpop.xlane.xlu0 %948
          %950 = vadd.xlane.f32.xlu0 %v811
          %v951 = vpop.xlane.xlu0 %950
          %952 = vadd.xlane.f32.xlu0 %v812
          %v953 = vpop.xlane.xlu0 %952
          %954 = vadd.xlane.f32.xlu0 %v813
          %v955 = vpop.xlane.xlu0 %954
          %956 = vadd.xlane.f32.xlu0 %v814
          %v957 = vpop.xlane.xlu0 %956
          %958 = vadd.xlane.f32.xlu0 %v815
          %v959 = vpop.xlane.xlu0 %958
          %960 = vadd.xlane.f32.xlu0 %v816
          %v961 = vpop.xlane.xlu0 %960
          %962 = vadd.xlane.f32.xlu0 %v817
          %v963 = vpop.xlane.xlu0 %962
          %964 = vadd.xlane.f32.xlu0 %v818
          %v965 = vpop.xlane.xlu0 %964
          %966 = vadd.xlane.f32.xlu0 %v819
          %v967 = vpop.xlane.xlu0 %966
          %968 = vadd.xlane.f32.xlu0 %v820
          %v969 = vpop.xlane.xlu0 %968
          %970 = vadd.xlane.f32.xlu0 %v821
          %v971 = vpop.xlane.xlu0 %970
          %972 = vadd.xlane.f32.xlu0 %v822
          %v973 = vpop.xlane.xlu0 %972
          %974 = vadd.xlane.f32.xlu0 %v823
          %v975 = vpop.xlane.xlu0 %974
          %976 = vadd.xlane.f32.xlu0 %v824
          %v977 = vpop.xlane.xlu0 %976
          %978 = vadd.xlane.f32.xlu0 %v825
          %v979 = vpop.xlane.xlu0 %978
          %980 = vadd.xlane.f32.xlu0 %v826
          %v981 = vpop.xlane.xlu0 %980
          %982 = vadd.xlane.f32.xlu0 %v827
          %v983 = vpop.xlane.xlu0 %982
          %984 = vadd.xlane.f32.xlu0 %v828
          %v985 = vpop.xlane.xlu0 %984
          %986 = vadd.xlane.f32.xlu0 %v829
          %v987 = vpop.xlane.xlu0 %986
          %988 = vadd.xlane.f32.xlu0 %v830
          %v989 = vpop.xlane.xlu0 %988
          %990 = vadd.xlane.f32.xlu0 %v831
          %v991 = vpop.xlane.xlu0 %990
          %992 = vadd.xlane.f32.xlu0 %v832
          %v993 = vpop.xlane.xlu0 %992
          %994 = vadd.xlane.f32.xlu0 %v833
          %v995 = vpop.xlane.xlu0 %994
          %996 = vadd.xlane.f32.xlu0 %v834
          %v997 = vpop.xlane.xlu0 %996
          %998 = vadd.xlane.f32.xlu0 %v835
          %v999 = vpop.xlane.xlu0 %998
          %1000 = vadd.xlane.f32.xlu0 %v836
          %v1001 = vpop.xlane.xlu0 %1000
          %1002 = vadd.xlane.f32.xlu0 %v837
          %v1003 = vpop.xlane.xlu0 %1002
          %1004 = vadd.xlane.f32.xlu0 %v838
          %v1005 = vpop.xlane.xlu0 %1004
          %1006 = vadd.xlane.f32.xlu0 %v839
          %v1007 = vpop.xlane.xlu0 %1006
          %1008 = vadd.xlane.f32.xlu0 %v840
          %v1009 = vpop.xlane.xlu0 %1008
          %1010 = vadd.xlane.f32.xlu0 %v841
          %v1011 = vpop.xlane.xlu0 %1010
          %1012 = vadd.xlane.f32.xlu0 %v842
          %v1013 = vpop.xlane.xlu0 %1012
          %1014 = vadd.xlane.f32.xlu0 %v843
          %v1015 = vpop.xlane.xlu0 %1014
          %1016 = vadd.xlane.f32.xlu0 %v844
          %v1017 = vpop.xlane.xlu0 %1016
          %1018 = vadd.xlane.f32.xlu0 %v845
          %v1019 = vpop.xlane.xlu0 %1018
          %1020 = vadd.xlane.f32.xlu0 %v846
          %v1021 = vpop.xlane.xlu0 %1020
          %1022 = vadd.xlane.f32.xlu0 %v847
          %v1023 = vpop.xlane.xlu0 %1022
          %1024 = vadd.xlane.f32.xlu0 %v848
          %v1025 = vpop.xlane.xlu0 %1024
          %1026 = vadd.xlane.f32.xlu0 %v849
          %v1027 = vpop.xlane.xlu0 %1026
          %1028 = vadd.xlane.f32.xlu0 %v850
          %v1029 = vpop.xlane.xlu0 %1028
          %1030 = vadd.xlane.f32.xlu0 %v851
          %v1031 = vpop.xlane.xlu0 %1030
          %1032 = vadd.xlane.f32.xlu0 %v852
          %v1033 = vpop.xlane.xlu0 %1032
          %1034 = vadd.xlane.f32.xlu0 %v853
          %v1035 = vpop.xlane.xlu0 %1034
          %1036 = vadd.xlane.f32.xlu0 %v854
          %v1037 = vpop.xlane.xlu0 %1036
          %1038 = vadd.xlane.f32.xlu0 %v855
          %v1039 = vpop.xlane.xlu0 %1038
          %1040 = vadd.xlane.f32.xlu0 %v856
          %v1041 = vpop.xlane.xlu0 %1040
          %1042 = vadd.xlane.f32.xlu0 %v857
          %v1043 = vpop.xlane.xlu0 %1042
          %1044 = vadd.xlane.f32.xlu0 %v858
          %v1045 = vpop.xlane.xlu0 %1044
          %1046 = vadd.xlane.f32.xlu0 %v859
          %v1047 = vpop.xlane.xlu0 %1046
          %1048 = vadd.xlane.f32.xlu0 %v860
          %v1049 = vpop.xlane.xlu0 %1048
          %1050 = vadd.xlane.f32.xlu0 %v861
          %v1051 = vpop.xlane.xlu0 %1050
          %1052 = vadd.xlane.f32.xlu0 %v862
          %v1053 = vpop.xlane.xlu0 %1052
          %1054 = vadd.xlane.f32.xlu0 %v863
          %v1055 = vpop.xlane.xlu0 %1054
          %1056 = vadd.xlane.f32.xlu0 %v864
          %v1057 = vpop.xlane.xlu0 %1056
          %1058 = vadd.xlane.f32.xlu0 %v865
          %v1059 = vpop.xlane.xlu0 %1058
          %1060 = vadd.xlane.f32.xlu0 %v866
          %v1061 = vpop.xlane.xlu0 %1060
          %1062 = vadd.xlane.f32.xlu0 %v867
          %v1063 = vpop.xlane.xlu0 %1062
          %1064 = vadd.xlane.f32.xlu0 %v868
          %v1065 = vpop.xlane.xlu0 %1064
          %1066 = vadd.xlane.f32.xlu0 %v869
          %v1067 = vpop.xlane.xlu0 %1066
          %1068 = vadd.xlane.f32.xlu0 %v870
          %v1069 = vpop.xlane.xlu0 %1068
          %1070 = vadd.xlane.f32.xlu0 %v871
          %v1071 = vpop.xlane.xlu0 %1070
          %1072 = vadd.xlane.f32.xlu0 %v872
          %v1073 = vpop.xlane.xlu0 %1072
          %1074 = vadd.xlane.f32.xlu0 %v873
          %v1075 = vpop.xlane.xlu0 %1074
          %1076 = vadd.xlane.f32.xlu0 %v874
          %v1077 = vpop.xlane.xlu0 %1076
          %1078 = vadd.xlane.f32.xlu0 %v875
          %v1079 = vpop.xlane.xlu0 %1078
          %1080 = vadd.xlane.f32.xlu0 %v876
          %v1081 = vpop.xlane.xlu0 %1080
          %1082 = vadd.xlane.f32.xlu0 %v877
          %v1083 = vpop.xlane.xlu0 %1082
          %1084 = vadd.xlane.f32.xlu0 %v878
          %v1085 = vpop.xlane.xlu0 %1084
          %1086 = vadd.xlane.f32.xlu0 %v879
          %v1087 = vpop.xlane.xlu0 %1086
          %1088 = vadd.xlane.f32.xlu0 %v880
          %v1089 = vpop.xlane.xlu0 %1088
          %1090 = vadd.xlane.f32.xlu0 %v881
          %v1091 = vpop.xlane.xlu0 %1090
          %1092 = vadd.xlane.f32.xlu0 %v882
          %v1093 = vpop.xlane.xlu0 %1092
          %1094 = vadd.xlane.f32.xlu0 %v883
          %v1095 = vpop.xlane.xlu0 %1094
          %1096 = vadd.xlane.f32.xlu0 %v884
          %v1097 = vpop.xlane.xlu0 %1096
          %1098 = vadd.xlane.f32.xlu0 %v885
          %v1099 = vpop.xlane.xlu0 %1098
          %1100 = vadd.xlane.f32.xlu0 %v886
          %v1101 = vpop.xlane.xlu0 %1100
          %1102 = vadd.xlane.f32.xlu0 %v887
          %v1103 = vpop.xlane.xlu0 %1102
          %1104 = vadd.xlane.f32.xlu0 %v888
          %v1105 = vpop.xlane.xlu0 %1104
          %1106 = vadd.xlane.f32.xlu0 %v889
          %v1107 = vpop.xlane.xlu0 %1106
          %1108 = vadd.xlane.f32.xlu0 %v890
          %v1109 = vpop.xlane.xlu0 %1108
          %1110 = vadd.xlane.f32.xlu0 %v891
          %v1111 = vpop.xlane.xlu0 %1110
          %1112 = vadd.xlane.f32.xlu0 %v892
          %v1113 = vpop.xlane.xlu0 %1112
          %1114 = vadd.xlane.f32.xlu0 %v893
          %v1115 = vpop.xlane.xlu0 %1114
          %1116 = vadd.xlane.f32.xlu0 %v894
          %v1117 = vpop.xlane.xlu0 %1116
          %1118 = vadd.xlane.f32.xlu0 %v895
          %v1119 = vpop.xlane.xlu0 %1118
          %1120 = vadd.xlane.f32.xlu0 %v896
          %v1121 = vpop.xlane.xlu0 %1120
          %1122 = vadd.xlane.f32.xlu0 %v897
          %v1123 = vpop.xlane.xlu0 %1122
          %1124 = vadd.xlane.f32.xlu0 %v898
          %v1125 = vpop.xlane.xlu0 %1124
          %1126 = vadd.xlane.f32.xlu0 %v899
          %v1127 = vpop.xlane.xlu0 %1126
          %1128 = vadd.xlane.f32.xlu0 %v900
          %v1129 = vpop.xlane.xlu0 %1128
          %1130 = vadd.xlane.f32.xlu0 %v901
          %v1131 = vpop.xlane.xlu0 %1130
          %1132 = vadd.xlane.f32.xlu0 %v902
          %v1133 = vpop.xlane.xlu0 %1132
          %1134 = vadd.xlane.f32.xlu0 %v903
          %v1135 = vpop.xlane.xlu0 %1134
          %1136 = vadd.xlane.f32.xlu0 %v904
          %v1137 = vpop.xlane.xlu0 %1136
          %1138 = vadd.xlane.f32.xlu0 %v905
          %v1139 = vpop.xlane.xlu0 %1138
          %1140 = vadd.xlane.f32.xlu0 %v906
          %v1141 = vpop.xlane.xlu0 %1140
          %1142 = vadd.xlane.f32.xlu0 %v907
          %v1143 = vpop.xlane.xlu0 %1142
          %1144 = vadd.xlane.f32.xlu0 %v908
          %v1145 = vpop.xlane.xlu0 %1144
          %1146 = vadd.xlane.f32.xlu0 %v909
          %v1147 = vpop.xlane.xlu0 %1146
          %1148 = vadd.xlane.f32.xlu0 %v910
          %v1149 = vpop.xlane.xlu0 %1148
          %1150 = vadd.xlane.f32.xlu0 %v911
          %v1151 = vpop.xlane.xlu0 %1150
          %1152 = vadd.xlane.f32.xlu0 %v912
          %v1153 = vpop.xlane.xlu0 %1152
          %1154 = vadd.xlane.f32.xlu0 %v913
          %v1155 = vpop.xlane.xlu0 %1154
          %1156 = vadd.xlane.f32.xlu0 %v914
          %v1157 = vpop.xlane.xlu0 %1156
          %1158 = vadd.xlane.f32.xlu0 %v915
          %v1159 = vpop.xlane.xlu0 %1158
          %1160 = vadd.xlane.f32.xlu0 %v916
          %v1161 = vpop.xlane.xlu0 %1160
          %1162 = vadd.xlane.f32.xlu0 %v917
          %v1163 = vpop.xlane.xlu0 %1162
          %1164 = vadd.xlane.f32.xlu0 %v918
          %v1165 = vpop.xlane.xlu0 %1164
          %1166 = vadd.xlane.f32.xlu0 %v919
          %v1167 = vpop.xlane.xlu0 %1166
          %1168 = vadd.xlane.f32.xlu0 %v920
          %v1169 = vpop.xlane.xlu0 %1168
          %1170 = vadd.xlane.f32.xlu0 %v921
          %v1171 = vpop.xlane.xlu0 %1170
          %1172 = vadd.xlane.f32.xlu0 %v922
          %v1173 = vpop.xlane.xlu0 %1172
          %1174 = vadd.xlane.f32.xlu0 %v923
          %v1175 = vpop.xlane.xlu0 %1174
          %1176 = vadd.xlane.f32.xlu0 %v924
          %v1177 = vpop.xlane.xlu0 %1176
          %1178 = vadd.xlane.f32.xlu0 %v925
          %v1179 = vpop.xlane.xlu0 %1178
          %1180 = vadd.xlane.f32.xlu0 %v926
          %v1181 = vpop.xlane.xlu0 %1180
          %1182 = vadd.xlane.f32.xlu0 %v927
          %v1183 = vpop.xlane.xlu0 %1182
          %v1312 = vlaneseq
          %v1313 = vand.u32 %v1312, 127
          %v1314 = vperm.slane %v929, %v1313
          %v1315 = vadd.s32 %v1313, 4294967288
          %v1316 = vperm.slane %v931, %v1315
          %vm1317 = vcmask 130112
          %v1318 = vsel %vm1317, %v1316, %v1314
          %v1319 = vadd.s32 %v1313, 4294967280
          %v1320 = vperm.slane %v933, %v1319
          %vm1321 = vcmask 195712
          %v1322 = vsel %vm1321, %v1320, %v1318
          %v1323 = vadd.s32 %v1313, 4294967272
          %v1324 = vperm.slane %v935, %v1323
          %vm1325 = vcmask 261312
          %v1326 = vsel %vm1325, %v1324, %v1322
          %v1327 = vadd.s32 %v1313, 4294967264
          %v1328 = vperm.slane %v937, %v1327
          %vm1329 = vcmask 326912
          %v1330 = vsel %vm1329, %v1328, %v1326
          %v1331 = vadd.s32 %v1313, 4294967256
          %v1332 = vperm.slane %v939, %v1331
          %vm1333 = vcmask 392512
          %v1334 = vsel %vm1333, %v1332, %v1330
          %v1335 = vadd.s32 %v1313, 4294967248
          %v1336 = vperm.slane %v941, %v1335
          %vm1337 = vcmask 458112
          %v1338 = vsel %vm1337, %v1336, %v1334
          %v1339 = vadd.s32 %v1313, 4294967240
          %v1340 = vperm.slane %v943, %v1339
          %vm1341 = vcmask 523712
          %v1342 = vsel %vm1341, %v1340, %v1338
          %v1343 = vadd.s32 %v1313, 4294967232
          %v1344 = vperm.slane %v945, %v1343
          %vm1345 = vcmask 589312
          %v1346 = vsel %vm1345, %v1344, %v1342
          %v1347 = vadd.s32 %v1313, 4294967224
          %v1348 = vperm.slane %v947, %v1347
          %vm1349 = vcmask 654912
          %v1350 = vsel %vm1349, %v1348, %v1346
          %v1351 = vadd.s32 %v1313, 4294967216
          %v1352 = vperm.slane %v949, %v1351
          %vm1353 = vcmask 720512
          %v1354 = vsel %vm1353, %v1352, %v1350
          %v1355 = vadd.s32 %v1313, 4294967208
          %v1356 = vperm.slane %v951, %v1355
          %vm1357 = vcmask 786112
          %v1358 = vsel %vm1357, %v1356, %v1354
          %v1359 = vadd.s32 %v1313, 4294967200
          %v1360 = vperm.slane %v953, %v1359
          %vm1361 = vcmask 851712
          %v1362 = vsel %vm1361, %v1360, %v1358
          %v1363 = vadd.s32 %v1313, 4294967192
          %v1364 = vperm.slane %v955, %v1363
          %vm1365 = vcmask 917312
          %v1366 = vsel %vm1365, %v1364, %v1362
          %v1367 = vadd.s32 %v1313, 4294967184
          %v1368 = vperm.slane %v957, %v1367
          %vm1369 = vcmask 982912
          %v1370 = vsel %vm1369, %v1368, %v1366
          %v1371 = vadd.s32 %v1313, 4294967176
          %v1372 = vperm.slane %v959, %v1371
          %vm1373 = vcmask 1048512
          %v1374 = vsel %vm1373, %v1372, %v1370
          %v1375 = vperm.slane %v961, %v1313
          %v1376 = vperm.slane %v963, %v1315
          %v1377 = vsel %vm1317, %v1376, %v1375
          %v1378 = vperm.slane %v965, %v1319
          %v1379 = vsel %vm1321, %v1378, %v1377
          %v1380 = vperm.slane %v967, %v1323
          %v1381 = vsel %vm1325, %v1380, %v1379
          %v1382 = vperm.slane %v969, %v1327
          %v1383 = vsel %vm1329, %v1382, %v1381
          %v1384 = vperm.slane %v971, %v1331
          %v1385 = vsel %vm1333, %v1384, %v1383
          %v1386 = vperm.slane %v973, %v1335
          %v1387 = vsel %vm1337, %v1386, %v1385
          %v1388 = vperm.slane %v975, %v1339
          %v1389 = vsel %vm1341, %v1388, %v1387
          %v1390 = vperm.slane %v977, %v1343
          %v1391 = vsel %vm1345, %v1390, %v1389
          %v1392 = vperm.slane %v979, %v1347
          %v1393 = vsel %vm1349, %v1392, %v1391
          %v1394 = vperm.slane %v981, %v1351
          %v1395 = vsel %vm1353, %v1394, %v1393
          %v1396 = vperm.slane %v983, %v1355
          %v1397 = vsel %vm1357, %v1396, %v1395
          %v1398 = vperm.slane %v985, %v1359
          %v1399 = vsel %vm1361, %v1398, %v1397
          %v1400 = vperm.slane %v987, %v1363
          %v1401 = vsel %vm1365, %v1400, %v1399
          %v1402 = vperm.slane %v989, %v1367
          %v1403 = vsel %vm1369, %v1402, %v1401
          %v1404 = vperm.slane %v991, %v1371
          %v1405 = vsel %vm1373, %v1404, %v1403
          %v1406 = vperm.slane %v993, %v1313
          %v1407 = vperm.slane %v995, %v1315
          %v1408 = vsel %vm1317, %v1407, %v1406
          %v1409 = vperm.slane %v997, %v1319
          %v1410 = vsel %vm1321, %v1409, %v1408
          %v1411 = vperm.slane %v999, %v1323
          %v1412 = vsel %vm1325, %v1411, %v1410
          %v1413 = vperm.slane %v1001, %v1327
          %v1414 = vsel %vm1329, %v1413, %v1412
          %v1415 = vperm.slane %v1003, %v1331
          %v1416 = vsel %vm1333, %v1415, %v1414
          %v1417 = vperm.slane %v1005, %v1335
          %v1418 = vsel %vm1337, %v1417, %v1416
          %v1419 = vperm.slane %v1007, %v1339
          %v1420 = vsel %vm1341, %v1419, %v1418
          %v1421 = vperm.slane %v1009, %v1343
          %v1422 = vsel %vm1345, %v1421, %v1420
          %v1423 = vperm.slane %v1011, %v1347
          %v1424 = vsel %vm1349, %v1423, %v1422
          %v1425 = vperm.slane %v1013, %v1351
          %v1426 = vsel %vm1353, %v1425, %v1424
          %v1427 = vperm.slane %v1015, %v1355
          %v1428 = vsel %vm1357, %v1427, %v1426
          %v1429 = vperm.slane %v1017, %v1359
          %v1430 = vsel %vm1361, %v1429, %v1428
          %v1431 = vperm.slane %v1019, %v1363
          %v1432 = vsel %vm1365, %v1431, %v1430
          %v1433 = vperm.slane %v1021, %v1367
          %v1434 = vsel %vm1369, %v1433, %v1432
          %v1435 = vperm.slane %v1023, %v1371
          %v1436 = vsel %vm1373, %v1435, %v1434
          %v1437 = vperm.slane %v1025, %v1313
          %v1438 = vperm.slane %v1027, %v1315
          %v1439 = vsel %vm1317, %v1438, %v1437
          %v1440 = vperm.slane %v1029, %v1319
          %v1441 = vsel %vm1321, %v1440, %v1439
          %v1442 = vperm.slane %v1031, %v1323
          %v1443 = vsel %vm1325, %v1442, %v1441
          %v1444 = vperm.slane %v1033, %v1327
          %v1445 = vsel %vm1329, %v1444, %v1443
          %v1446 = vperm.slane %v1035, %v1331
          %v1447 = vsel %vm1333, %v1446, %v1445
          %v1448 = vperm.slane %v1037, %v1335
          %v1449 = vsel %vm1337, %v1448, %v1447
          %v1450 = vperm.slane %v1039, %v1339
          %v1451 = vsel %vm1341, %v1450, %v1449
          %v1452 = vperm.slane %v1041, %v1343
          %v1453 = vsel %vm1345, %v1452, %v1451
          %v1454 = vperm.slane %v1043, %v1347
          %v1455 = vsel %vm1349, %v1454, %v1453
          %v1456 = vperm.slane %v1045, %v1351
          %v1457 = vsel %vm1353, %v1456, %v1455
          %v1458 = vperm.slane %v1047, %v1355
          %v1459 = vsel %vm1357, %v1458, %v1457
          %v1460 = vperm.slane %v1049, %v1359
          %v1461 = vsel %vm1361, %v1460, %v1459
          %v1462 = vperm.slane %v1051, %v1363
          %v1463 = vsel %vm1365, %v1462, %v1461
          %v1464 = vperm.slane %v1053, %v1367
          %v1465 = vsel %vm1369, %v1464, %v1463
          %v1466 = vperm.slane %v1055, %v1371
          %v1467 = vsel %vm1373, %v1466, %v1465
          %v1468 = vperm.slane %v1057, %v1313
          %v1469 = vperm.slane %v1059, %v1315
          %v1470 = vsel %vm1317, %v1469, %v1468
          %v1471 = vperm.slane %v1061, %v1319
          %v1472 = vsel %vm1321, %v1471, %v1470
          %v1473 = vperm.slane %v1063, %v1323
          %v1474 = vsel %vm1325, %v1473, %v1472
          %v1475 = vperm.slane %v1065, %v1327
          %v1476 = vsel %vm1329, %v1475, %v1474
          %v1477 = vperm.slane %v1067, %v1331
          %v1478 = vsel %vm1333, %v1477, %v1476
          %v1479 = vperm.slane %v1069, %v1335
          %v1480 = vsel %vm1337, %v1479, %v1478
          %v1481 = vperm.slane %v1071, %v1339
          %v1482 = vsel %vm1341, %v1481, %v1480
          %v1483 = vperm.slane %v1073, %v1343
          %v1484 = vsel %vm1345, %v1483, %v1482
          %v1485 = vperm.slane %v1075, %v1347
          %v1486 = vsel %vm1349, %v1485, %v1484
          %v1487 = vperm.slane %v1077, %v1351
          %v1488 = vsel %vm1353, %v1487, %v1486
          %v1489 = vperm.slane %v1079, %v1355
          %v1490 = vsel %vm1357, %v1489, %v1488
          %v1491 = vperm.slane %v1081, %v1359
          %v1492 = vsel %vm1361, %v1491, %v1490
          %v1493 = vperm.slane %v1083, %v1363
          %v1494 = vsel %vm1365, %v1493, %v1492
          %v1495 = vperm.slane %v1085, %v1367
          %v1496 = vsel %vm1369, %v1495, %v1494
          %v1497 = vperm.slane %v1087, %v1371
          %v1498 = vsel %vm1373, %v1497, %v1496
          %v1499 = vperm.slane %v1089, %v1313
          %v1500 = vperm.slane %v1091, %v1315
          %v1501 = vsel %vm1317, %v1500, %v1499
          %v1502 = vperm.slane %v1093, %v1319
          %v1503 = vsel %vm1321, %v1502, %v1501
          %v1504 = vperm.slane %v1095, %v1323
          %v1505 = vsel %vm1325, %v1504, %v1503
          %v1506 = vperm.slane %v1097, %v1327
          %v1507 = vsel %vm1329, %v1506, %v1505
          %v1508 = vperm.slane %v1099, %v1331
          %v1509 = vsel %vm1333, %v1508, %v1507
          %v1510 = vperm.slane %v1101, %v1335
          %v1511 = vsel %vm1337, %v1510, %v1509
          %v1512 = vperm.slane %v1103, %v1339
          %v1513 = vsel %vm1341, %v1512, %v1511
          %v1514 = vperm.slane %v1105, %v1343
          %v1515 = vsel %vm1345, %v1514, %v1513
          %v1516 = vperm.slane %v1107, %v1347
          %v1517 = vsel %vm1349, %v1516, %v1515
          %v1518 = vperm.slane %v1109, %v1351
          %v1519 = vsel %vm1353, %v1518, %v1517
          %v1520 = vperm.slane %v1111, %v1355
          %v1521 = vsel %vm1357, %v1520, %v1519
          %v1522 = vperm.slane %v1113, %v1359
          %v1523 = vsel %vm1361, %v1522, %v1521
          %v1524 = vperm.slane %v1115, %v1363
          %v1525 = vsel %vm1365, %v1524, %v1523
          %v1526 = vperm.slane %v1117, %v1367
          %v1527 = vsel %vm1369, %v1526, %v1525
          %v1528 = vperm.slane %v1119, %v1371
          %v1529 = vsel %vm1373, %v1528, %v1527
          %v1530 = vperm.slane %v1121, %v1313
          %v1531 = vperm.slane %v1123, %v1315
          %v1532 = vsel %vm1317, %v1531, %v1530
          %v1533 = vperm.slane %v1125, %v1319
          %v1534 = vsel %vm1321, %v1533, %v1532
          %v1535 = vperm.slane %v1127, %v1323
          %v1536 = vsel %vm1325, %v1535, %v1534
          %v1537 = vperm.slane %v1129, %v1327
          %v1538 = vsel %vm1329, %v1537, %v1536
          %v1539 = vperm.slane %v1131, %v1331
          %v1540 = vsel %vm1333, %v1539, %v1538
          %v1541 = vperm.slane %v1133, %v1335
          %v1542 = vsel %vm1337, %v1541, %v1540
          %v1543 = vperm.slane %v1135, %v1339
          %v1544 = vsel %vm1341, %v1543, %v1542
          %v1545 = vperm.slane %v1137, %v1343
          %v1546 = vsel %vm1345, %v1545, %v1544
          %v1547 = vperm.slane %v1139, %v1347
          %v1548 = vsel %vm1349, %v1547, %v1546
          %v1549 = vperm.slane %v1141, %v1351
          %v1550 = vsel %vm1353, %v1549, %v1548
          %v1551 = vperm.slane %v1143, %v1355
          %v1552 = vsel %vm1357, %v1551, %v1550
          %v1553 = vperm.slane %v1145, %v1359
          %v1554 = vsel %vm1361, %v1553, %v1552
          %v1555 = vperm.slane %v1147, %v1363
          %v1556 = vsel %vm1365, %v1555, %v1554
          %v1557 = vperm.slane %v1149, %v1367
          %v1558 = vsel %vm1369, %v1557, %v1556
          %v1559 = vperm.slane %v1151, %v1371
          %v1560 = vsel %vm1373, %v1559, %v1558
          %v1561 = vperm.slane %v1153, %v1313
          %v1562 = vperm.slane %v1155, %v1315
          %v1563 = vsel %vm1317, %v1562, %v1561
          %v1564 = vperm.slane %v1157, %v1319
          %v1565 = vsel %vm1321, %v1564, %v1563
          %v1566 = vperm.slane %v1159, %v1323
          %v1567 = vsel %vm1325, %v1566, %v1565
          %v1568 = vperm.slane %v1161, %v1327
          %v1569 = vsel %vm1329, %v1568, %v1567
          %v1570 = vperm.slane %v1163, %v1331
          %v1571 = vsel %vm1333, %v1570, %v1569
          %v1572 = vperm.slane %v1165, %v1335
          %v1573 = vsel %vm1337, %v1572, %v1571
          %v1574 = vperm.slane %v1167, %v1339
          %v1575 = vsel %vm1341, %v1574, %v1573
          %v1576 = vperm.slane %v1169, %v1343
          %v1577 = vsel %vm1345, %v1576, %v1575
          %v1578 = vperm.slane %v1171, %v1347
          %v1579 = vsel %vm1349, %v1578, %v1577
          %v1580 = vperm.slane %v1173, %v1351
          %v1581 = vsel %vm1353, %v1580, %v1579
          %v1582 = vperm.slane %v1175, %v1355
          %v1583 = vsel %vm1357, %v1582, %v1581
          %v1584 = vperm.slane %v1177, %v1359
          %v1585 = vsel %vm1361, %v1584, %v1583
          %v1586 = vperm.slane %v1179, %v1363
          %v1587 = vsel %vm1365, %v1586, %v1585
          %v1588 = vperm.slane %v1181, %v1367
          %v1589 = vsel %vm1369, %v1588, %v1587
          %v1590 = vperm.slane %v1183, %v1371
          %v1591 = vsel %vm1373, %v1590, %v1589
          %vm1592 = vcmask 1041409
          %v1593 = vsel %vm1592, %v1405, %v1374
          %vm1594 = vcmask 1042434
          %v1595 = vsel %vm1594, %v1436, %v1593
          %vm1596 = vcmask 1043459
          %v1597 = vsel %vm1596, %v1467, %v1595
          %vm1598 = vcmask 1044484
          %v1599 = vsel %vm1598, %v1498, %v1597
          %vm1600 = vcmask 1045509
          %v1601 = vsel %vm1600, %v1529, %v1599
          %vm1602 = vcmask 1046534
          %v1603 = vsel %vm1602, %v1560, %v1601
          %vm1604 = vcmask 1047559
          %v1605 = vsel %vm1604, %v1591, %v1603
          %1607 = vmax.xlane.f32.xlu0 %v1605
          %v1608 = vpop.xlane.xlu0 %1607
          %v1610 = vperm.slane %v1608, 0
          %v1611 = vperm.slane %v1608, 1
          %v1612 = vperm.slane %v1608, 2
          %v1613 = vperm.slane %v1608, 3
          %v1614 = vperm.slane %v1608, 4
          %v1615 = vperm.slane %v1608, 5
          %v1616 = vperm.slane %v1608, 6
          %v1617 = vperm.slane %v1608, 7
          %v1626 = vsub.f32 %v929, %v1610
          %v1627 = vsub.f32 %v931, %v1610
          %v1628 = vsub.f32 %v933, %v1610
          %v1629 = vsub.f32 %v935, %v1610
          %v1630 = vsub.f32 %v937, %v1610
          %v1631 = vsub.f32 %v939, %v1610
          %v1632 = vsub.f32 %v941, %v1610
          %v1633 = vsub.f32 %v943, %v1610
          %v1634 = vsub.f32 %v945, %v1610
          %v1635 = vsub.f32 %v947, %v1610
          %v1636 = vsub.f32 %v949, %v1610
          %v1637 = vsub.f32 %v951, %v1610
          %v1638 = vsub.f32 %v953, %v1610
          %v1639 = vsub.f32 %v955, %v1610
          %v1640 = vsub.f32 %v957, %v1610
          %v1641 = vsub.f32 %v959, %v1610
          %v1642 = vsub.f32 %v961, %v1611
          %v1643 = vsub.f32 %v963, %v1611
          %v1644 = vsub.f32 %v965, %v1611
          %v1645 = vsub.f32 %v967, %v1611
          %v1646 = vsub.f32 %v969, %v1611
          %v1647 = vsub.f32 %v971, %v1611
          %v1648 = vsub.f32 %v973, %v1611
          %v1649 = vsub.f32 %v975, %v1611
          %v1650 = vsub.f32 %v977, %v1611
          %v1651 = vsub.f32 %v979, %v1611
          %v1652 = vsub.f32 %v981, %v1611
          %v1653 = vsub.f32 %v983, %v1611
          %v1654 = vsub.f32 %v985, %v1611
          %v1655 = vsub.f32 %v987, %v1611
          %v1656 = vsub.f32 %v989, %v1611
          %v1657 = vsub.f32 %v991, %v1611
          %v1658 = vsub.f32 %v993, %v1612
          %v1659 = vsub.f32 %v995, %v1612
          %v1660 = vsub.f32 %v997, %v1612
          %v1661 = vsub.f32 %v999, %v1612
          %v1662 = vsub.f32 %v1001, %v1612
          %v1663 = vsub.f32 %v1003, %v1612
          %v1664 = vsub.f32 %v1005, %v1612
          %v1665 = vsub.f32 %v1007, %v1612
          %v1666 = vsub.f32 %v1009, %v1612
          %v1667 = vsub.f32 %v1011, %v1612
          %v1668 = vsub.f32 %v1013, %v1612
          %v1669 = vsub.f32 %v1015, %v1612
          %v1670 = vsub.f32 %v1017, %v1612
          %v1671 = vsub.f32 %v1019, %v1612
          %v1672 = vsub.f32 %v1021, %v1612
          %v1673 = vsub.f32 %v1023, %v1612
          %v1674 = vsub.f32 %v1025, %v1613
          %v1675 = vsub.f32 %v1027, %v1613
          %v1676 = vsub.f32 %v1029, %v1613
          %v1677 = vsub.f32 %v1031, %v1613
          %v1678 = vsub.f32 %v1033, %v1613
          %v1679 = vsub.f32 %v1035, %v1613
          %v1680 = vsub.f32 %v1037, %v1613
          %v1681 = vsub.f32 %v1039, %v1613
          %v1682 = vsub.f32 %v1041, %v1613
          %v1683 = vsub.f32 %v1043, %v1613
          %v1684 = vsub.f32 %v1045, %v1613
          %v1685 = vsub.f32 %v1047, %v1613
          %v1686 = vsub.f32 %v1049, %v1613
          %v1687 = vsub.f32 %v1051, %v1613
          %v1688 = vsub.f32 %v1053, %v1613
          %v1689 = vsub.f32 %v1055, %v1613
          %v1690 = vsub.f32 %v1057, %v1614
          %v1691 = vsub.f32 %v1059, %v1614
          %v1692 = vsub.f32 %v1061, %v1614
          %v1693 = vsub.f32 %v1063, %v1614
          %v1694 = vsub.f32 %v1065, %v1614
          %v1695 = vsub.f32 %v1067, %v1614
          %v1696 = vsub.f32 %v1069, %v1614
          %v1697 = vsub.f32 %v1071, %v1614
          %v1698 = vsub.f32 %v1073, %v1614
          %v1699 = vsub.f32 %v1075, %v1614
          %v1700 = vsub.f32 %v1077, %v1614
          %v1701 = vsub.f32 %v1079, %v1614
          %v1702 = vsub.f32 %v1081, %v1614
          %v1703 = vsub.f32 %v1083, %v1614
          %v1704 = vsub.f32 %v1085, %v1614
          %v1705 = vsub.f32 %v1087, %v1614
          %v1706 = vsub.f32 %v1089, %v1615
          %v1707 = vsub.f32 %v1091, %v1615
          %v1708 = vsub.f32 %v1093, %v1615
          %v1709 = vsub.f32 %v1095, %v1615
          %v1710 = vsub.f32 %v1097, %v1615
          %v1711 = vsub.f32 %v1099, %v1615
          %v1712 = vsub.f32 %v1101, %v1615
          %v1713 = vsub.f32 %v1103, %v1615
          %v1714 = vsub.f32 %v1105, %v1615
          %v1715 = vsub.f32 %v1107, %v1615
          %v1716 = vsub.f32 %v1109, %v1615
          %v1717 = vsub.f32 %v1111, %v1615
          %v1718 = vsub.f32 %v1113, %v1615
          %v1719 = vsub.f32 %v1115, %v1615
          %v1720 = vsub.f32 %v1117, %v1615
          %v1721 = vsub.f32 %v1119, %v1615
          %v1722 = vsub.f32 %v1121, %v1616
          %v1723 = vsub.f32 %v1123, %v1616
          %v1724 = vsub.f32 %v1125, %v1616
          %v1725 = vsub.f32 %v1127, %v1616
          %v1726 = vsub.f32 %v1129, %v1616
          %v1727 = vsub.f32 %v1131, %v1616
          %v1728 = vsub.f32 %v1133, %v1616
          %v1729 = vsub.f32 %v1135, %v1616
          %v1730 = vsub.f32 %v1137, %v1616
          %v1731 = vsub.f32 %v1139, %v1616
          %v1732 = vsub.f32 %v1141, %v1616
          %v1733 = vsub.f32 %v1143, %v1616
          %v1734 = vsub.f32 %v1145, %v1616
          %v1735 = vsub.f32 %v1147, %v1616
          %v1736 = vsub.f32 %v1149, %v1616
          %v1737 = vsub.f32 %v1151, %v1616
          %v1738 = vsub.f32 %v1153, %v1617
          %v1739 = vsub.f32 %v1155, %v1617
          %v1740 = vsub.f32 %v1157, %v1617
          %v1741 = vsub.f32 %v1159, %v1617
          %v1742 = vsub.f32 %v1161, %v1617
          %v1743 = vsub.f32 %v1163, %v1617
          %v1744 = vsub.f32 %v1165, %v1617
          %v1745 = vsub.f32 %v1167, %v1617
          %v1746 = vsub.f32 %v1169, %v1617
          %v1747 = vsub.f32 %v1171, %v1617
          %v1748 = vsub.f32 %v1173, %v1617
          %v1749 = vsub.f32 %v1175, %v1617
          %v1750 = vsub.f32 %v1177, %v1617
          %v1751 = vsub.f32 %v1179, %v1617
          %v1752 = vsub.f32 %v1181, %v1617
          %v1753 = vsub.f32 %v1183, %v1617
          %v1754 = vmul.f32 %v1626, 1.442695
          %v1755 = vpow.pop %v1754
          %v1756 = vmul.f32 %v1627, 1.442695
          %v1757 = vpow.pop %v1756
          %v1758 = vmul.f32 %v1628, 1.442695
          %v1759 = vpow.pop %v1758
          %v1760 = vmul.f32 %v1629, 1.442695
          %v1761 = vpow.pop %v1760
          %v1762 = vmul.f32 %v1630, 1.442695
          %v1763 = vpow.pop %v1762
          %v1764 = vmul.f32 %v1631, 1.442695
          %v1765 = vpow.pop %v1764
          %v1766 = vmul.f32 %v1632, 1.442695
          %v1767 = vpow.pop %v1766
          %v1768 = vmul.f32 %v1633, 1.442695
          %v1769 = vpow.pop %v1768
          %v1770 = vmul.f32 %v1634, 1.442695
          %v1771 = vpow.pop %v1770
          %v1772 = vmul.f32 %v1635, 1.442695
          %v1773 = vpow.pop %v1772
          %v1774 = vmul.f32 %v1636, 1.442695
          %v1775 = vpow.pop %v1774
          %v1776 = vmul.f32 %v1637, 1.442695
          %v1777 = vpow.pop %v1776
          %v1778 = vmul.f32 %v1638, 1.442695
          %v1779 = vpow.pop %v1778
          %v1780 = vmul.f32 %v1639, 1.442695
          %v1781 = vpow.pop %v1780
          %v1782 = vmul.f32 %v1640, 1.442695
          %v1783 = vpow.pop %v1782
          %v1784 = vmul.f32 %v1641, 1.442695
          %v1785 = vpow.pop %v1784
          %v1786 = vmul.f32 %v1642, 1.442695
          %v1787 = vpow.pop %v1786
          %v1788 = vmul.f32 %v1643, 1.442695
          %v1789 = vpow.pop %v1788
          %v1790 = vmul.f32 %v1644, 1.442695
          %v1791 = vpow.pop %v1790
          %v1792 = vmul.f32 %v1645, 1.442695
          %v1793 = vpow.pop %v1792
          %v1794 = vmul.f32 %v1646, 1.442695
          %v1795 = vpow.pop %v1794
          %v1796 = vmul.f32 %v1647, 1.442695
          %v1797 = vpow.pop %v1796
          %v1798 = vmul.f32 %v1648, 1.442695
          %v1799 = vpow.pop %v1798
          %v1800 = vmul.f32 %v1649, 1.442695
          %v1801 = vpow.pop %v1800
          %v1802 = vmul.f32 %v1650, 1.442695
          %v1803 = vpow.pop %v1802
          %v1804 = vmul.f32 %v1651, 1.442695
          %v1805 = vpow.pop %v1804
          %v1806 = vmul.f32 %v1652, 1.442695
          %v1807 = vpow.pop %v1806
          %v1808 = vmul.f32 %v1653, 1.442695
          %v1809 = vpow.pop %v1808
          %v1810 = vmul.f32 %v1654, 1.442695
          %v1811 = vpow.pop %v1810
          %v1812 = vmul.f32 %v1655, 1.442695
          %v1813 = vpow.pop %v1812
          %v1814 = vmul.f32 %v1656, 1.442695
          %v1815 = vpow.pop %v1814
          %v1816 = vmul.f32 %v1657, 1.442695
          %v1817 = vpow.pop %v1816
          %v1818 = vmul.f32 %v1658, 1.442695
          %v1819 = vpow.pop %v1818
          %v1820 = vmul.f32 %v1659, 1.442695
          %v1821 = vpow.pop %v1820
          %v1822 = vmul.f32 %v1660, 1.442695
          %v1823 = vpow.pop %v1822
          %v1824 = vmul.f32 %v1661, 1.442695
          %v1825 = vpow.pop %v1824
          %v1826 = vmul.f32 %v1662, 1.442695
          %v1827 = vpow.pop %v1826
          %v1828 = vmul.f32 %v1663, 1.442695
          %v1829 = vpow.pop %v1828
          %v1830 = vmul.f32 %v1664, 1.442695
          %v1831 = vpow.pop %v1830
          %v1832 = vmul.f32 %v1665, 1.442695
          %v1833 = vpow.pop %v1832
          %v1834 = vmul.f32 %v1666, 1.442695
          %v1835 = vpow.pop %v1834
          %v1836 = vmul.f32 %v1667, 1.442695
          %v1837 = vpow.pop %v1836
          %v1838 = vmul.f32 %v1668, 1.442695
          %v1839 = vpow.pop %v1838
          %v1840 = vmul.f32 %v1669, 1.442695
          %v1841 = vpow.pop %v1840
          %v1842 = vmul.f32 %v1670, 1.442695
          %v1843 = vpow.pop %v1842
          %v1844 = vmul.f32 %v1671, 1.442695
          %v1845 = vpow.pop %v1844
          %v1846 = vmul.f32 %v1672, 1.442695
          %v1847 = vpow.pop %v1846
          %v1848 = vmul.f32 %v1673, 1.442695
          %v1849 = vpow.pop %v1848
          %v1850 = vmul.f32 %v1674, 1.442695
          %v1851 = vpow.pop %v1850
          %v1852 = vmul.f32 %v1675, 1.442695
          %v1853 = vpow.pop %v1852
          %v1854 = vmul.f32 %v1676, 1.442695
          %v1855 = vpow.pop %v1854
          %v1856 = vmul.f32 %v1677, 1.442695
          %v1857 = vpow.pop %v1856
          %v1858 = vmul.f32 %v1678, 1.442695
          %v1859 = vpow.pop %v1858
          %v1860 = vmul.f32 %v1679, 1.442695
          %v1861 = vpow.pop %v1860
          %v1862 = vmul.f32 %v1680, 1.442695
          %v1863 = vpow.pop %v1862
          %v1864 = vmul.f32 %v1681, 1.442695
          %v1865 = vpow.pop %v1864
          %v1866 = vmul.f32 %v1682, 1.442695
          %v1867 = vpow.pop %v1866
          %v1868 = vmul.f32 %v1683, 1.442695
          %v1869 = vpow.pop %v1868
          %v1870 = vmul.f32 %v1684, 1.442695
          %v1871 = vpow.pop %v1870
          %v1872 = vmul.f32 %v1685, 1.442695
          %v1873 = vpow.pop %v1872
          %v1874 = vmul.f32 %v1686, 1.442695
          %v1875 = vpow.pop %v1874
          %v1876 = vmul.f32 %v1687, 1.442695
          %v1877 = vpow.pop %v1876
          %v1878 = vmul.f32 %v1688, 1.442695
          %v1879 = vpow.pop %v1878
          %v1880 = vmul.f32 %v1689, 1.442695
          %v1881 = vpow.pop %v1880
          %v1882 = vmul.f32 %v1690, 1.442695
          %v1883 = vpow.pop %v1882
          %v1884 = vmul.f32 %v1691, 1.442695
          %v1885 = vpow.pop %v1884
          %v1886 = vmul.f32 %v1692, 1.442695
          %v1887 = vpow.pop %v1886
          %v1888 = vmul.f32 %v1693, 1.442695
          %v1889 = vpow.pop %v1888
          %v1890 = vmul.f32 %v1694, 1.442695
          %v1891 = vpow.pop %v1890
          %v1892 = vmul.f32 %v1695, 1.442695
          %v1893 = vpow.pop %v1892
          %v1894 = vmul.f32 %v1696, 1.442695
          %v1895 = vpow.pop %v1894
          %v1896 = vmul.f32 %v1697, 1.442695
          %v1897 = vpow.pop %v1896
          %v1898 = vmul.f32 %v1698, 1.442695
          %v1899 = vpow.pop %v1898
          %v1900 = vmul.f32 %v1699, 1.442695
          %v1901 = vpow.pop %v1900
          %v1902 = vmul.f32 %v1700, 1.442695
          %v1903 = vpow.pop %v1902
          %v1904 = vmul.f32 %v1701, 1.442695
          %v1905 = vpow.pop %v1904
          %v1906 = vmul.f32 %v1702, 1.442695
          %v1907 = vpow.pop %v1906
          %v1908 = vmul.f32 %v1703, 1.442695
          %v1909 = vpow.pop %v1908
          %v1910 = vmul.f32 %v1704, 1.442695
          %v1911 = vpow.pop %v1910
          %v1912 = vmul.f32 %v1705, 1.442695
          %v1913 = vpow.pop %v1912
          %v1914 = vmul.f32 %v1706, 1.442695
          %v1915 = vpow.pop %v1914
          %v1916 = vmul.f32 %v1707, 1.442695
          %v1917 = vpow.pop %v1916
          %v1918 = vmul.f32 %v1708, 1.442695
          %v1919 = vpow.pop %v1918
          %v1920 = vmul.f32 %v1709, 1.442695
          %v1921 = vpow.pop %v1920
          %v1922 = vmul.f32 %v1710, 1.442695
          %v1923 = vpow.pop %v1922
          %v1924 = vmul.f32 %v1711, 1.442695
          %v1925 = vpow.pop %v1924
          %v1926 = vmul.f32 %v1712, 1.442695
          %v1927 = vpow.pop %v1926
          %v1928 = vmul.f32 %v1713, 1.442695
          %v1929 = vpow.pop %v1928
          %v1930 = vmul.f32 %v1714, 1.442695
          %v1931 = vpow.pop %v1930
          %v1932 = vmul.f32 %v1715, 1.442695
          %v1933 = vpow.pop %v1932
          %v1934 = vmul.f32 %v1716, 1.442695
          %v1935 = vpow.pop %v1934
          %v1936 = vmul.f32 %v1717, 1.442695
          %v1937 = vpow.pop %v1936
          %v1938 = vmul.f32 %v1718, 1.442695
          %v1939 = vpow.pop %v1938
          %v1940 = vmul.f32 %v1719, 1.442695
          %v1941 = vpow.pop %v1940
          %v1942 = vmul.f32 %v1720, 1.442695
          %v1943 = vpow.pop %v1942
          %v1944 = vmul.f32 %v1721, 1.442695
          %v1945 = vpow.pop %v1944
          %v1946 = vmul.f32 %v1722, 1.442695
          %v1947 = vpow.pop %v1946
          %v1948 = vmul.f32 %v1723, 1.442695
          %v1949 = vpow.pop %v1948
          %v1950 = vmul.f32 %v1724, 1.442695
          %v1951 = vpow.pop %v1950
          %v1952 = vmul.f32 %v1725, 1.442695
          %v1953 = vpow.pop %v1952
          %v1954 = vmul.f32 %v1726, 1.442695
          %v1955 = vpow.pop %v1954
          %v1956 = vmul.f32 %v1727, 1.442695
          %v1957 = vpow.pop %v1956
          %v1958 = vmul.f32 %v1728, 1.442695
          %v1959 = vpow.pop %v1958
          %v1960 = vmul.f32 %v1729, 1.442695
          %v1961 = vpow.pop %v1960
          %v1962 = vmul.f32 %v1730, 1.442695
          %v1963 = vpow.pop %v1962
          %v1964 = vmul.f32 %v1731, 1.442695
          %v1965 = vpow.pop %v1964
          %v1966 = vmul.f32 %v1732, 1.442695
          %v1967 = vpow.pop %v1966
          %v1968 = vmul.f32 %v1733, 1.442695
          %v1969 = vpow.pop %v1968
          %v1970 = vmul.f32 %v1734, 1.442695
          %v1971 = vpow.pop %v1970
          %v1972 = vmul.f32 %v1735, 1.442695
          %v1973 = vpow.pop %v1972
          %v1974 = vmul.f32 %v1736, 1.442695
          %v1975 = vpow.pop %v1974
          %v1976 = vmul.f32 %v1737, 1.442695
          %v1977 = vpow.pop %v1976
          %v1978 = vmul.f32 %v1738, 1.442695
          %v1979 = vpow.pop %v1978
          %v1980 = vmul.f32 %v1739, 1.442695
          %v1981 = vpow.pop %v1980
          %v1982 = vmul.f32 %v1740, 1.442695
          %v1983 = vpow.pop %v1982
          %v1984 = vmul.f32 %v1741, 1.442695
          %v1985 = vpow.pop %v1984
          %v1986 = vmul.f32 %v1742, 1.442695
          %v1987 = vpow.pop %v1986
          %v1988 = vmul.f32 %v1743, 1.442695
          %v1989 = vpow.pop %v1988
          %v1990 = vmul.f32 %v1744, 1.442695
          %v1991 = vpow.pop %v1990
          %v1992 = vmul.f32 %v1745, 1.442695
          %v1993 = vpow.pop %v1992
          %v1994 = vmul.f32 %v1746, 1.442695
          %v1995 = vpow.pop %v1994
          %v1996 = vmul.f32 %v1747, 1.442695
          %v1997 = vpow.pop %v1996
          %v1998 = vmul.f32 %v1748, 1.442695
          %v1999 = vpow.pop %v1998
          %v2000 = vmul.f32 %v1749, 1.442695
          %v2001 = vpow.pop %v2000
          %v2002 = vmul.f32 %v1750, 1.442695
          %v2003 = vpow.pop %v2002
          %v2004 = vmul.f32 %v1751, 1.442695
          %v2005 = vpow.pop %v2004
          %v2006 = vmul.f32 %v1752, 1.442695
          %v2007 = vpow.pop %v2006
          %v2008 = vmul.f32 %v1753, 1.442695
          %v2009 = vpow.pop %v2008
          %2138 = vset.pattern.permute.xlu0 0
          %2139 = vperm.xlu0 %2138, %v1755
          %v2140 = vpop.permute.xlu0 %2139
          %2141 = vset.pattern.permute.xlu0 0
          %2142 = vperm.xlu0 %2141, %v1757
          %v2143 = vpop.permute.xlu0 %2142
          %2144 = vset.pattern.permute.xlu0 0
          %2145 = vperm.xlu0 %2144, %v1759
          %v2146 = vpop.permute.xlu0 %2145
          %2147 = vset.pattern.permute.xlu0 0
          %2148 = vperm.xlu0 %2147, %v1761
          %v2149 = vpop.permute.xlu0 %2148
          %2150 = vset.pattern.permute.xlu0 0
          %2151 = vperm.xlu0 %2150, %v1763
          %v2152 = vpop.permute.xlu0 %2151
          %2153 = vset.pattern.permute.xlu0 0
          %2154 = vperm.xlu0 %2153, %v1765
          %v2155 = vpop.permute.xlu0 %2154
          %2156 = vset.pattern.permute.xlu0 0
          %2157 = vperm.xlu0 %2156, %v1767
          %v2158 = vpop.permute.xlu0 %2157
          %2159 = vset.pattern.permute.xlu0 0
          %2160 = vperm.xlu0 %2159, %v1769
          %v2161 = vpop.permute.xlu0 %2160
          %2162 = vset.pattern.permute.xlu0 0
          %2163 = vperm.xlu0 %2162, %v1771
          %v2164 = vpop.permute.xlu0 %2163
          %2165 = vset.pattern.permute.xlu0 0
          %2166 = vperm.xlu0 %2165, %v1773
          %v2167 = vpop.permute.xlu0 %2166
          %2168 = vset.pattern.permute.xlu0 0
          %2169 = vperm.xlu0 %2168, %v1775
          %v2170 = vpop.permute.xlu0 %2169
          %2171 = vset.pattern.permute.xlu0 0
          %2172 = vperm.xlu0 %2171, %v1777
          %v2173 = vpop.permute.xlu0 %2172
          %2174 = vset.pattern.permute.xlu0 0
          %2175 = vperm.xlu0 %2174, %v1779
          %v2176 = vpop.permute.xlu0 %2175
          %2177 = vset.pattern.permute.xlu0 0
          %2178 = vperm.xlu0 %2177, %v1781
          %v2179 = vpop.permute.xlu0 %2178
          %2180 = vset.pattern.permute.xlu0 0
          %2181 = vperm.xlu0 %2180, %v1783
          %v2182 = vpop.permute.xlu0 %2181
          %2183 = vset.pattern.permute.xlu0 0
          %2184 = vperm.xlu0 %2183, %v1785
          %v2185 = vpop.permute.xlu0 %2184
          %2186 = vset.pattern.permute.xlu0 0
          %2187 = vperm.xlu0 %2186, %v1787
          %v2188 = vpop.permute.xlu0 %2187
          %2189 = vset.pattern.permute.xlu0 0
          %2190 = vperm.xlu0 %2189, %v1789
          %v2191 = vpop.permute.xlu0 %2190
          %2192 = vset.pattern.permute.xlu0 0
          %2193 = vperm.xlu0 %2192, %v1791
          %v2194 = vpop.permute.xlu0 %2193
          %2195 = vset.pattern.permute.xlu0 0
          %2196 = vperm.xlu0 %2195, %v1793
          %v2197 = vpop.permute.xlu0 %2196
          %2198 = vset.pattern.permute.xlu0 0
          %2199 = vperm.xlu0 %2198, %v1795
          %v2200 = vpop.permute.xlu0 %2199
          %2201 = vset.pattern.permute.xlu0 0
          %2202 = vperm.xlu0 %2201, %v1797
          %v2203 = vpop.permute.xlu0 %2202
          %2204 = vset.pattern.permute.xlu0 0
          %2205 = vperm.xlu0 %2204, %v1799
          %v2206 = vpop.permute.xlu0 %2205
          %2207 = vset.pattern.permute.xlu0 0
          %2208 = vperm.xlu0 %2207, %v1801
          %v2209 = vpop.permute.xlu0 %2208
          %2210 = vset.pattern.permute.xlu0 0
          %2211 = vperm.xlu0 %2210, %v1803
          %v2212 = vpop.permute.xlu0 %2211
          %2213 = vset.pattern.permute.xlu0 0
          %2214 = vperm.xlu0 %2213, %v1805
          %v2215 = vpop.permute.xlu0 %2214
          %2216 = vset.pattern.permute.xlu0 0
          %2217 = vperm.xlu0 %2216, %v1807
          %v2218 = vpop.permute.xlu0 %2217
          %2219 = vset.pattern.permute.xlu0 0
          %2220 = vperm.xlu0 %2219, %v1809
          %v2221 = vpop.permute.xlu0 %2220
          %2222 = vset.pattern.permute.xlu0 0
          %2223 = vperm.xlu0 %2222, %v1811
          %v2224 = vpop.permute.xlu0 %2223
          %2225 = vset.pattern.permute.xlu0 0
          %2226 = vperm.xlu0 %2225, %v1813
          %v2227 = vpop.permute.xlu0 %2226
          %2228 = vset.pattern.permute.xlu0 0
          %2229 = vperm.xlu0 %2228, %v1815
          %v2230 = vpop.permute.xlu0 %2229
          %2231 = vset.pattern.permute.xlu0 0
          %2232 = vperm.xlu0 %2231, %v1817
          %v2233 = vpop.permute.xlu0 %2232
          %2234 = vset.pattern.permute.xlu0 0
          %2235 = vperm.xlu0 %2234, %v1819
          %v2236 = vpop.permute.xlu0 %2235
          %2237 = vset.pattern.permute.xlu0 0
          %2238 = vperm.xlu0 %2237, %v1821
          %v2239 = vpop.permute.xlu0 %2238
          %2240 = vset.pattern.permute.xlu0 0
          %2241 = vperm.xlu0 %2240, %v1823
          %v2242 = vpop.permute.xlu0 %2241
          %2243 = vset.pattern.permute.xlu0 0
          %2244 = vperm.xlu0 %2243, %v1825
          %v2245 = vpop.permute.xlu0 %2244
          %2246 = vset.pattern.permute.xlu0 0
          %2247 = vperm.xlu0 %2246, %v1827
          %v2248 = vpop.permute.xlu0 %2247
          %2249 = vset.pattern.permute.xlu0 0
          %2250 = vperm.xlu0 %2249, %v1829
          %v2251 = vpop.permute.xlu0 %2250
          %2252 = vset.pattern.permute.xlu0 0
          %2253 = vperm.xlu0 %2252, %v1831
          %v2254 = vpop.permute.xlu0 %2253
          %2255 = vset.pattern.permute.xlu0 0
          %2256 = vperm.xlu0 %2255, %v1833
          %v2257 = vpop.permute.xlu0 %2256
          %2258 = vset.pattern.permute.xlu0 0
          %2259 = vperm.xlu0 %2258, %v1835
          %v2260 = vpop.permute.xlu0 %2259
          %2261 = vset.pattern.permute.xlu0 0
          %2262 = vperm.xlu0 %2261, %v1837
          %v2263 = vpop.permute.xlu0 %2262
          %2264 = vset.pattern.permute.xlu0 0
          %2265 = vperm.xlu0 %2264, %v1839
          %v2266 = vpop.permute.xlu0 %2265
          %2267 = vset.pattern.permute.xlu0 0
          %2268 = vperm.xlu0 %2267, %v1841
          %v2269 = vpop.permute.xlu0 %2268
          %2270 = vset.pattern.permute.xlu0 0
          %2271 = vperm.xlu0 %2270, %v1843
          %v2272 = vpop.permute.xlu0 %2271
          %2273 = vset.pattern.permute.xlu0 0
          %2274 = vperm.xlu0 %2273, %v1845
          %v2275 = vpop.permute.xlu0 %2274
          %2276 = vset.pattern.permute.xlu0 0
          %2277 = vperm.xlu0 %2276, %v1847
          %v2278 = vpop.permute.xlu0 %2277
          %2279 = vset.pattern.permute.xlu0 0
          %2280 = vperm.xlu0 %2279, %v1849
          %v2281 = vpop.permute.xlu0 %2280
          %2282 = vset.pattern.permute.xlu0 0
          %2283 = vperm.xlu0 %2282, %v1851
          %v2284 = vpop.permute.xlu0 %2283
          %2285 = vset.pattern.permute.xlu0 0
          %2286 = vperm.xlu0 %2285, %v1853
          %v2287 = vpop.permute.xlu0 %2286
          %2288 = vset.pattern.permute.xlu0 0
          %2289 = vperm.xlu0 %2288, %v1855
          %v2290 = vpop.permute.xlu0 %2289
          %2291 = vset.pattern.permute.xlu0 0
          %2292 = vperm.xlu0 %2291, %v1857
          %v2293 = vpop.permute.xlu0 %2292
          %2294 = vset.pattern.permute.xlu0 0
          %2295 = vperm.xlu0 %2294, %v1859
          %v2296 = vpop.permute.xlu0 %2295
          %2297 = vset.pattern.permute.xlu0 0
          %2298 = vperm.xlu0 %2297, %v1861
          %v2299 = vpop.permute.xlu0 %2298
          %2300 = vset.pattern.permute.xlu0 0
          %2301 = vperm.xlu0 %2300, %v1863
          %v2302 = vpop.permute.xlu0 %2301
          %2303 = vset.pattern.permute.xlu0 0
          %2304 = vperm.xlu0 %2303, %v1865
          %v2305 = vpop.permute.xlu0 %2304
          %2306 = vset.pattern.permute.xlu0 0
          %2307 = vperm.xlu0 %2306, %v1867
          %v2308 = vpop.permute.xlu0 %2307
          %2309 = vset.pattern.permute.xlu0 0
          %2310 = vperm.xlu0 %2309, %v1869
          %v2311 = vpop.permute.xlu0 %2310
          %2312 = vset.pattern.permute.xlu0 0
          %2313 = vperm.xlu0 %2312, %v1871
          %v2314 = vpop.permute.xlu0 %2313
          %2315 = vset.pattern.permute.xlu0 0
          %2316 = vperm.xlu0 %2315, %v1873
          %v2317 = vpop.permute.xlu0 %2316
          %2318 = vset.pattern.permute.xlu0 0
          %2319 = vperm.xlu0 %2318, %v1875
          %v2320 = vpop.permute.xlu0 %2319
          %2321 = vset.pattern.permute.xlu0 0
          %2322 = vperm.xlu0 %2321, %v1877
          %v2323 = vpop.permute.xlu0 %2322
          %2324 = vset.pattern.permute.xlu0 0
          %2325 = vperm.xlu0 %2324, %v1879
          %v2326 = vpop.permute.xlu0 %2325
          %2327 = vset.pattern.permute.xlu0 0
          %2328 = vperm.xlu0 %2327, %v1881
          %v2329 = vpop.permute.xlu0 %2328
          %2330 = vset.pattern.permute.xlu0 0
          %2331 = vperm.xlu0 %2330, %v1883
          %v2332 = vpop.permute.xlu0 %2331
          %2333 = vset.pattern.permute.xlu0 0
          %2334 = vperm.xlu0 %2333, %v1885
          %v2335 = vpop.permute.xlu0 %2334
          %2336 = vset.pattern.permute.xlu0 0
          %2337 = vperm.xlu0 %2336, %v1887
          %v2338 = vpop.permute.xlu0 %2337
          %2339 = vset.pattern.permute.xlu0 0
          %2340 = vperm.xlu0 %2339, %v1889
          %v2341 = vpop.permute.xlu0 %2340
          %2342 = vset.pattern.permute.xlu0 0
          %2343 = vperm.xlu0 %2342, %v1891
          %v2344 = vpop.permute.xlu0 %2343
          %2345 = vset.pattern.permute.xlu0 0
          %2346 = vperm.xlu0 %2345, %v1893
          %v2347 = vpop.permute.xlu0 %2346
          %2348 = vset.pattern.permute.xlu0 0
          %2349 = vperm.xlu0 %2348, %v1895
          %v2350 = vpop.permute.xlu0 %2349
          %2351 = vset.pattern.permute.xlu0 0
          %2352 = vperm.xlu0 %2351, %v1897
          %v2353 = vpop.permute.xlu0 %2352
          %2354 = vset.pattern.permute.xlu0 0
          %2355 = vperm.xlu0 %2354, %v1899
          %v2356 = vpop.permute.xlu0 %2355
          %2357 = vset.pattern.permute.xlu0 0
          %2358 = vperm.xlu0 %2357, %v1901
          %v2359 = vpop.permute.xlu0 %2358
          %2360 = vset.pattern.permute.xlu0 0
          %2361 = vperm.xlu0 %2360, %v1903
          %v2362 = vpop.permute.xlu0 %2361
          %2363 = vset.pattern.permute.xlu0 0
          %2364 = vperm.xlu0 %2363, %v1905
          %v2365 = vpop.permute.xlu0 %2364
          %2366 = vset.pattern.permute.xlu0 0
          %2367 = vperm.xlu0 %2366, %v1907
          %v2368 = vpop.permute.xlu0 %2367
          %2369 = vset.pattern.permute.xlu0 0
          %2370 = vperm.xlu0 %2369, %v1909
          %v2371 = vpop.permute.xlu0 %2370
          %2372 = vset.pattern.permute.xlu0 0
          %2373 = vperm.xlu0 %2372, %v1911
          %v2374 = vpop.permute.xlu0 %2373
          %2375 = vset.pattern.permute.xlu0 0
          %2376 = vperm.xlu0 %2375, %v1913
          %v2377 = vpop.permute.xlu0 %2376
          %2378 = vset.pattern.permute.xlu0 0
          %2379 = vperm.xlu0 %2378, %v1915
          %v2380 = vpop.permute.xlu0 %2379
          %2381 = vset.pattern.permute.xlu0 0
          %2382 = vperm.xlu0 %2381, %v1917
          %v2383 = vpop.permute.xlu0 %2382
          %2384 = vset.pattern.permute.xlu0 0
          %2385 = vperm.xlu0 %2384, %v1919
          %v2386 = vpop.permute.xlu0 %2385
          %2387 = vset.pattern.permute.xlu0 0
          %2388 = vperm.xlu0 %2387, %v1921
          %v2389 = vpop.permute.xlu0 %2388
          %2390 = vset.pattern.permute.xlu0 0
          %2391 = vperm.xlu0 %2390, %v1923
          %v2392 = vpop.permute.xlu0 %2391
          %2393 = vset.pattern.permute.xlu0 0
          %2394 = vperm.xlu0 %2393, %v1925
          %v2395 = vpop.permute.xlu0 %2394
          %2396 = vset.pattern.permute.xlu0 0
          %2397 = vperm.xlu0 %2396, %v1927
          %v2398 = vpop.permute.xlu0 %2397
          %2399 = vset.pattern.permute.xlu0 0
          %2400 = vperm.xlu0 %2399, %v1929
          %v2401 = vpop.permute.xlu0 %2400
          %2402 = vset.pattern.permute.xlu0 0
          %2403 = vperm.xlu0 %2402, %v1931
          %v2404 = vpop.permute.xlu0 %2403
          %2405 = vset.pattern.permute.xlu0 0
          %2406 = vperm.xlu0 %2405, %v1933
          %v2407 = vpop.permute.xlu0 %2406
          %2408 = vset.pattern.permute.xlu0 0
          %2409 = vperm.xlu0 %2408, %v1935
          %v2410 = vpop.permute.xlu0 %2409
          %2411 = vset.pattern.permute.xlu0 0
          %2412 = vperm.xlu0 %2411, %v1937
          %v2413 = vpop.permute.xlu0 %2412
          %2414 = vset.pattern.permute.xlu0 0
          %2415 = vperm.xlu0 %2414, %v1939
          %v2416 = vpop.permute.xlu0 %2415
          %2417 = vset.pattern.permute.xlu0 0
          %2418 = vperm.xlu0 %2417, %v1941
          %v2419 = vpop.permute.xlu0 %2418
          %2420 = vset.pattern.permute.xlu0 0
          %2421 = vperm.xlu0 %2420, %v1943
          %v2422 = vpop.permute.xlu0 %2421
          %2423 = vset.pattern.permute.xlu0 0
          %2424 = vperm.xlu0 %2423, %v1945
          %v2425 = vpop.permute.xlu0 %2424
          %2426 = vset.pattern.permute.xlu0 0
          %2427 = vperm.xlu0 %2426, %v1947
          %v2428 = vpop.permute.xlu0 %2427
          %2429 = vset.pattern.permute.xlu0 0
          %2430 = vperm.xlu0 %2429, %v1949
          %v2431 = vpop.permute.xlu0 %2430
          %2432 = vset.pattern.permute.xlu0 0
          %2433 = vperm.xlu0 %2432, %v1951
          %v2434 = vpop.permute.xlu0 %2433
          %2435 = vset.pattern.permute.xlu0 0
          %2436 = vperm.xlu0 %2435, %v1953
          %v2437 = vpop.permute.xlu0 %2436
          %2438 = vset.pattern.permute.xlu0 0
          %2439 = vperm.xlu0 %2438, %v1955
          %v2440 = vpop.permute.xlu0 %2439
          %2441 = vset.pattern.permute.xlu0 0
          %2442 = vperm.xlu0 %2441, %v1957
          %v2443 = vpop.permute.xlu0 %2442
          %2444 = vset.pattern.permute.xlu0 0
          %2445 = vperm.xlu0 %2444, %v1959
          %v2446 = vpop.permute.xlu0 %2445
          %2447 = vset.pattern.permute.xlu0 0
          %2448 = vperm.xlu0 %2447, %v1961
          %v2449 = vpop.permute.xlu0 %2448
          %2450 = vset.pattern.permute.xlu0 0
          %2451 = vperm.xlu0 %2450, %v1963
          %v2452 = vpop.permute.xlu0 %2451
          %2453 = vset.pattern.permute.xlu0 0
          %2454 = vperm.xlu0 %2453, %v1965
          %v2455 = vpop.permute.xlu0 %2454
          %2456 = vset.pattern.permute.xlu0 0
          %2457 = vperm.xlu0 %2456, %v1967
          %v2458 = vpop.permute.xlu0 %2457
          %2459 = vset.pattern.permute.xlu0 0
          %2460 = vperm.xlu0 %2459, %v1969
          %v2461 = vpop.permute.xlu0 %2460
          %2462 = vset.pattern.permute.xlu0 0
          %2463 = vperm.xlu0 %2462, %v1971
          %v2464 = vpop.permute.xlu0 %2463
          %2465 = vset.pattern.permute.xlu0 0
          %2466 = vperm.xlu0 %2465, %v1973
          %v2467 = vpop.permute.xlu0 %2466
          %2468 = vset.pattern.permute.xlu0 0
          %2469 = vperm.xlu0 %2468, %v1975
          %v2470 = vpop.permute.xlu0 %2469
          %2471 = vset.pattern.permute.xlu0 0
          %2472 = vperm.xlu0 %2471, %v1977
          %v2473 = vpop.permute.xlu0 %2472
          %2474 = vset.pattern.permute.xlu0 0
          %2475 = vperm.xlu0 %2474, %v1979
          %v2476 = vpop.permute.xlu0 %2475
          %2477 = vset.pattern.permute.xlu0 0
          %2478 = vperm.xlu0 %2477, %v1981
          %v2479 = vpop.permute.xlu0 %2478
          %2480 = vset.pattern.permute.xlu0 0
          %2481 = vperm.xlu0 %2480, %v1983
          %v2482 = vpop.permute.xlu0 %2481
          %2483 = vset.pattern.permute.xlu0 0
          %2484 = vperm.xlu0 %2483, %v1985
          %v2485 = vpop.permute.xlu0 %2484
          %2486 = vset.pattern.permute.xlu0 0
          %2487 = vperm.xlu0 %2486, %v1987
          %v2488 = vpop.permute.xlu0 %2487
          %2489 = vset.pattern.permute.xlu0 0
          %2490 = vperm.xlu0 %2489, %v1989
          %v2491 = vpop.permute.xlu0 %2490
          %2492 = vset.pattern.permute.xlu0 0
          %2493 = vperm.xlu0 %2492, %v1991
          %v2494 = vpop.permute.xlu0 %2493
          %2495 = vset.pattern.permute.xlu0 0
          %2496 = vperm.xlu0 %2495, %v1993
          %v2497 = vpop.permute.xlu0 %2496
          %2498 = vset.pattern.permute.xlu0 0
          %2499 = vperm.xlu0 %2498, %v1995
          %v2500 = vpop.permute.xlu0 %2499
          %2501 = vset.pattern.permute.xlu0 0
          %2502 = vperm.xlu0 %2501, %v1997
          %v2503 = vpop.permute.xlu0 %2502
          %2504 = vset.pattern.permute.xlu0 0
          %2505 = vperm.xlu0 %2504, %v1999
          %v2506 = vpop.permute.xlu0 %2505
          %2507 = vset.pattern.permute.xlu0 0
          %2508 = vperm.xlu0 %2507, %v2001
          %v2509 = vpop.permute.xlu0 %2508
          %2510 = vset.pattern.permute.xlu0 0
          %2511 = vperm.xlu0 %2510, %v2003
          %v2512 = vpop.permute.xlu0 %2511
          %2513 = vset.pattern.permute.xlu0 0
          %2514 = vperm.xlu0 %2513, %v2005
          %v2515 = vpop.permute.xlu0 %2514
          %2516 = vset.pattern.permute.xlu0 0
          %2517 = vperm.xlu0 %2516, %v2007
          %v2518 = vpop.permute.xlu0 %2517
          %2519 = vset.pattern.permute.xlu0 0
          %2520 = vperm.xlu0 %2519, %v2009
          %v2521 = vpop.permute.xlu0 %2520
          %v2522 = vperm.slane %v2140, %v1313
          %v2523 = vperm.slane %v2143, %v1315
          %v2524 = vsel %vm1317, %v2523, %v2522
          %v2525 = vperm.slane %v2146, %v1319
          %v2526 = vsel %vm1321, %v2525, %v2524
          %v2527 = vperm.slane %v2149, %v1323
          %v2528 = vsel %vm1325, %v2527, %v2526
          %v2529 = vperm.slane %v2152, %v1327
          %v2530 = vsel %vm1329, %v2529, %v2528
          %v2531 = vperm.slane %v2155, %v1331
          %v2532 = vsel %vm1333, %v2531, %v2530
          %v2533 = vperm.slane %v2158, %v1335
          %v2534 = vsel %vm1337, %v2533, %v2532
          %v2535 = vperm.slane %v2161, %v1339
          %v2536 = vsel %vm1341, %v2535, %v2534
          %v2537 = vperm.slane %v2164, %v1343
          %v2538 = vsel %vm1345, %v2537, %v2536
          %v2539 = vperm.slane %v2167, %v1347
          %v2540 = vsel %vm1349, %v2539, %v2538
          %v2541 = vperm.slane %v2170, %v1351
          %v2542 = vsel %vm1353, %v2541, %v2540
          %v2543 = vperm.slane %v2173, %v1355
          %v2544 = vsel %vm1357, %v2543, %v2542
          %v2545 = vperm.slane %v2176, %v1359
          %v2546 = vsel %vm1361, %v2545, %v2544
          %v2547 = vperm.slane %v2179, %v1363
          %v2548 = vsel %vm1365, %v2547, %v2546
          %v2549 = vperm.slane %v2182, %v1367
          %v2550 = vsel %vm1369, %v2549, %v2548
          %v2551 = vperm.slane %v2185, %v1371
          %v2552 = vsel %vm1373, %v2551, %v2550
          %v2553 = vperm.slane %v2188, %v1313
          %v2554 = vperm.slane %v2191, %v1315
          %v2555 = vsel %vm1317, %v2554, %v2553
          %v2556 = vperm.slane %v2194, %v1319
          %v2557 = vsel %vm1321, %v2556, %v2555
          %v2558 = vperm.slane %v2197, %v1323
          %v2559 = vsel %vm1325, %v2558, %v2557
          %v2560 = vperm.slane %v2200, %v1327
          %v2561 = vsel %vm1329, %v2560, %v2559
          %v2562 = vperm.slane %v2203, %v1331
          %v2563 = vsel %vm1333, %v2562, %v2561
          %v2564 = vperm.slane %v2206, %v1335
          %v2565 = vsel %vm1337, %v2564, %v2563
          %v2566 = vperm.slane %v2209, %v1339
          %v2567 = vsel %vm1341, %v2566, %v2565
          %v2568 = vperm.slane %v2212, %v1343
          %v2569 = vsel %vm1345, %v2568, %v2567
          %v2570 = vperm.slane %v2215, %v1347
          %v2571 = vsel %vm1349, %v2570, %v2569
          %v2572 = vperm.slane %v2218, %v1351
          %v2573 = vsel %vm1353, %v2572, %v2571
          %v2574 = vperm.slane %v2221, %v1355
          %v2575 = vsel %vm1357, %v2574, %v2573
          %v2576 = vperm.slane %v2224, %v1359
          %v2577 = vsel %vm1361, %v2576, %v2575
          %v2578 = vperm.slane %v2227, %v1363
          %v2579 = vsel %vm1365, %v2578, %v2577
          %v2580 = vperm.slane %v2230, %v1367
          %v2581 = vsel %vm1369, %v2580, %v2579
          %v2582 = vperm.slane %v2233, %v1371
          %v2583 = vsel %vm1373, %v2582, %v2581
          %v2584 = vperm.slane %v2236, %v1313
          %v2585 = vperm.slane %v2239, %v1315
          %v2586 = vsel %vm1317, %v2585, %v2584
          %v2587 = vperm.slane %v2242, %v1319
          %v2588 = vsel %vm1321, %v2587, %v2586
          %v2589 = vperm.slane %v2245, %v1323
          %v2590 = vsel %vm1325, %v2589, %v2588
          %v2591 = vperm.slane %v2248, %v1327
          %v2592 = vsel %vm1329, %v2591, %v2590
          %v2593 = vperm.slane %v2251, %v1331
          %v2594 = vsel %vm1333, %v2593, %v2592
          %v2595 = vperm.slane %v2254, %v1335
          %v2596 = vsel %vm1337, %v2595, %v2594
          %v2597 = vperm.slane %v2257, %v1339
          %v2598 = vsel %vm1341, %v2597, %v2596
          %v2599 = vperm.slane %v2260, %v1343
          %v2600 = vsel %vm1345, %v2599, %v2598
          %v2601 = vperm.slane %v2263, %v1347
          %v2602 = vsel %vm1349, %v2601, %v2600
          %v2603 = vperm.slane %v2266, %v1351
          %v2604 = vsel %vm1353, %v2603, %v2602
          %v2605 = vperm.slane %v2269, %v1355
          %v2606 = vsel %vm1357, %v2605, %v2604
          %v2607 = vperm.slane %v2272, %v1359
          %v2608 = vsel %vm1361, %v2607, %v2606
          %v2609 = vperm.slane %v2275, %v1363
          %v2610 = vsel %vm1365, %v2609, %v2608
          %v2611 = vperm.slane %v2278, %v1367
          %v2612 = vsel %vm1369, %v2611, %v2610
          %v2613 = vperm.slane %v2281, %v1371
          %v2614 = vsel %vm1373, %v2613, %v2612
          %v2615 = vperm.slane %v2284, %v1313
          %v2616 = vperm.slane %v2287, %v1315
          %v2617 = vsel %vm1317, %v2616, %v2615
          %v2618 = vperm.slane %v2290, %v1319
          %v2619 = vsel %vm1321, %v2618, %v2617
          %v2620 = vperm.slane %v2293, %v1323
          %v2621 = vsel %vm1325, %v2620, %v2619
          %v2622 = vperm.slane %v2296, %v1327
          %v2623 = vsel %vm1329, %v2622, %v2621
          %v2624 = vperm.slane %v2299, %v1331
          %v2625 = vsel %vm1333, %v2624, %v2623
          %v2626 = vperm.slane %v2302, %v1335
          %v2627 = vsel %vm1337, %v2626, %v2625
          %v2628 = vperm.slane %v2305, %v1339
          %v2629 = vsel %vm1341, %v2628, %v2627
          %v2630 = vperm.slane %v2308, %v1343
          %v2631 = vsel %vm1345, %v2630, %v2629
          %v2632 = vperm.slane %v2311, %v1347
          %v2633 = vsel %vm1349, %v2632, %v2631
          %v2634 = vperm.slane %v2314, %v1351
          %v2635 = vsel %vm1353, %v2634, %v2633
          %v2636 = vperm.slane %v2317, %v1355
          %v2637 = vsel %vm1357, %v2636, %v2635
          %v2638 = vperm.slane %v2320, %v1359
          %v2639 = vsel %vm1361, %v2638, %v2637
          %v2640 = vperm.slane %v2323, %v1363
          %v2641 = vsel %vm1365, %v2640, %v2639
          %v2642 = vperm.slane %v2326, %v1367
          %v2643 = vsel %vm1369, %v2642, %v2641
          %v2644 = vperm.slane %v2329, %v1371
          %v2645 = vsel %vm1373, %v2644, %v2643
          %v2646 = vperm.slane %v2332, %v1313
          %v2647 = vperm.slane %v2335, %v1315
          %v2648 = vsel %vm1317, %v2647, %v2646
          %v2649 = vperm.slane %v2338, %v1319
          %v2650 = vsel %vm1321, %v2649, %v2648
          %v2651 = vperm.slane %v2341, %v1323
          %v2652 = vsel %vm1325, %v2651, %v2650
          %v2653 = vperm.slane %v2344, %v1327
          %v2654 = vsel %vm1329, %v2653, %v2652
          %v2655 = vperm.slane %v2347, %v1331
          %v2656 = vsel %vm1333, %v2655, %v2654
          %v2657 = vperm.slane %v2350, %v1335
          %v2658 = vsel %vm1337, %v2657, %v2656
          %v2659 = vperm.slane %v2353, %v1339
          %v2660 = vsel %vm1341, %v2659, %v2658
          %v2661 = vperm.slane %v2356, %v1343
          %v2662 = vsel %vm1345, %v2661, %v2660
          %v2663 = vperm.slane %v2359, %v1347
          %v2664 = vsel %vm1349, %v2663, %v2662
          %v2665 = vperm.slane %v2362, %v1351
          %v2666 = vsel %vm1353, %v2665, %v2664
          %v2667 = vperm.slane %v2365, %v1355
          %v2668 = vsel %vm1357, %v2667, %v2666
          %v2669 = vperm.slane %v2368, %v1359
          %v2670 = vsel %vm1361, %v2669, %v2668
          %v2671 = vperm.slane %v2371, %v1363
          %v2672 = vsel %vm1365, %v2671, %v2670
          %v2673 = vperm.slane %v2374, %v1367
          %v2674 = vsel %vm1369, %v2673, %v2672
          %v2675 = vperm.slane %v2377, %v1371
          %v2676 = vsel %vm1373, %v2675, %v2674
          %v2677 = vperm.slane %v2380, %v1313
          %v2678 = vperm.slane %v2383, %v1315
          %v2679 = vsel %vm1317, %v2678, %v2677
          %v2680 = vperm.slane %v2386, %v1319
          %v2681 = vsel %vm1321, %v2680, %v2679
          %v2682 = vperm.slane %v2389, %v1323
          %v2683 = vsel %vm1325, %v2682, %v2681
          %v2684 = vperm.slane %v2392, %v1327
          %v2685 = vsel %vm1329, %v2684, %v2683
          %v2686 = vperm.slane %v2395, %v1331
          %v2687 = vsel %vm1333, %v2686, %v2685
          %v2688 = vperm.slane %v2398, %v1335
          %v2689 = vsel %vm1337, %v2688, %v2687
          %v2690 = vperm.slane %v2401, %v1339
          %v2691 = vsel %vm1341, %v2690, %v2689
          %v2692 = vperm.slane %v2404, %v1343
          %v2693 = vsel %vm1345, %v2692, %v2691
          %v2694 = vperm.slane %v2407, %v1347
          %v2695 = vsel %vm1349, %v2694, %v2693
          %v2696 = vperm.slane %v2410, %v1351
          %v2697 = vsel %vm1353, %v2696, %v2695
          %v2698 = vperm.slane %v2413, %v1355
          %v2699 = vsel %vm1357, %v2698, %v2697
          %v2700 = vperm.slane %v2416, %v1359
          %v2701 = vsel %vm1361, %v2700, %v2699
          %v2702 = vperm.slane %v2419, %v1363
          %v2703 = vsel %vm1365, %v2702, %v2701
          %v2704 = vperm.slane %v2422, %v1367
          %v2705 = vsel %vm1369, %v2704, %v2703
          %v2706 = vperm.slane %v2425, %v1371
          %v2707 = vsel %vm1373, %v2706, %v2705
          %v2708 = vperm.slane %v2428, %v1313
          %v2709 = vperm.slane %v2431, %v1315
          %v2710 = vsel %vm1317, %v2709, %v2708
          %v2711 = vperm.slane %v2434, %v1319
          %v2712 = vsel %vm1321, %v2711, %v2710
          %v2713 = vperm.slane %v2437, %v1323
          %v2714 = vsel %vm1325, %v2713, %v2712
          %v2715 = vperm.slane %v2440, %v1327
          %v2716 = vsel %vm1329, %v2715, %v2714
          %v2717 = vperm.slane %v2443, %v1331
          %v2718 = vsel %vm1333, %v2717, %v2716
          %v2719 = vperm.slane %v2446, %v1335
          %v2720 = vsel %vm1337, %v2719, %v2718
          %v2721 = vperm.slane %v2449, %v1339
          %v2722 = vsel %vm1341, %v2721, %v2720
          %v2723 = vperm.slane %v2452, %v1343
          %v2724 = vsel %vm1345, %v2723, %v2722
          %v2725 = vperm.slane %v2455, %v1347
          %v2726 = vsel %vm1349, %v2725, %v2724
          %v2727 = vperm.slane %v2458, %v1351
          %v2728 = vsel %vm1353, %v2727, %v2726
          %v2729 = vperm.slane %v2461, %v1355
          %v2730 = vsel %vm1357, %v2729, %v2728
          %v2731 = vperm.slane %v2464, %v1359
          %v2732 = vsel %vm1361, %v2731, %v2730
          %v2733 = vperm.slane %v2467, %v1363
          %v2734 = vsel %vm1365, %v2733, %v2732
          %v2735 = vperm.slane %v2470, %v1367
          %v2736 = vsel %vm1369, %v2735, %v2734
          %v2737 = vperm.slane %v2473, %v1371
          %v2738 = vsel %vm1373, %v2737, %v2736
          %v2739 = vperm.slane %v2476, %v1313
          %v2740 = vperm.slane %v2479, %v1315
          %v2741 = vsel %vm1317, %v2740, %v2739
          %v2742 = vperm.slane %v2482, %v1319
          %v2743 = vsel %vm1321, %v2742, %v2741
          %v2744 = vperm.slane %v2485, %v1323
          %v2745 = vsel %vm1325, %v2744, %v2743
          %v2746 = vperm.slane %v2488, %v1327
          %v2747 = vsel %vm1329, %v2746, %v2745
          %v2748 = vperm.slane %v2491, %v1331
          %v2749 = vsel %vm1333, %v2748, %v2747
          %v2750 = vperm.slane %v2494, %v1335
          %v2751 = vsel %vm1337, %v2750, %v2749
          %v2752 = vperm.slane %v2497, %v1339
          %v2753 = vsel %vm1341, %v2752, %v2751
          %v2754 = vperm.slane %v2500, %v1343
          %v2755 = vsel %vm1345, %v2754, %v2753
          %v2756 = vperm.slane %v2503, %v1347
          %v2757 = vsel %vm1349, %v2756, %v2755
          %v2758 = vperm.slane %v2506, %v1351
          %v2759 = vsel %vm1353, %v2758, %v2757
          %v2760 = vperm.slane %v2509, %v1355
          %v2761 = vsel %vm1357, %v2760, %v2759
          %v2762 = vperm.slane %v2512, %v1359
          %v2763 = vsel %vm1361, %v2762, %v2761
          %v2764 = vperm.slane %v2515, %v1363
          %v2765 = vsel %vm1365, %v2764, %v2763
          %v2766 = vperm.slane %v2518, %v1367
          %v2767 = vsel %vm1369, %v2766, %v2765
          %v2768 = vperm.slane %v2521, %v1371
          %v2769 = vsel %vm1373, %v2768, %v2767
          %v2770 = vsel %vm1592, %v2583, %v2552
          %v2771 = vsel %vm1594, %v2614, %v2770
          %v2772 = vsel %vm1596, %v2645, %v2771
          %v2773 = vsel %vm1598, %v2676, %v2772
          %v2774 = vsel %vm1600, %v2707, %v2773
          %v2775 = vsel %vm1602, %v2738, %v2774
          %v2776 = vsel %vm1604, %v2769, %v2775
          %2778 = vadd.xlane.f32.xlu0 %v2776
          %v2779 = vpop.xlane.xlu0 %2778
          %v2781 = vperm.slane %v2779, 0
          %v2782 = vperm.slane %v2779, 1
          %v2783 = vperm.slane %v2779, 2
          %v2784 = vperm.slane %v2779, 3
          %v2785 = vperm.slane %v2779, 4
          %v2786 = vperm.slane %v2779, 5
          %v2787 = vperm.slane %v2779, 6
          %v2788 = vperm.slane %v2779, 7
          %v2797 = vrcp.pop %v2781
          %v2798 = vmul.f32 %v2781, %v2797
          %v2799 = vsub.f32 1.0, %v2798
          %v2800 = vmul.f32 %v2797, %v2799
          %v2801 = vadd.f32 %v2797, %v2800
          %vm2802 = vweird.f32 %v2781
          %vm2803 = vweird.f32 %v2797
          %vm2804 = vmor %vm2802, %vm2803
          %v2805 = vsel %vm2804, %v2797, %v2801
          %v2806 = vand.u32 2147483647, %v2781
          %vm2807 = vcmp.eq.f32.partialorder %v2806, 8.507059e+37
          %v2808 = vand.u32 %v2781, 2147483648
          %v2809 = vor.u32 1.1754944e-38, %v2808
          %v2810 = vsel %vm2807, %v2809, %v2805
          %v2811 = vmul.f32 %v1755, %v2810
          %v2812 = vmul.f32 %v1757, %v2810
          %v2813 = vmul.f32 %v1759, %v2810
          %v2814 = vmul.f32 %v1761, %v2810
          %v2815 = vmul.f32 %v1763, %v2810
          %v2816 = vmul.f32 %v1765, %v2810
          %v2817 = vmul.f32 %v1767, %v2810
          %v2818 = vmul.f32 %v1769, %v2810
          %v2819 = vmul.f32 %v1771, %v2810
          %v2820 = vmul.f32 %v1773, %v2810
          %v2821 = vmul.f32 %v1775, %v2810
          %v2822 = vmul.f32 %v1777, %v2810
          %v2823 = vmul.f32 %v1779, %v2810
          %v2824 = vmul.f32 %v1781, %v2810
          %v2825 = vmul.f32 %v1783, %v2810
          %v2826 = vmul.f32 %v1785, %v2810
          %v2827 = vrcp.pop %v2782
          %v2828 = vmul.f32 %v2782, %v2827
          %v2829 = vsub.f32 1.0, %v2828
          %v2830 = vmul.f32 %v2827, %v2829
          %v2831 = vadd.f32 %v2827, %v2830
          %vm2832 = vweird.f32 %v2782
          %vm2833 = vweird.f32 %v2827
          %vm2834 = vmor %vm2832, %vm2833
          %v2835 = vsel %vm2834, %v2827, %v2831
          %v2836 = vand.u32 2147483647, %v2782
          %vm2837 = vcmp.eq.f32.partialorder %v2836, 8.507059e+37
          %v2838 = vand.u32 %v2782, 2147483648
          %v2839 = vor.u32 1.1754944e-38, %v2838
          %v2840 = vsel %vm2837, %v2839, %v2835
          %v2841 = vmul.f32 %v1787, %v2840
          %v2842 = vmul.f32 %v1789, %v2840
          %v2843 = vmul.f32 %v1791, %v2840
          %v2844 = vmul.f32 %v1793, %v2840
          %v2845 = vmul.f32 %v1795, %v2840
          %v2846 = vmul.f32 %v1797, %v2840
          %v2847 = vmul.f32 %v1799, %v2840
          %v2848 = vmul.f32 %v1801, %v2840
          %v2849 = vmul.f32 %v1803, %v2840
          %v2850 = vmul.f32 %v1805, %v2840
          %v2851 = vmul.f32 %v1807, %v2840
          %v2852 = vmul.f32 %v1809, %v2840
          %v2853 = vmul.f32 %v1811, %v2840
          %v2854 = vmul.f32 %v1813, %v2840
          %v2855 = vmul.f32 %v1815, %v2840
          %v2856 = vmul.f32 %v1817, %v2840
          %v2857 = vrcp.pop %v2783
          %v2858 = vmul.f32 %v2783, %v2857
          %v2859 = vsub.f32 1.0, %v2858
          %v2860 = vmul.f32 %v2857, %v2859
          %v2861 = vadd.f32 %v2857, %v2860
          %vm2862 = vweird.f32 %v2783
          %vm2863 = vweird.f32 %v2857
          %vm2864 = vmor %vm2862, %vm2863
          %v2865 = vsel %vm2864, %v2857, %v2861
          %v2866 = vand.u32 2147483647, %v2783
          %vm2867 = vcmp.eq.f32.partialorder %v2866, 8.507059e+37
          %v2868 = vand.u32 %v2783, 2147483648
          %v2869 = vor.u32 1.1754944e-38, %v2868
          %v2870 = vsel %vm2867, %v2869, %v2865
          %v2871 = vmul.f32 %v1819, %v2870
          %v2872 = vmul.f32 %v1821, %v2870
          %v2873 = vmul.f32 %v1823, %v2870
          %v2874 = vmul.f32 %v1825, %v2870
          %v2875 = vmul.f32 %v1827, %v2870
          %v2876 = vmul.f32 %v1829, %v2870
          %v2877 = vmul.f32 %v1831, %v2870
          %v2878 = vmul.f32 %v1833, %v2870
          %v2879 = vmul.f32 %v1835, %v2870
          %v2880 = vmul.f32 %v1837, %v2870
          %v2881 = vmul.f32 %v1839, %v2870
          %v2882 = vmul.f32 %v1841, %v2870
          %v2883 = vmul.f32 %v1843, %v2870
          %v2884 = vmul.f32 %v1845, %v2870
          %v2885 = vmul.f32 %v1847, %v2870
          %v2886 = vmul.f32 %v1849, %v2870
          %v2887 = vrcp.pop %v2784
          %v2888 = vmul.f32 %v2784, %v2887
          %v2889 = vsub.f32 1.0, %v2888
          %v2890 = vmul.f32 %v2887, %v2889
          %v2891 = vadd.f32 %v2887, %v2890
          %vm2892 = vweird.f32 %v2784
          %vm2893 = vweird.f32 %v2887
          %vm2894 = vmor %vm2892, %vm2893
          %v2895 = vsel %vm2894, %v2887, %v2891
          %v2896 = vand.u32 2147483647, %v2784
          %vm2897 = vcmp.eq.f32.partialorder %v2896, 8.507059e+37
          %v2898 = vand.u32 %v2784, 2147483648
          %v2899 = vor.u32 1.1754944e-38, %v2898
          %v2900 = vsel %vm2897, %v2899, %v2895
          %v2901 = vmul.f32 %v1851, %v2900
          %v2902 = vmul.f32 %v1853, %v2900
          %v2903 = vmul.f32 %v1855, %v2900
          %v2904 = vmul.f32 %v1857, %v2900
          %v2905 = vmul.f32 %v1859, %v2900
          %v2906 = vmul.f32 %v1861, %v2900
          %v2907 = vmul.f32 %v1863, %v2900
          %v2908 = vmul.f32 %v1865, %v2900
          %v2909 = vmul.f32 %v1867, %v2900
          %v2910 = vmul.f32 %v1869, %v2900
          %v2911 = vmul.f32 %v1871, %v2900
          %v2912 = vmul.f32 %v1873, %v2900
          %v2913 = vmul.f32 %v1875, %v2900
          %v2914 = vmul.f32 %v1877, %v2900
          %v2915 = vmul.f32 %v1879, %v2900
          %v2916 = vmul.f32 %v1881, %v2900
          %v2917 = vrcp.pop %v2785
          %v2918 = vmul.f32 %v2785, %v2917
          %v2919 = vsub.f32 1.0, %v2918
          %v2920 = vmul.f32 %v2917, %v2919
          %v2921 = vadd.f32 %v2917, %v2920
          %vm2922 = vweird.f32 %v2785
          %vm2923 = vweird.f32 %v2917
          %vm2924 = vmor %vm2922, %vm2923
          %v2925 = vsel %vm2924, %v2917, %v2921
          %v2926 = vand.u32 2147483647, %v2785
          %vm2927 = vcmp.eq.f32.partialorder %v2926, 8.507059e+37
          %v2928 = vand.u32 %v2785, 2147483648
          %v2929 = vor.u32 1.1754944e-38, %v2928
          %v2930 = vsel %vm2927, %v2929, %v2925
          %v2931 = vmul.f32 %v1883, %v2930
          %v2932 = vmul.f32 %v1885, %v2930
          %v2933 = vmul.f32 %v1887, %v2930
          %v2934 = vmul.f32 %v1889, %v2930
          %v2935 = vmul.f32 %v1891, %v2930
          %v2936 = vmul.f32 %v1893, %v2930
          %v2937 = vmul.f32 %v1895, %v2930
          %v2938 = vmul.f32 %v1897, %v2930
          %v2939 = vmul.f32 %v1899, %v2930
          %v2940 = vmul.f32 %v1901, %v2930
          %v2941 = vmul.f32 %v1903, %v2930
          %v2942 = vmul.f32 %v1905, %v2930
          %v2943 = vmul.f32 %v1907, %v2930
          %v2944 = vmul.f32 %v1909, %v2930
          %v2945 = vmul.f32 %v1911, %v2930
          %v2946 = vmul.f32 %v1913, %v2930
          %v2947 = vrcp.pop %v2786
          %v2948 = vmul.f32 %v2786, %v2947
          %v2949 = vsub.f32 1.0, %v2948
          %v2950 = vmul.f32 %v2947, %v2949
          %v2951 = vadd.f32 %v2947, %v2950
          %vm2952 = vweird.f32 %v2786
          %vm2953 = vweird.f32 %v2947
          %vm2954 = vmor %vm2952, %vm2953
          %v2955 = vsel %vm2954, %v2947, %v2951
          %v2956 = vand.u32 2147483647, %v2786
          %vm2957 = vcmp.eq.f32.partialorder %v2956, 8.507059e+37
          %v2958 = vand.u32 %v2786, 2147483648
          %v2959 = vor.u32 1.1754944e-38, %v2958
          %v2960 = vsel %vm2957, %v2959, %v2955
          %v2961 = vmul.f32 %v1915, %v2960
          %v2962 = vmul.f32 %v1917, %v2960
          %v2963 = vmul.f32 %v1919, %v2960
          %v2964 = vmul.f32 %v1921, %v2960
          %v2965 = vmul.f32 %v1923, %v2960
          %v2966 = vmul.f32 %v1925, %v2960
          %v2967 = vmul.f32 %v1927, %v2960
          %v2968 = vmul.f32 %v1929, %v2960
          %v2969 = vmul.f32 %v1931, %v2960
          %v2970 = vmul.f32 %v1933, %v2960
          %v2971 = vmul.f32 %v1935, %v2960
          %v2972 = vmul.f32 %v1937, %v2960
          %v2973 = vmul.f32 %v1939, %v2960
          %v2974 = vmul.f32 %v1941, %v2960
          %v2975 = vmul.f32 %v1943, %v2960
          %v2976 = vmul.f32 %v1945, %v2960
          %v2977 = vrcp.pop %v2787
          %v2978 = vmul.f32 %v2787, %v2977
          %v2979 = vsub.f32 1.0, %v2978
          %v2980 = vmul.f32 %v2977, %v2979
          %v2981 = vadd.f32 %v2977, %v2980
          %vm2982 = vweird.f32 %v2787
          %vm2983 = vweird.f32 %v2977
          %vm2984 = vmor %vm2982, %vm2983
          %v2985 = vsel %vm2984, %v2977, %v2981
          %v2986 = vand.u32 2147483647, %v2787
          %vm2987 = vcmp.eq.f32.partialorder %v2986, 8.507059e+37
          %v2988 = vand.u32 %v2787, 2147483648
          %v2989 = vor.u32 1.1754944e-38, %v2988
          %v2990 = vsel %vm2987, %v2989, %v2985
          %v2991 = vmul.f32 %v1947, %v2990
          %v2992 = vmul.f32 %v1949, %v2990
          %v2993 = vmul.f32 %v1951, %v2990
          %v2994 = vmul.f32 %v1953, %v2990
          %v2995 = vmul.f32 %v1955, %v2990
          %v2996 = vmul.f32 %v1957, %v2990
          %v2997 = vmul.f32 %v1959, %v2990
          %v2998 = vmul.f32 %v1961, %v2990
          %v2999 = vmul.f32 %v1963, %v2990
          %v3000 = vmul.f32 %v1965, %v2990
          %v3001 = vmul.f32 %v1967, %v2990
          %v3002 = vmul.f32 %v1969, %v2990
          %v3003 = vmul.f32 %v1971, %v2990
          %v3004 = vmul.f32 %v1973, %v2990
          %v3005 = vmul.f32 %v1975, %v2990
          %v3006 = vmul.f32 %v1977, %v2990
          %v3007 = vrcp.pop %v2788
          %v3008 = vmul.f32 %v2788, %v3007
          %v3009 = vsub.f32 1.0, %v3008
          %v3010 = vmul.f32 %v3007, %v3009
          %v3011 = vadd.f32 %v3007, %v3010
          %vm3012 = vweird.f32 %v2788
          %vm3013 = vweird.f32 %v3007
          %vm3014 = vmor %vm3012, %vm3013
          %v3015 = vsel %vm3014, %v3007, %v3011
          %v3016 = vand.u32 2147483647, %v2788
          %vm3017 = vcmp.eq.f32.partialorder %v3016, 8.507059e+37
          %v3018 = vand.u32 %v2788, 2147483648
          %v3019 = vor.u32 1.1754944e-38, %v3018
          %v3020 = vsel %vm3017, %v3019, %v3015
          %v3021 = vmul.f32 %v1979, %v3020
          %v3022 = vmul.f32 %v1981, %v3020
          %v3023 = vmul.f32 %v1983, %v3020
          %v3024 = vmul.f32 %v1985, %v3020
          %v3025 = vmul.f32 %v1987, %v3020
          %v3026 = vmul.f32 %v1989, %v3020
          %v3027 = vmul.f32 %v1991, %v3020
          %v3028 = vmul.f32 %v1993, %v3020
          %v3029 = vmul.f32 %v1995, %v3020
          %v3030 = vmul.f32 %v1997, %v3020
          %v3031 = vmul.f32 %v1999, %v3020
          %v3032 = vmul.f32 %v2001, %v3020
          %v3033 = vmul.f32 %v2003, %v3020
          %v3034 = vmul.f32 %v2005, %v3020
          %v3035 = vmul.f32 %v2007, %v3020
          %v3036 = vmul.f32 %v2009, %v3020
          %3165 = vset.pattern.permute.xlu0 0
          %3166 = vperm.xlu0 %3165, %v2811
          %v3167 = vpop.permute.xlu0 %3166
          %3168 = vset.pattern.permute.xlu0 0
          %3169 = vperm.xlu0 %3168, %v2812
          %v3170 = vpop.permute.xlu0 %3169
          %3171 = vset.pattern.permute.xlu0 0
          %3172 = vperm.xlu0 %3171, %v2813
          %v3173 = vpop.permute.xlu0 %3172
          %3174 = vset.pattern.permute.xlu0 0
          %3175 = vperm.xlu0 %3174, %v2814
          %v3176 = vpop.permute.xlu0 %3175
          %3177 = vset.pattern.permute.xlu0 0
          %3178 = vperm.xlu0 %3177, %v2815
          %v3179 = vpop.permute.xlu0 %3178
          %3180 = vset.pattern.permute.xlu0 0
          %3181 = vperm.xlu0 %3180, %v2816
          %v3182 = vpop.permute.xlu0 %3181
          %3183 = vset.pattern.permute.xlu0 0
          %3184 = vperm.xlu0 %3183, %v2817
          %v3185 = vpop.permute.xlu0 %3184
          %3186 = vset.pattern.permute.xlu0 0
          %3187 = vperm.xlu0 %3186, %v2818
          %v3188 = vpop.permute.xlu0 %3187
          %3189 = vset.pattern.permute.xlu0 0
          %3190 = vperm.xlu0 %3189, %v2819
          %v3191 = vpop.permute.xlu0 %3190
          %3192 = vset.pattern.permute.xlu0 0
          %3193 = vperm.xlu0 %3192, %v2820
          %v3194 = vpop.permute.xlu0 %3193
          %3195 = vset.pattern.permute.xlu0 0
          %3196 = vperm.xlu0 %3195, %v2821
          %v3197 = vpop.permute.xlu0 %3196
          %3198 = vset.pattern.permute.xlu0 0
          %3199 = vperm.xlu0 %3198, %v2822
          %v3200 = vpop.permute.xlu0 %3199
          %3201 = vset.pattern.permute.xlu0 0
          %3202 = vperm.xlu0 %3201, %v2823
          %v3203 = vpop.permute.xlu0 %3202
          %3204 = vset.pattern.permute.xlu0 0
          %3205 = vperm.xlu0 %3204, %v2824
          %v3206 = vpop.permute.xlu0 %3205
          %3207 = vset.pattern.permute.xlu0 0
          %3208 = vperm.xlu0 %3207, %v2825
          %v3209 = vpop.permute.xlu0 %3208
          %3210 = vset.pattern.permute.xlu0 0
          %3211 = vperm.xlu0 %3210, %v2826
          %v3212 = vpop.permute.xlu0 %3211
          %3213 = vset.pattern.permute.xlu0 0
          %3214 = vperm.xlu0 %3213, %v2841
          %v3215 = vpop.permute.xlu0 %3214
          %3216 = vset.pattern.permute.xlu0 0
          %3217 = vperm.xlu0 %3216, %v2842
          %v3218 = vpop.permute.xlu0 %3217
          %3219 = vset.pattern.permute.xlu0 0
          %3220 = vperm.xlu0 %3219, %v2843
          %v3221 = vpop.permute.xlu0 %3220
          %3222 = vset.pattern.permute.xlu0 0
          %3223 = vperm.xlu0 %3222, %v2844
          %v3224 = vpop.permute.xlu0 %3223
          %3225 = vset.pattern.permute.xlu0 0
          %3226 = vperm.xlu0 %3225, %v2845
          %v3227 = vpop.permute.xlu0 %3226
          %3228 = vset.pattern.permute.xlu0 0
          %3229 = vperm.xlu0 %3228, %v2846
          %v3230 = vpop.permute.xlu0 %3229
          %3231 = vset.pattern.permute.xlu0 0
          %3232 = vperm.xlu0 %3231, %v2847
          %v3233 = vpop.permute.xlu0 %3232
          %3234 = vset.pattern.permute.xlu0 0
          %3235 = vperm.xlu0 %3234, %v2848
          %v3236 = vpop.permute.xlu0 %3235
          %3237 = vset.pattern.permute.xlu0 0
          %3238 = vperm.xlu0 %3237, %v2849
          %v3239 = vpop.permute.xlu0 %3238
          %3240 = vset.pattern.permute.xlu0 0
          %3241 = vperm.xlu0 %3240, %v2850
          %v3242 = vpop.permute.xlu0 %3241
          %3243 = vset.pattern.permute.xlu0 0
          %3244 = vperm.xlu0 %3243, %v2851
          %v3245 = vpop.permute.xlu0 %3244
          %3246 = vset.pattern.permute.xlu0 0
          %3247 = vperm.xlu0 %3246, %v2852
          %v3248 = vpop.permute.xlu0 %3247
          %3249 = vset.pattern.permute.xlu0 0
          %3250 = vperm.xlu0 %3249, %v2853
          %v3251 = vpop.permute.xlu0 %3250
          %3252 = vset.pattern.permute.xlu0 0
          %3253 = vperm.xlu0 %3252, %v2854
          %v3254 = vpop.permute.xlu0 %3253
          %3255 = vset.pattern.permute.xlu0 0
          %3256 = vperm.xlu0 %3255, %v2855
          %v3257 = vpop.permute.xlu0 %3256
          %3258 = vset.pattern.permute.xlu0 0
          %3259 = vperm.xlu0 %3258, %v2856
          %v3260 = vpop.permute.xlu0 %3259
          %3261 = vset.pattern.permute.xlu0 0
          %3262 = vperm.xlu0 %3261, %v2871
          %v3263 = vpop.permute.xlu0 %3262
          %3264 = vset.pattern.permute.xlu0 0
          %3265 = vperm.xlu0 %3264, %v2872
          %v3266 = vpop.permute.xlu0 %3265
          %3267 = vset.pattern.permute.xlu0 0
          %3268 = vperm.xlu0 %3267, %v2873
          %v3269 = vpop.permute.xlu0 %3268
          %3270 = vset.pattern.permute.xlu0 0
          %3271 = vperm.xlu0 %3270, %v2874
          %v3272 = vpop.permute.xlu0 %3271
          %3273 = vset.pattern.permute.xlu0 0
          %3274 = vperm.xlu0 %3273, %v2875
          %v3275 = vpop.permute.xlu0 %3274
          %3276 = vset.pattern.permute.xlu0 0
          %3277 = vperm.xlu0 %3276, %v2876
          %v3278 = vpop.permute.xlu0 %3277
          %3279 = vset.pattern.permute.xlu0 0
          %3280 = vperm.xlu0 %3279, %v2877
          %v3281 = vpop.permute.xlu0 %3280
          %3282 = vset.pattern.permute.xlu0 0
          %3283 = vperm.xlu0 %3282, %v2878
          %v3284 = vpop.permute.xlu0 %3283
          %3285 = vset.pattern.permute.xlu0 0
          %3286 = vperm.xlu0 %3285, %v2879
          %v3287 = vpop.permute.xlu0 %3286
          %3288 = vset.pattern.permute.xlu0 0
          %3289 = vperm.xlu0 %3288, %v2880
          %v3290 = vpop.permute.xlu0 %3289
          %3291 = vset.pattern.permute.xlu0 0
          %3292 = vperm.xlu0 %3291, %v2881
          %v3293 = vpop.permute.xlu0 %3292
          %3294 = vset.pattern.permute.xlu0 0
          %3295 = vperm.xlu0 %3294, %v2882
          %v3296 = vpop.permute.xlu0 %3295
          %3297 = vset.pattern.permute.xlu0 0
          %3298 = vperm.xlu0 %3297, %v2883
          %v3299 = vpop.permute.xlu0 %3298
          %3300 = vset.pattern.permute.xlu0 0
          %3301 = vperm.xlu0 %3300, %v2884
          %v3302 = vpop.permute.xlu0 %3301
          %3303 = vset.pattern.permute.xlu0 0
          %3304 = vperm.xlu0 %3303, %v2885
          %v3305 = vpop.permute.xlu0 %3304
          %3306 = vset.pattern.permute.xlu0 0
          %3307 = vperm.xlu0 %3306, %v2886
          %v3308 = vpop.permute.xlu0 %3307
          %3309 = vset.pattern.permute.xlu0 0
          %3310 = vperm.xlu0 %3309, %v2901
          %v3311 = vpop.permute.xlu0 %3310
          %3312 = vset.pattern.permute.xlu0 0
          %3313 = vperm.xlu0 %3312, %v2902
          %v3314 = vpop.permute.xlu0 %3313
          %3315 = vset.pattern.permute.xlu0 0
          %3316 = vperm.xlu0 %3315, %v2903
          %v3317 = vpop.permute.xlu0 %3316
          %3318 = vset.pattern.permute.xlu0 0
          %3319 = vperm.xlu0 %3318, %v2904
          %v3320 = vpop.permute.xlu0 %3319
          %3321 = vset.pattern.permute.xlu0 0
          %3322 = vperm.xlu0 %3321, %v2905
          %v3323 = vpop.permute.xlu0 %3322
          %3324 = vset.pattern.permute.xlu0 0
          %3325 = vperm.xlu0 %3324, %v2906
          %v3326 = vpop.permute.xlu0 %3325
          %3327 = vset.pattern.permute.xlu0 0
          %3328 = vperm.xlu0 %3327, %v2907
          %v3329 = vpop.permute.xlu0 %3328
          %3330 = vset.pattern.permute.xlu0 0
          %3331 = vperm.xlu0 %3330, %v2908
          %v3332 = vpop.permute.xlu0 %3331
          %3333 = vset.pattern.permute.xlu0 0
          %3334 = vperm.xlu0 %3333, %v2909
          %v3335 = vpop.permute.xlu0 %3334
          %3336 = vset.pattern.permute.xlu0 0
          %3337 = vperm.xlu0 %3336, %v2910
          %v3338 = vpop.permute.xlu0 %3337
          %3339 = vset.pattern.permute.xlu0 0
          %3340 = vperm.xlu0 %3339, %v2911
          %v3341 = vpop.permute.xlu0 %3340
          %3342 = vset.pattern.permute.xlu0 0
          %3343 = vperm.xlu0 %3342, %v2912
          %v3344 = vpop.permute.xlu0 %3343
          %3345 = vset.pattern.permute.xlu0 0
          %3346 = vperm.xlu0 %3345, %v2913
          %v3347 = vpop.permute.xlu0 %3346
          %3348 = vset.pattern.permute.xlu0 0
          %3349 = vperm.xlu0 %3348, %v2914
          %v3350 = vpop.permute.xlu0 %3349
          %3351 = vset.pattern.permute.xlu0 0
          %3352 = vperm.xlu0 %3351, %v2915
          %v3353 = vpop.permute.xlu0 %3352
          %3354 = vset.pattern.permute.xlu0 0
          %3355 = vperm.xlu0 %3354, %v2916
          %v3356 = vpop.permute.xlu0 %3355
          %3357 = vset.pattern.permute.xlu0 0
          %3358 = vperm.xlu0 %3357, %v2931
          %v3359 = vpop.permute.xlu0 %3358
          %3360 = vset.pattern.permute.xlu0 0
          %3361 = vperm.xlu0 %3360, %v2932
          %v3362 = vpop.permute.xlu0 %3361
          %3363 = vset.pattern.permute.xlu0 0
          %3364 = vperm.xlu0 %3363, %v2933
          %v3365 = vpop.permute.xlu0 %3364
          %3366 = vset.pattern.permute.xlu0 0
          %3367 = vperm.xlu0 %3366, %v2934
          %v3368 = vpop.permute.xlu0 %3367
          %3369 = vset.pattern.permute.xlu0 0
          %3370 = vperm.xlu0 %3369, %v2935
          %v3371 = vpop.permute.xlu0 %3370
          %3372 = vset.pattern.permute.xlu0 0
          %3373 = vperm.xlu0 %3372, %v2936
          %v3374 = vpop.permute.xlu0 %3373
          %3375 = vset.pattern.permute.xlu0 0
          %3376 = vperm.xlu0 %3375, %v2937
          %v3377 = vpop.permute.xlu0 %3376
          %3378 = vset.pattern.permute.xlu0 0
          %3379 = vperm.xlu0 %3378, %v2938
          %v3380 = vpop.permute.xlu0 %3379
          %3381 = vset.pattern.permute.xlu0 0
          %3382 = vperm.xlu0 %3381, %v2939
          %v3383 = vpop.permute.xlu0 %3382
          %3384 = vset.pattern.permute.xlu0 0
          %3385 = vperm.xlu0 %3384, %v2940
          %v3386 = vpop.permute.xlu0 %3385
          %3387 = vset.pattern.permute.xlu0 0
          %3388 = vperm.xlu0 %3387, %v2941
          %v3389 = vpop.permute.xlu0 %3388
          %3390 = vset.pattern.permute.xlu0 0
          %3391 = vperm.xlu0 %3390, %v2942
          %v3392 = vpop.permute.xlu0 %3391
          %3393 = vset.pattern.permute.xlu0 0
          %3394 = vperm.xlu0 %3393, %v2943
          %v3395 = vpop.permute.xlu0 %3394
          %3396 = vset.pattern.permute.xlu0 0
          %3397 = vperm.xlu0 %3396, %v2944
          %v3398 = vpop.permute.xlu0 %3397
          %3399 = vset.pattern.permute.xlu0 0
          %3400 = vperm.xlu0 %3399, %v2945
          %v3401 = vpop.permute.xlu0 %3400
          %3402 = vset.pattern.permute.xlu0 0
          %3403 = vperm.xlu0 %3402, %v2946
          %v3404 = vpop.permute.xlu0 %3403
          %3405 = vset.pattern.permute.xlu0 0
          %3406 = vperm.xlu0 %3405, %v2961
          %v3407 = vpop.permute.xlu0 %3406
          %3408 = vset.pattern.permute.xlu0 0
          %3409 = vperm.xlu0 %3408, %v2962
          %v3410 = vpop.permute.xlu0 %3409
          %3411 = vset.pattern.permute.xlu0 0
          %3412 = vperm.xlu0 %3411, %v2963
          %v3413 = vpop.permute.xlu0 %3412
          %3414 = vset.pattern.permute.xlu0 0
          %3415 = vperm.xlu0 %3414, %v2964
          %v3416 = vpop.permute.xlu0 %3415
          %3417 = vset.pattern.permute.xlu0 0
          %3418 = vperm.xlu0 %3417, %v2965
          %v3419 = vpop.permute.xlu0 %3418
          %3420 = vset.pattern.permute.xlu0 0
          %3421 = vperm.xlu0 %3420, %v2966
          %v3422 = vpop.permute.xlu0 %3421
          %3423 = vset.pattern.permute.xlu0 0
          %3424 = vperm.xlu0 %3423, %v2967
          %v3425 = vpop.permute.xlu0 %3424
          %3426 = vset.pattern.permute.xlu0 0
          %3427 = vperm.xlu0 %3426, %v2968
          %v3428 = vpop.permute.xlu0 %3427
          %3429 = vset.pattern.permute.xlu0 0
          %3430 = vperm.xlu0 %3429, %v2969
          %v3431 = vpop.permute.xlu0 %3430
          %3432 = vset.pattern.permute.xlu0 0
          %3433 = vperm.xlu0 %3432, %v2970
          %v3434 = vpop.permute.xlu0 %3433
          %3435 = vset.pattern.permute.xlu0 0
          %3436 = vperm.xlu0 %3435, %v2971
          %v3437 = vpop.permute.xlu0 %3436
          %3438 = vset.pattern.permute.xlu0 0
          %3439 = vperm.xlu0 %3438, %v2972
          %v3440 = vpop.permute.xlu0 %3439
          %3441 = vset.pattern.permute.xlu0 0
          %3442 = vperm.xlu0 %3441, %v2973
          %v3443 = vpop.permute.xlu0 %3442
          %3444 = vset.pattern.permute.xlu0 0
          %3445 = vperm.xlu0 %3444, %v2974
          %v3446 = vpop.permute.xlu0 %3445
          %3447 = vset.pattern.permute.xlu0 0
          %3448 = vperm.xlu0 %3447, %v2975
          %v3449 = vpop.permute.xlu0 %3448
          %3450 = vset.pattern.permute.xlu0 0
          %3451 = vperm.xlu0 %3450, %v2976
          %v3452 = vpop.permute.xlu0 %3451
          %3453 = vset.pattern.permute.xlu0 0
          %3454 = vperm.xlu0 %3453, %v2991
          %v3455 = vpop.permute.xlu0 %3454
          %3456 = vset.pattern.permute.xlu0 0
          %3457 = vperm.xlu0 %3456, %v2992
          %v3458 = vpop.permute.xlu0 %3457
          %3459 = vset.pattern.permute.xlu0 0
          %3460 = vperm.xlu0 %3459, %v2993
          %v3461 = vpop.permute.xlu0 %3460
          %3462 = vset.pattern.permute.xlu0 0
          %3463 = vperm.xlu0 %3462, %v2994
          %v3464 = vpop.permute.xlu0 %3463
          %3465 = vset.pattern.permute.xlu0 0
          %3466 = vperm.xlu0 %3465, %v2995
          %v3467 = vpop.permute.xlu0 %3466
          %3468 = vset.pattern.permute.xlu0 0
          %3469 = vperm.xlu0 %3468, %v2996
          %v3470 = vpop.permute.xlu0 %3469
          %3471 = vset.pattern.permute.xlu0 0
          %3472 = vperm.xlu0 %3471, %v2997
          %v3473 = vpop.permute.xlu0 %3472
          %3474 = vset.pattern.permute.xlu0 0
          %3475 = vperm.xlu0 %3474, %v2998
          %v3476 = vpop.permute.xlu0 %3475
          %3477 = vset.pattern.permute.xlu0 0
          %3478 = vperm.xlu0 %3477, %v2999
          %v3479 = vpop.permute.xlu0 %3478
          %3480 = vset.pattern.permute.xlu0 0
          %3481 = vperm.xlu0 %3480, %v3000
          %v3482 = vpop.permute.xlu0 %3481
          %3483 = vset.pattern.permute.xlu0 0
          %3484 = vperm.xlu0 %3483, %v3001
          %v3485 = vpop.permute.xlu0 %3484
          %3486 = vset.pattern.permute.xlu0 0
          %3487 = vperm.xlu0 %3486, %v3002
          %v3488 = vpop.permute.xlu0 %3487
          %3489 = vset.pattern.permute.xlu0 0
          %3490 = vperm.xlu0 %3489, %v3003
          %v3491 = vpop.permute.xlu0 %3490
          %3492 = vset.pattern.permute.xlu0 0
          %3493 = vperm.xlu0 %3492, %v3004
          %v3494 = vpop.permute.xlu0 %3493
          %3495 = vset.pattern.permute.xlu0 0
          %3496 = vperm.xlu0 %3495, %v3005
          %v3497 = vpop.permute.xlu0 %3496
          %3498 = vset.pattern.permute.xlu0 0
          %3499 = vperm.xlu0 %3498, %v3006
          %v3500 = vpop.permute.xlu0 %3499
          %3501 = vset.pattern.permute.xlu0 0
          %3502 = vperm.xlu0 %3501, %v3021
          %v3503 = vpop.permute.xlu0 %3502
          %3504 = vset.pattern.permute.xlu0 0
          %3505 = vperm.xlu0 %3504, %v3022
          %v3506 = vpop.permute.xlu0 %3505
          %3507 = vset.pattern.permute.xlu0 0
          %3508 = vperm.xlu0 %3507, %v3023
          %v3509 = vpop.permute.xlu0 %3508
          %3510 = vset.pattern.permute.xlu0 0
          %3511 = vperm.xlu0 %3510, %v3024
          %v3512 = vpop.permute.xlu0 %3511
          %3513 = vset.pattern.permute.xlu0 0
          %3514 = vperm.xlu0 %3513, %v3025
          %v3515 = vpop.permute.xlu0 %3514
          %3516 = vset.pattern.permute.xlu0 0
          %3517 = vperm.xlu0 %3516, %v3026
          %v3518 = vpop.permute.xlu0 %3517
          %3519 = vset.pattern.permute.xlu0 0
          %3520 = vperm.xlu0 %3519, %v3027
          %v3521 = vpop.permute.xlu0 %3520
          %3522 = vset.pattern.permute.xlu0 0
          %3523 = vperm.xlu0 %3522, %v3028
          %v3524 = vpop.permute.xlu0 %3523
          %3525 = vset.pattern.permute.xlu0 0
          %3526 = vperm.xlu0 %3525, %v3029
          %v3527 = vpop.permute.xlu0 %3526
          %3528 = vset.pattern.permute.xlu0 0
          %3529 = vperm.xlu0 %3528, %v3030
          %v3530 = vpop.permute.xlu0 %3529
          %3531 = vset.pattern.permute.xlu0 0
          %3532 = vperm.xlu0 %3531, %v3031
          %v3533 = vpop.permute.xlu0 %3532
          %3534 = vset.pattern.permute.xlu0 0
          %3535 = vperm.xlu0 %3534, %v3032
          %v3536 = vpop.permute.xlu0 %3535
          %3537 = vset.pattern.permute.xlu0 0
          %3538 = vperm.xlu0 %3537, %v3033
          %v3539 = vpop.permute.xlu0 %3538
          %3540 = vset.pattern.permute.xlu0 0
          %3541 = vperm.xlu0 %3540, %v3034
          %v3542 = vpop.permute.xlu0 %3541
          %3543 = vset.pattern.permute.xlu0 0
          %3544 = vperm.xlu0 %3543, %v3035
          %v3545 = vpop.permute.xlu0 %3544
          %3546 = vset.pattern.permute.xlu0 0
          %3547 = vperm.xlu0 %3546, %v3036
          %v3548 = vpop.permute.xlu0 %3547
          %v3549 = vperm.slane %v3167, %v1313
          %v3550 = vperm.slane %v3170, %v1315
          %v3551 = vsel %vm1317, %v3550, %v3549
          %v3552 = vperm.slane %v3173, %v1319
          %v3553 = vsel %vm1321, %v3552, %v3551
          %v3554 = vperm.slane %v3176, %v1323
          %v3555 = vsel %vm1325, %v3554, %v3553
          %v3556 = vperm.slane %v3179, %v1327
          %v3557 = vsel %vm1329, %v3556, %v3555
          %v3558 = vperm.slane %v3182, %v1331
          %v3559 = vsel %vm1333, %v3558, %v3557
          %v3560 = vperm.slane %v3185, %v1335
          %v3561 = vsel %vm1337, %v3560, %v3559
          %v3562 = vperm.slane %v3188, %v1339
          %v3563 = vsel %vm1341, %v3562, %v3561
          %v3564 = vperm.slane %v3191, %v1343
          %v3565 = vsel %vm1345, %v3564, %v3563
          %v3566 = vperm.slane %v3194, %v1347
          %v3567 = vsel %vm1349, %v3566, %v3565
          %v3568 = vperm.slane %v3197, %v1351
          %v3569 = vsel %vm1353, %v3568, %v3567
          %v3570 = vperm.slane %v3200, %v1355
          %v3571 = vsel %vm1357, %v3570, %v3569
          %v3572 = vperm.slane %v3203, %v1359
          %v3573 = vsel %vm1361, %v3572, %v3571
          %v3574 = vperm.slane %v3206, %v1363
          %v3575 = vsel %vm1365, %v3574, %v3573
          %v3576 = vperm.slane %v3209, %v1367
          %v3577 = vsel %vm1369, %v3576, %v3575
          %v3578 = vperm.slane %v3212, %v1371
          %v3579 = vsel %vm1373, %v3578, %v3577
          %v3580 = vperm.slane %v3215, %v1313
          %v3581 = vperm.slane %v3218, %v1315
          %v3582 = vsel %vm1317, %v3581, %v3580
          %v3583 = vperm.slane %v3221, %v1319
          %v3584 = vsel %vm1321, %v3583, %v3582
          %v3585 = vperm.slane %v3224, %v1323
          %v3586 = vsel %vm1325, %v3585, %v3584
          %v3587 = vperm.slane %v3227, %v1327
          %v3588 = vsel %vm1329, %v3587, %v3586
          %v3589 = vperm.slane %v3230, %v1331
          %v3590 = vsel %vm1333, %v3589, %v3588
          %v3591 = vperm.slane %v3233, %v1335
          %v3592 = vsel %vm1337, %v3591, %v3590
          %v3593 = vperm.slane %v3236, %v1339
          %v3594 = vsel %vm1341, %v3593, %v3592
          %v3595 = vperm.slane %v3239, %v1343
          %v3596 = vsel %vm1345, %v3595, %v3594
          %v3597 = vperm.slane %v3242, %v1347
          %v3598 = vsel %vm1349, %v3597, %v3596
          %v3599 = vperm.slane %v3245, %v1351
          %v3600 = vsel %vm1353, %v3599, %v3598
          %v3601 = vperm.slane %v3248, %v1355
          %v3602 = vsel %vm1357, %v3601, %v3600
          %v3603 = vperm.slane %v3251, %v1359
          %v3604 = vsel %vm1361, %v3603, %v3602
          %v3605 = vperm.slane %v3254, %v1363
          %v3606 = vsel %vm1365, %v3605, %v3604
          %v3607 = vperm.slane %v3257, %v1367
          %v3608 = vsel %vm1369, %v3607, %v3606
          %v3609 = vperm.slane %v3260, %v1371
          %v3610 = vsel %vm1373, %v3609, %v3608
          %v3611 = vperm.slane %v3263, %v1313
          %v3612 = vperm.slane %v3266, %v1315
          %v3613 = vsel %vm1317, %v3612, %v3611
          %v3614 = vperm.slane %v3269, %v1319
          %v3615 = vsel %vm1321, %v3614, %v3613
          %v3616 = vperm.slane %v3272, %v1323
          %v3617 = vsel %vm1325, %v3616, %v3615
          %v3618 = vperm.slane %v3275, %v1327
          %v3619 = vsel %vm1329, %v3618, %v3617
          %v3620 = vperm.slane %v3278, %v1331
          %v3621 = vsel %vm1333, %v3620, %v3619
          %v3622 = vperm.slane %v3281, %v1335
          %v3623 = vsel %vm1337, %v3622, %v3621
          %v3624 = vperm.slane %v3284, %v1339
          %v3625 = vsel %vm1341, %v3624, %v3623
          %v3626 = vperm.slane %v3287, %v1343
          %v3627 = vsel %vm1345, %v3626, %v3625
          %v3628 = vperm.slane %v3290, %v1347
          %v3629 = vsel %vm1349, %v3628, %v3627
          %v3630 = vperm.slane %v3293, %v1351
          %v3631 = vsel %vm1353, %v3630, %v3629
          %v3632 = vperm.slane %v3296, %v1355
          %v3633 = vsel %vm1357, %v3632, %v3631
          %v3634 = vperm.slane %v3299, %v1359
          %v3635 = vsel %vm1361, %v3634, %v3633
          %v3636 = vperm.slane %v3302, %v1363
          %v3637 = vsel %vm1365, %v3636, %v3635
          %v3638 = vperm.slane %v3305, %v1367
          %v3639 = vsel %vm1369, %v3638, %v3637
          %v3640 = vperm.slane %v3308, %v1371
          %v3641 = vsel %vm1373, %v3640, %v3639
          %v3642 = vperm.slane %v3311, %v1313
          %v3643 = vperm.slane %v3314, %v1315
          %v3644 = vsel %vm1317, %v3643, %v3642
          %v3645 = vperm.slane %v3317, %v1319
          %v3646 = vsel %vm1321, %v3645, %v3644
          %v3647 = vperm.slane %v3320, %v1323
          %v3648 = vsel %vm1325, %v3647, %v3646
          %v3649 = vperm.slane %v3323, %v1327
          %v3650 = vsel %vm1329, %v3649, %v3648
          %v3651 = vperm.slane %v3326, %v1331
          %v3652 = vsel %vm1333, %v3651, %v3650
          %v3653 = vperm.slane %v3329, %v1335
          %v3654 = vsel %vm1337, %v3653, %v3652
          %v3655 = vperm.slane %v3332, %v1339
          %v3656 = vsel %vm1341, %v3655, %v3654
          %v3657 = vperm.slane %v3335, %v1343
          %v3658 = vsel %vm1345, %v3657, %v3656
          %v3659 = vperm.slane %v3338, %v1347
          %v3660 = vsel %vm1349, %v3659, %v3658
          %v3661 = vperm.slane %v3341, %v1351
          %v3662 = vsel %vm1353, %v3661, %v3660
          %v3663 = vperm.slane %v3344, %v1355
          %v3664 = vsel %vm1357, %v3663, %v3662
          %v3665 = vperm.slane %v3347, %v1359
          %v3666 = vsel %vm1361, %v3665, %v3664
          %v3667 = vperm.slane %v3350, %v1363
          %v3668 = vsel %vm1365, %v3667, %v3666
          %v3669 = vperm.slane %v3353, %v1367
          %v3670 = vsel %vm1369, %v3669, %v3668
          %v3671 = vperm.slane %v3356, %v1371
          %v3672 = vsel %vm1373, %v3671, %v3670
          %v3673 = vperm.slane %v3359, %v1313
          %v3674 = vperm.slane %v3362, %v1315
          %v3675 = vsel %vm1317, %v3674, %v3673
          %v3676 = vperm.slane %v3365, %v1319
          %v3677 = vsel %vm1321, %v3676, %v3675
          %v3678 = vperm.slane %v3368, %v1323
          %v3679 = vsel %vm1325, %v3678, %v3677
          %v3680 = vperm.slane %v3371, %v1327
          %v3681 = vsel %vm1329, %v3680, %v3679
          %v3682 = vperm.slane %v3374, %v1331
          %v3683 = vsel %vm1333, %v3682, %v3681
          %v3684 = vperm.slane %v3377, %v1335
          %v3685 = vsel %vm1337, %v3684, %v3683
          %v3686 = vperm.slane %v3380, %v1339
          %v3687 = vsel %vm1341, %v3686, %v3685
          %v3688 = vperm.slane %v3383, %v1343
          %v3689 = vsel %vm1345, %v3688, %v3687
          %v3690 = vperm.slane %v3386, %v1347
          %v3691 = vsel %vm1349, %v3690, %v3689
          %v3692 = vperm.slane %v3389, %v1351
          %v3693 = vsel %vm1353, %v3692, %v3691
          %v3694 = vperm.slane %v3392, %v1355
          %v3695 = vsel %vm1357, %v3694, %v3693
          %v3696 = vperm.slane %v3395, %v1359
          %v3697 = vsel %vm1361, %v3696, %v3695
          %v3698 = vperm.slane %v3398, %v1363
          %v3699 = vsel %vm1365, %v3698, %v3697
          %v3700 = vperm.slane %v3401, %v1367
          %v3701 = vsel %vm1369, %v3700, %v3699
          %v3702 = vperm.slane %v3404, %v1371
          %v3703 = vsel %vm1373, %v3702, %v3701
          %v3704 = vperm.slane %v3407, %v1313
          %v3705 = vperm.slane %v3410, %v1315
          %v3706 = vsel %vm1317, %v3705, %v3704
          %v3707 = vperm.slane %v3413, %v1319
          %v3708 = vsel %vm1321, %v3707, %v3706
          %v3709 = vperm.slane %v3416, %v1323
          %v3710 = vsel %vm1325, %v3709, %v3708
          %v3711 = vperm.slane %v3419, %v1327
          %v3712 = vsel %vm1329, %v3711, %v3710
          %v3713 = vperm.slane %v3422, %v1331
          %v3714 = vsel %vm1333, %v3713, %v3712
          %v3715 = vperm.slane %v3425, %v1335
          %v3716 = vsel %vm1337, %v3715, %v3714
          %v3717 = vperm.slane %v3428, %v1339
          %v3718 = vsel %vm1341, %v3717, %v3716
          %v3719 = vperm.slane %v3431, %v1343
          %v3720 = vsel %vm1345, %v3719, %v3718
          %v3721 = vperm.slane %v3434, %v1347
          %v3722 = vsel %vm1349, %v3721, %v3720
          %v3723 = vperm.slane %v3437, %v1351
          %v3724 = vsel %vm1353, %v3723, %v3722
          %v3725 = vperm.slane %v3440, %v1355
          %v3726 = vsel %vm1357, %v3725, %v3724
          %v3727 = vperm.slane %v3443, %v1359
          %v3728 = vsel %vm1361, %v3727, %v3726
          %v3729 = vperm.slane %v3446, %v1363
          %v3730 = vsel %vm1365, %v3729, %v3728
          %v3731 = vperm.slane %v3449, %v1367
          %v3732 = vsel %vm1369, %v3731, %v3730
          %v3733 = vperm.slane %v3452, %v1371
          %v3734 = vsel %vm1373, %v3733, %v3732
          %v3735 = vperm.slane %v3455, %v1313
          %v3736 = vperm.slane %v3458, %v1315
          %v3737 = vsel %vm1317, %v3736, %v3735
          %v3738 = vperm.slane %v3461, %v1319
          %v3739 = vsel %vm1321, %v3738, %v3737
          %v3740 = vperm.slane %v3464, %v1323
          %v3741 = vsel %vm1325, %v3740, %v3739
          %v3742 = vperm.slane %v3467, %v1327
          %v3743 = vsel %vm1329, %v3742, %v3741
          %v3744 = vperm.slane %v3470, %v1331
          %v3745 = vsel %vm1333, %v3744, %v3743
          %v3746 = vperm.slane %v3473, %v1335
          %v3747 = vsel %vm1337, %v3746, %v3745
          %v3748 = vperm.slane %v3476, %v1339
          %v3749 = vsel %vm1341, %v3748, %v3747
          %v3750 = vperm.slane %v3479, %v1343
          %v3751 = vsel %vm1345, %v3750, %v3749
          %v3752 = vperm.slane %v3482, %v1347
          %v3753 = vsel %vm1349, %v3752, %v3751
          %v3754 = vperm.slane %v3485, %v1351
          %v3755 = vsel %vm1353, %v3754, %v3753
          %v3756 = vperm.slane %v3488, %v1355
          %v3757 = vsel %vm1357, %v3756, %v3755
          %v3758 = vperm.slane %v3491, %v1359
          %v3759 = vsel %vm1361, %v3758, %v3757
          %v3760 = vperm.slane %v3494, %v1363
          %v3761 = vsel %vm1365, %v3760, %v3759
          %v3762 = vperm.slane %v3497, %v1367
          %v3763 = vsel %vm1369, %v3762, %v3761
          %v3764 = vperm.slane %v3500, %v1371
          %v3765 = vsel %vm1373, %v3764, %v3763
          %v3766 = vperm.slane %v3503, %v1313
          %v3767 = vperm.slane %v3506, %v1315
          %v3768 = vsel %vm1317, %v3767, %v3766
          %v3769 = vperm.slane %v3509, %v1319
          %v3770 = vsel %vm1321, %v3769, %v3768
          %v3771 = vperm.slane %v3512, %v1323
          %v3772 = vsel %vm1325, %v3771, %v3770
          %v3773 = vperm.slane %v3515, %v1327
          %v3774 = vsel %vm1329, %v3773, %v3772
          %v3775 = vperm.slane %v3518, %v1331
          %v3776 = vsel %vm1333, %v3775, %v3774
          %v3777 = vperm.slane %v3521, %v1335
          %v3778 = vsel %vm1337, %v3777, %v3776
          %v3779 = vperm.slane %v3524, %v1339
          %v3780 = vsel %vm1341, %v3779, %v3778
          %v3781 = vperm.slane %v3527, %v1343
          %v3782 = vsel %vm1345, %v3781, %v3780
          %v3783 = vperm.slane %v3530, %v1347
          %v3784 = vsel %vm1349, %v3783, %v3782
          %v3785 = vperm.slane %v3533, %v1351
          %v3786 = vsel %vm1353, %v3785, %v3784
          %v3787 = vperm.slane %v3536, %v1355
          %v3788 = vsel %vm1357, %v3787, %v3786
          %v3789 = vperm.slane %v3539, %v1359
          %v3790 = vsel %vm1361, %v3789, %v3788
          %v3791 = vperm.slane %v3542, %v1363
          %v3792 = vsel %vm1365, %v3791, %v3790
          %v3793 = vperm.slane %v3545, %v1367
          %v3794 = vsel %vm1369, %v3793, %v3792
          %v3795 = vperm.slane %v3548, %v1371
          %v3796 = vsel %vm1373, %v3795, %v3794
          %v3797 = vsel %vm1592, %v3610, %v3579
          %v3798 = vsel %vm1594, %v3641, %v3797
          %v3799 = vsel %vm1596, %v3672, %v3798
          %v3800 = vsel %vm1598, %v3703, %v3799
          %v3801 = vsel %vm1600, %v3734, %v3800
          %v3802 = vsel %vm1602, %v3765, %v3801
          %v3803 = vsel %vm1604, %v3796, %v3802
          %3805 = vst [vmem:[#allocation20] sm:$0xff] %v3803
          %v3934 = vmul.f32 %v3167, %v648
          %v3935 = vmul.f32 %v3170, %v649
          %v3936 = vmul.f32 %v3173, %v650
          %v3937 = vmul.f32 %v3176, %v651
          %v3938 = vmul.f32 %v3179, %v652
          %v3939 = vmul.f32 %v3182, %v653
          %v3940 = vmul.f32 %v3185, %v654
          %v3941 = vmul.f32 %v3188, %v655
          %v3942 = vmul.f32 %v3191, %v656
          %v3943 = vmul.f32 %v3194, %v657
          %v3944 = vmul.f32 %v3197, %v658
          %v3945 = vmul.f32 %v3200, %v659
          %v3946 = vmul.f32 %v3203, %v660
          %v3947 = vmul.f32 %v3206, %v661
          %v3948 = vmul.f32 %v3209, %v662
          %v3949 = vmul.f32 %v3212, %v663
          %v3950 = vmul.f32 %v3215, %v664
          %v3951 = vmul.f32 %v3218, %v665
          %v3952 = vmul.f32 %v3221, %v666
          %v3953 = vmul.f32 %v3224, %v667
          %v3954 = vmul.f32 %v3227, %v668
          %v3955 = vmul.f32 %v3230, %v669
          %v3956 = vmul.f32 %v3233, %v670
          %v3957 = vmul.f32 %v3236, %v671
          %v3958 = vmul.f32 %v3239, %v672
          %v3959 = vmul.f32 %v3242, %v673
          %v3960 = vmul.f32 %v3245, %v674
          %v3961 = vmul.f32 %v3248, %v675
          %v3962 = vmul.f32 %v3251, %v676
          %v3963 = vmul.f32 %v3254, %v677
          %v3964 = vmul.f32 %v3257, %v678
          %v3965 = vmul.f32 %v3260, %v679
          %v3966 = vmul.f32 %v3263, %v680
          %v3967 = vmul.f32 %v3266, %v681
          %v3968 = vmul.f32 %v3269, %v682
          %v3969 = vmul.f32 %v3272, %v683
          %v3970 = vmul.f32 %v3275, %v684
          %v3971 = vmul.f32 %v3278, %v685
          %v3972 = vmul.f32 %v3281, %v686
          %v3973 = vmul.f32 %v3284, %v687
          %v3974 = vmul.f32 %v3287, %v688
          %v3975 = vmul.f32 %v3290, %v689
          %v3976 = vmul.f32 %v3293, %v690
          %v3977 = vmul.f32 %v3296, %v691
          %v3978 = vmul.f32 %v3299, %v692
          %v3979 = vmul.f32 %v3302, %v693
          %v3980 = vmul.f32 %v3305, %v694
          %v3981 = vmul.f32 %v3308, %v695
          %v3982 = vmul.f32 %v3311, %v696
          %v3983 = vmul.f32 %v3314, %v697
          %v3984 = vmul.f32 %v3317, %v698
          %v3985 = vmul.f32 %v3320, %v699
          %v3986 = vmul.f32 %v3323, %v700
          %v3987 = vmul.f32 %v3326, %v701
          %v3988 = vmul.f32 %v3329, %v702
          %v3989 = vmul.f32 %v3332, %v703
          %v3990 = vmul.f32 %v3335, %v704
          %v3991 = vmul.f32 %v3338, %v705
          %v3992 = vmul.f32 %v3341, %v706
          %v3993 = vmul.f32 %v3344, %v707
          %v3994 = vmul.f32 %v3347, %v708
          %v3995 = vmul.f32 %v3350, %v709
          %v3996 = vmul.f32 %v3353, %v710
          %v3997 = vmul.f32 %v3356, %v711
          %v3998 = vmul.f32 %v3359, %v712
          %v3999 = vmul.f32 %v3362, %v713
          %v4000 = vmul.f32 %v3365, %v714
          %v4001 = vmul.f32 %v3368, %v715
          %v4002 = vmul.f32 %v3371, %v716
          %v4003 = vmul.f32 %v3374, %v717
          %v4004 = vmul.f32 %v3377, %v718
          %v4005 = vmul.f32 %v3380, %v719
          %v4006 = vmul.f32 %v3383, %v720
          %v4007 = vmul.f32 %v3386, %v721
          %v4008 = vmul.f32 %v3389, %v722
          %v4009 = vmul.f32 %v3392, %v723
          %v4010 = vmul.f32 %v3395, %v724
          %v4011 = vmul.f32 %v3398, %v725
          %v4012 = vmul.f32 %v3401, %v726
          %v4013 = vmul.f32 %v3404, %v727
          %v4014 = vmul.f32 %v3407, %v728
          %v4015 = vmul.f32 %v3410, %v729
          %v4016 = vmul.f32 %v3413, %v730
          %v4017 = vmul.f32 %v3416, %v731
          %v4018 = vmul.f32 %v3419, %v732
          %v4019 = vmul.f32 %v3422, %v733
          %v4020 = vmul.f32 %v3425, %v734
          %v4021 = vmul.f32 %v3428, %v735
          %v4022 = vmul.f32 %v3431, %v736
          %v4023 = vmul.f32 %v3434, %v737
          %v4024 = vmul.f32 %v3437, %v738
          %v4025 = vmul.f32 %v3440, %v739
          %v4026 = vmul.f32 %v3443, %v740
          %v4027 = vmul.f32 %v3446, %v741
          %v4028 = vmul.f32 %v3449, %v742
          %v4029 = vmul.f32 %v3452, %v743
          %v4030 = vmul.f32 %v3455, %v744
          %v4031 = vmul.f32 %v3458, %v745
          %v4032 = vmul.f32 %v3461, %v746
          %v4033 = vmul.f32 %v3464, %v747
          %v4034 = vmul.f32 %v3467, %v748
          %v4035 = vmul.f32 %v3470, %v749
          %v4036 = vmul.f32 %v3473, %v750
          %v4037 = vmul.f32 %v3476, %v751
          %v4038 = vmul.f32 %v3479, %v752
          %v4039 = vmul.f32 %v3482, %v753
          %v4040 = vmul.f32 %v3485, %v754
          %v4041 = vmul.f32 %v3488, %v755
          %v4042 = vmul.f32 %v3491, %v756
          %v4043 = vmul.f32 %v3494, %v757
          %v4044 = vmul.f32 %v3497, %v758
          %v4045 = vmul.f32 %v3500, %v759
          %v4046 = vmul.f32 %v3503, %v760
          %v4047 = vmul.f32 %v3506, %v761
          %v4048 = vmul.f32 %v3509, %v762
          %v4049 = vmul.f32 %v3512, %v763
          %v4050 = vmul.f32 %v3515, %v764
          %v4051 = vmul.f32 %v3518, %v765
          %v4052 = vmul.f32 %v3521, %v766
          %v4053 = vmul.f32 %v3524, %v767
          %v4054 = vmul.f32 %v3527, %v768
          %v4055 = vmul.f32 %v3530, %v769
          %v4056 = vmul.f32 %v3533, %v770
          %v4057 = vmul.f32 %v3536, %v771
          %v4058 = vmul.f32 %v3539, %v772
          %v4059 = vmul.f32 %v3542, %v773
          %v4060 = vmul.f32 %v3545, %v774
          %v4061 = vmul.f32 %v3548, %v775
          %v4062 = vadd.f32 %v3934, %v3935
          %v4063 = vadd.f32 %v4062, %v3936
          %v4064 = vadd.f32 %v4063, %v3937
          %v4065 = vadd.f32 %v4064, %v3938
          %v4066 = vadd.f32 %v4065, %v3939
          %v4067 = vadd.f32 %v4066, %v3940
          %v4068 = vadd.f32 %v4067, %v3941
          %v4069 = vadd.f32 %v4068, %v3942
          %v4070 = vadd.f32 %v4069, %v3943
          %v4071 = vadd.f32 %v4070, %v3944
          %v4072 = vadd.f32 %v4071, %v3945
          %v4073 = vadd.f32 %v4072, %v3946
          %v4074 = vadd.f32 %v4073, %v3947
          %v4075 = vadd.f32 %v4074, %v3948
          %v4076 = vadd.f32 %v4075, %v3949
          %v4077 = vrot.slane %v4076, 4
          %v4078 = vadd.f32 %v4076, %v4077
          %v4079 = vrot.slane %v4078, 2
          %v4080 = vadd.f32 %v4078, %v4079
          %v4081 = vrot.slane %v4080, 1
          %v4082 = vadd.f32 %v4080, %v4081
          %v4083 = vadd.f32 %v3950, %v3951
          %v4084 = vadd.f32 %v4083, %v3952
          %v4085 = vadd.f32 %v4084, %v3953
          %v4086 = vadd.f32 %v4085, %v3954
          %v4087 = vadd.f32 %v4086, %v3955
          %v4088 = vadd.f32 %v4087, %v3956
          %v4089 = vadd.f32 %v4088, %v3957
          %v4090 = vadd.f32 %v4089, %v3958
          %v4091 = vadd.f32 %v4090, %v3959
          %v4092 = vadd.f32 %v4091, %v3960
          %v4093 = vadd.f32 %v4092, %v3961
          %v4094 = vadd.f32 %v4093, %v3962
          %v4095 = vadd.f32 %v4094, %v3963
          %v4096 = vadd.f32 %v4095, %v3964
          %v4097 = vadd.f32 %v4096, %v3965
          %v4098 = vrot.slane %v4097, 4
          %v4099 = vadd.f32 %v4097, %v4098
          %v4100 = vrot.slane %v4099, 2
          %v4101 = vadd.f32 %v4099, %v4100
          %v4102 = vrot.slane %v4101, 1
          %v4103 = vadd.f32 %v4101, %v4102
          %v4104 = vadd.f32 %v3966, %v3967
          %v4105 = vadd.f32 %v4104, %v3968
          %v4106 = vadd.f32 %v4105, %v3969
          %v4107 = vadd.f32 %v4106, %v3970
          %v4108 = vadd.f32 %v4107, %v3971
          %v4109 = vadd.f32 %v4108, %v3972
          %v4110 = vadd.f32 %v4109, %v3973
          %v4111 = vadd.f32 %v4110, %v3974
          %v4112 = vadd.f32 %v4111, %v3975
          %v4113 = vadd.f32 %v4112, %v3976
          %v4114 = vadd.f32 %v4113, %v3977
          %v4115 = vadd.f32 %v4114, %v3978
          %v4116 = vadd.f32 %v4115, %v3979
          %v4117 = vadd.f32 %v4116, %v3980
          %v4118 = vadd.f32 %v4117, %v3981
          %v4119 = vrot.slane %v4118, 4
          %v4120 = vadd.f32 %v4118, %v4119
          %v4121 = vrot.slane %v4120, 2
          %v4122 = vadd.f32 %v4120, %v4121
          %v4123 = vrot.slane %v4122, 1
          %v4124 = vadd.f32 %v4122, %v4123
          %v4125 = vadd.f32 %v3982, %v3983
          %v4126 = vadd.f32 %v4125, %v3984
          %v4127 = vadd.f32 %v4126, %v3985
          %v4128 = vadd.f32 %v4127, %v3986
          %v4129 = vadd.f32 %v4128, %v3987
          %v4130 = vadd.f32 %v4129, %v3988
          %v4131 = vadd.f32 %v4130, %v3989
          %v4132 = vadd.f32 %v4131, %v3990
          %v4133 = vadd.f32 %v4132, %v3991
          %v4134 = vadd.f32 %v4133, %v3992
          %v4135 = vadd.f32 %v4134, %v3993
          %v4136 = vadd.f32 %v4135, %v3994
          %v4137 = vadd.f32 %v4136, %v3995
          %v4138 = vadd.f32 %v4137, %v3996
          %v4139 = vadd.f32 %v4138, %v3997
          %v4140 = vrot.slane %v4139, 4
          %v4141 = vadd.f32 %v4139, %v4140
          %v4142 = vrot.slane %v4141, 2
          %v4143 = vadd.f32 %v4141, %v4142
          %v4144 = vrot.slane %v4143, 1
          %v4145 = vadd.f32 %v4143, %v4144
          %v4146 = vadd.f32 %v3998, %v3999
          %v4147 = vadd.f32 %v4146, %v4000
          %v4148 = vadd.f32 %v4147, %v4001
          %v4149 = vadd.f32 %v4148, %v4002
          %v4150 = vadd.f32 %v4149, %v4003
          %v4151 = vadd.f32 %v4150, %v4004
          %v4152 = vadd.f32 %v4151, %v4005
          %v4153 = vadd.f32 %v4152, %v4006
          %v4154 = vadd.f32 %v4153, %v4007
          %v4155 = vadd.f32 %v4154, %v4008
          %v4156 = vadd.f32 %v4155, %v4009
          %v4157 = vadd.f32 %v4156, %v4010
          %v4158 = vadd.f32 %v4157, %v4011
          %v4159 = vadd.f32 %v4158, %v4012
          %v4160 = vadd.f32 %v4159, %v4013
          %v4161 = vrot.slane %v4160, 4
          %v4162 = vadd.f32 %v4160, %v4161
          %v4163 = vrot.slane %v4162, 2
          %v4164 = vadd.f32 %v4162, %v4163
          %v4165 = vrot.slane %v4164, 1
          %v4166 = vadd.f32 %v4164, %v4165
          %v4167 = vadd.f32 %v4014, %v4015
          %v4168 = vadd.f32 %v4167, %v4016
          %v4169 = vadd.f32 %v4168, %v4017
          %v4170 = vadd.f32 %v4169, %v4018
          %v4171 = vadd.f32 %v4170, %v4019
          %v4172 = vadd.f32 %v4171, %v4020
          %v4173 = vadd.f32 %v4172, %v4021
          %v4174 = vadd.f32 %v4173, %v4022
          %v4175 = vadd.f32 %v4174, %v4023
          %v4176 = vadd.f32 %v4175, %v4024
          %v4177 = vadd.f32 %v4176, %v4025
          %v4178 = vadd.f32 %v4177, %v4026
          %v4179 = vadd.f32 %v4178, %v4027
          %v4180 = vadd.f32 %v4179, %v4028
          %v4181 = vadd.f32 %v4180, %v4029
          %v4182 = vrot.slane %v4181, 4
          %v4183 = vadd.f32 %v4181, %v4182
          %v4184 = vrot.slane %v4183, 2
          %v4185 = vadd.f32 %v4183, %v4184
          %v4186 = vrot.slane %v4185, 1
          %v4187 = vadd.f32 %v4185, %v4186
          %v4188 = vadd.f32 %v4030, %v4031
          %v4189 = vadd.f32 %v4188, %v4032
          %v4190 = vadd.f32 %v4189, %v4033
          %v4191 = vadd.f32 %v4190, %v4034
          %v4192 = vadd.f32 %v4191, %v4035
          %v4193 = vadd.f32 %v4192, %v4036
          %v4194 = vadd.f32 %v4193, %v4037
          %v4195 = vadd.f32 %v4194, %v4038
          %v4196 = vadd.f32 %v4195, %v4039
          %v4197 = vadd.f32 %v4196, %v4040
          %v4198 = vadd.f32 %v4197, %v4041
          %v4199 = vadd.f32 %v4198, %v4042
          %v4200 = vadd.f32 %v4199, %v4043
          %v4201 = vadd.f32 %v4200, %v4044
          %v4202 = vadd.f32 %v4201, %v4045
          %v4203 = vrot.slane %v4202, 4
          %v4204 = vadd.f32 %v4202, %v4203
          %v4205 = vrot.slane %v4204, 2
          %v4206 = vadd.f32 %v4204, %v4205
          %v4207 = vrot.slane %v4206, 1
          %v4208 = vadd.f32 %v4206, %v4207
          %v4209 = vadd.f32 %v4046, %v4047
          %v4210 = vadd.f32 %v4209, %v4048
          %v4211 = vadd.f32 %v4210, %v4049
          %v4212 = vadd.f32 %v4211, %v4050
          %v4213 = vadd.f32 %v4212, %v4051
          %v4214 = vadd.f32 %v4213, %v4052
          %v4215 = vadd.f32 %v4214, %v4053
          %v4216 = vadd.f32 %v4215, %v4054
          %v4217 = vadd.f32 %v4216, %v4055
          %v4218 = vadd.f32 %v4217, %v4056
          %v4219 = vadd.f32 %v4218, %v4057
          %v4220 = vadd.f32 %v4219, %v4058
          %v4221 = vadd.f32 %v4220, %v4059
          %v4222 = vadd.f32 %v4221, %v4060
          %v4223 = vadd.f32 %v4222, %v4061
          %v4224 = vrot.slane %v4223, 4
          %v4225 = vadd.f32 %v4223, %v4224
          %v4226 = vrot.slane %v4225, 2
          %v4227 = vadd.f32 %v4225, %v4226
          %v4228 = vrot.slane %v4227, 1
          %v4229 = vadd.f32 %v4227, %v4228
          %s4230 = sld [smem:[#allocation6]]
          %s4231 = smul.u32 1, 1
          %s4232 = sshll.u32 %s4231, 4
          %4233 = dma.done [#allocation4], %s4232
          %s4234 = sld [smem:[#allocation6 + $0x1]]
          %s4235 = sshll.u32 %s4231, 4
          %4236 = dma.done %s531, %s4235
          %s4237 = sld [smem:[#allocation6 + $0x2]]
          %s4238 = sshll.u32 %s4231, 4
          %4239 = dma.done %s548, %s4238
          %s4240 = sld [smem:[#allocation6 + $0x3]]
          %s4241 = sshll.u32 %s4231, 4
          %4242 = dma.done %s565, %s4241
          %s4243 = sld [smem:[#allocation6 + $0x4]]
          %s4244 = sshll.u32 %s4231, 4
          %4245 = dma.done %s582, %s4244
          %s4246 = sld [smem:[#allocation6 + $0x5]]
          %s4247 = sshll.u32 %s4231, 4
          %4248 = dma.done %s599, %s4247
          %s4249 = sld [smem:[#allocation6 + $0x6]]
          %s4250 = sshll.u32 %s4231, 4
          %4251 = dma.done %s616, %s4250
          %s4252 = sld [smem:[#allocation6 + $0x7]]
          %s4253 = sshll.u32 %s4231, 4
          %4254 = dma.done %s633, %s4253
          %v4255 = vld [vmem:[#allocation2] sm:$0xff]
          %v4256 = vld [vmem:[#allocation12] sm:$0xff]
          %v4257 = vld [vmem:[#allocation12 + $0x8] sm:$0xff]
          %v4258 = vld [vmem:[#allocation12 + $0x10] sm:$0xff]
          %v4259 = vld [vmem:[#allocation12 + $0x18] sm:$0xff]
          %v4260 = vld [vmem:[#allocation12 + $0x20] sm:$0xff]
          %v4261 = vld [vmem:[#allocation12 + $0x28] sm:$0xff]
          %v4262 = vld [vmem:[#allocation12 + $0x30] sm:$0xff]
          %v4263 = vld [vmem:[#allocation12 + $0x38] sm:$0xff]
          %v4264 = vld [vmem:[#allocation12 + $0x40] sm:$0xff]
          %v4265 = vld [vmem:[#allocation12 + $0x48] sm:$0xff]
          %v4266 = vld [vmem:[#allocation12 + $0x50] sm:$0xff]
          %v4267 = vld [vmem:[#allocation12 + $0x58] sm:$0xff]
          %v4268 = vld [vmem:[#allocation12 + $0x60] sm:$0xff]
          %v4269 = vld [vmem:[#allocation12 + $0x68] sm:$0xff]
          %v4270 = vld [vmem:[#allocation12 + $0x70] sm:$0xff]
          %v4271 = vld [vmem:[#allocation12 + $0x78] sm:$0xff]
          %v4272 = vld [vmem:[#allocation13] sm:$0xff]
          %v4273 = vld [vmem:[#allocation13 + $0x8] sm:$0xff]
          %v4274 = vld [vmem:[#allocation13 + $0x10] sm:$0xff]
          %v4275 = vld [vmem:[#allocation13 + $0x18] sm:$0xff]
          %v4276 = vld [vmem:[#allocation13 + $0x20] sm:$0xff]
          %v4277 = vld [vmem:[#allocation13 + $0x28] sm:$0xff]
          %v4278 = vld [vmem:[#allocation13 + $0x30] sm:$0xff]
          %v4279 = vld [vmem:[#allocation13 + $0x38] sm:$0xff]
          %v4280 = vld [vmem:[#allocation13 + $0x40] sm:$0xff]
          %v4281 = vld [vmem:[#allocation13 + $0x48] sm:$0xff]
          %v4282 = vld [vmem:[#allocation13 + $0x50] sm:$0xff]
          %v4283 = vld [vmem:[#allocation13 + $0x58] sm:$0xff]
          %v4284 = vld [vmem:[#allocation13 + $0x60] sm:$0xff]
          %v4285 = vld [vmem:[#allocation13 + $0x68] sm:$0xff]
          %v4286 = vld [vmem:[#allocation13 + $0x70] sm:$0xff]
          %v4287 = vld [vmem:[#allocation13 + $0x78] sm:$0xff]
          %v4296 = vsel %vm1592, %v4103, %v4082
          %v4297 = vsel %vm1594, %v4124, %v4296
          %v4298 = vsel %vm1596, %v4145, %v4297
          %v4299 = vsel %vm1598, %v4166, %v4298
          %v4300 = vsel %vm1600, %v4187, %v4299
          %v4301 = vsel %vm1602, %v4208, %v4300
          %v4302 = vsel %vm1604, %v4229, %v4301
          %v4304 = vand.u32 %v4287, 4294901760
          %4305 = vmatpush.msra.mxu0 %v4304
          %v4306 = vand.u32 %v4286, 4294901760
          %4307 = vmatpush.msra.mxu0 %v4306
          %v4308 = vand.u32 %v4285, 4294901760
          %4309 = vmatpush.msra.mxu0 %v4308
          %v4310 = vand.u32 %v4284, 4294901760
          %4311 = vmatpush.msra.mxu0 %v4310
          %v4312 = vand.u32 %v4283, 4294901760
          %4313 = vmatpush.msra.mxu0 %v4312
          %v4314 = vand.u32 %v4282, 4294901760
          %4315 = vmatpush.msra.mxu0 %v4314
          %v4316 = vand.u32 %v4281, 4294901760
          %4317 = vmatpush.msra.mxu0 %v4316
          %v4318 = vand.u32 %v4280, 4294901760
          %4319 = vmatpush.msra.mxu0 %v4318
          %v4320 = vand.u32 %v4279, 4294901760
          %4321 = vmatpush.msra.mxu0 %v4320
          %v4322 = vand.u32 %v4278, 4294901760
          %4323 = vmatpush.msra.mxu0 %v4322
          %v4324 = vand.u32 %v4277, 4294901760
          %4325 = vmatpush.msra.mxu0 %v4324
          %v4326 = vand.u32 %v4276, 4294901760
          %4327 = vmatpush.msra.mxu0 %v4326
          %v4328 = vand.u32 %v4275, 4294901760
          %4329 = vmatpush.msra.mxu0 %v4328
          %v4330 = vand.u32 %v4274, 4294901760
          %4331 = vmatpush.msra.mxu0 %v4330
          %v4332 = vand.u32 %v4273, 4294901760
          %4333 = vmatpush.msra.mxu0 %v4332
          %v4334 = vand.u32 %v4272, 4294901760
          %4335 = vmatpush.msra.mxu0 %v4334
          %v4336 = vand.u32 %v4302, 4294901760
          %v4337 = vsub.f32 %v4302, %v4336
          %v4338 = vand.u32 %v4337, 4294901760
          %v4339 = vsub.f32 %v4337, %v4338
          %v4340 = vand.u32 %v4339, 4294901760
          %4341 = vmatmul.f32.gmra.mxu0 %v4340
          %v4342 = vpop.f32.mrf.mxu0
          %v4343 = vadd.f32 0.0, %v4342
          %4344 = vdwg.mxu0
          %v4345 = vand.u32 %v4287, 4294901760
          %v4346 = vsub.f32 %v4287, %v4345
          %v4347 = vand.u32 %v4346, 4294901760
          %v4348 = vsub.f32 %v4346, %v4347
          %v4349 = vand.u32 %v4348, 4294901760
          %4350 = vmatpush.msra.mxu0 %v4349
          %v4351 = vand.u32 %v4286, 4294901760
          %v4352 = vsub.f32 %v4286, %v4351
          %v4353 = vand.u32 %v4352, 4294901760
          %v4354 = vsub.f32 %v4352, %v4353
          %v4355 = vand.u32 %v4354, 4294901760
          %4356 = vmatpush.msra.mxu0 %v4355
          %v4357 = vand.u32 %v4285, 4294901760
          %v4358 = vsub.f32 %v4285, %v4357
          %v4359 = vand.u32 %v4358, 4294901760
          %v4360 = vsub.f32 %v4358, %v4359
          %v4361 = vand.u32 %v4360, 4294901760
          %4362 = vmatpush.msra.mxu0 %v4361
          %v4363 = vand.u32 %v4284, 4294901760
          %v4364 = vsub.f32 %v4284, %v4363
          %v4365 = vand.u32 %v4364, 4294901760
          %v4366 = vsub.f32 %v4364, %v4365
          %v4367 = vand.u32 %v4366, 4294901760
          %4368 = vmatpush.msra.mxu0 %v4367
          %v4369 = vand.u32 %v4283, 4294901760
          %v4370 = vsub.f32 %v4283, %v4369
          %v4371 = vand.u32 %v4370, 4294901760
          %v4372 = vsub.f32 %v4370, %v4371
          %v4373 = vand.u32 %v4372, 4294901760
          %4374 = vmatpush.msra.mxu0 %v4373
          %v4375 = vand.u32 %v4282, 4294901760
          %v4376 = vsub.f32 %v4282, %v4375
          %v4377 = vand.u32 %v4376, 4294901760
          %v4378 = vsub.f32 %v4376, %v4377
          %v4379 = vand.u32 %v4378, 4294901760
          %4380 = vmatpush.msra.mxu0 %v4379
          %v4381 = vand.u32 %v4281, 4294901760
          %v4382 = vsub.f32 %v4281, %v4381
          %v4383 = vand.u32 %v4382, 4294901760
          %v4384 = vsub.f32 %v4382, %v4383
          %v4385 = vand.u32 %v4384, 4294901760
          %4386 = vmatpush.msra.mxu0 %v4385
          %v4387 = vand.u32 %v4280, 4294901760
          %v4388 = vsub.f32 %v4280, %v4387
          %v4389 = vand.u32 %v4388, 4294901760
          %v4390 = vsub.f32 %v4388, %v4389
          %v4391 = vand.u32 %v4390, 4294901760
          %4392 = vmatpush.msra.mxu0 %v4391
          %v4393 = vand.u32 %v4279, 4294901760
          %v4394 = vsub.f32 %v4279, %v4393
          %v4395 = vand.u32 %v4394, 4294901760
          %v4396 = vsub.f32 %v4394, %v4395
          %v4397 = vand.u32 %v4396, 4294901760
          %4398 = vmatpush.msra.mxu0 %v4397
          %v4399 = vand.u32 %v4278, 4294901760
          %v4400 = vsub.f32 %v4278, %v4399
          %v4401 = vand.u32 %v4400, 4294901760
          %v4402 = vsub.f32 %v4400, %v4401
          %v4403 = vand.u32 %v4402, 4294901760
          %4404 = vmatpush.msra.mxu0 %v4403
          %v4405 = vand.u32 %v4277, 4294901760
          %v4406 = vsub.f32 %v4277, %v4405
          %v4407 = vand.u32 %v4406, 4294901760
          %v4408 = vsub.f32 %v4406, %v4407
          %v4409 = vand.u32 %v4408, 4294901760
          %4410 = vmatpush.msra.mxu0 %v4409
          %v4411 = vand.u32 %v4276, 4294901760
          %v4412 = vsub.f32 %v4276, %v4411
          %v4413 = vand.u32 %v4412, 4294901760
          %v4414 = vsub.f32 %v4412, %v4413
          %v4415 = vand.u32 %v4414, 4294901760
          %4416 = vmatpush.msra.mxu0 %v4415
          %v4417 = vand.u32 %v4275, 4294901760
          %v4418 = vsub.f32 %v4275, %v4417
          %v4419 = vand.u32 %v4418, 4294901760
          %v4420 = vsub.f32 %v4418, %v4419
          %v4421 = vand.u32 %v4420, 4294901760
          %4422 = vmatpush.msra.mxu0 %v4421
          %v4423 = vand.u32 %v4274, 4294901760
          %v4424 = vsub.f32 %v4274, %v4423
          %v4425 = vand.u32 %v4424, 4294901760
          %v4426 = vsub.f32 %v4424, %v4425
          %v4427 = vand.u32 %v4426, 4294901760
          %4428 = vmatpush.msra.mxu0 %v4427
          %v4429 = vand.u32 %v4273, 4294901760
          %v4430 = vsub.f32 %v4273, %v4429
          %v4431 = vand.u32 %v4430, 4294901760
          %v4432 = vsub.f32 %v4430, %v4431
          %v4433 = vand.u32 %v4432, 4294901760
          %4434 = vmatpush.msra.mxu0 %v4433
          %v4435 = vand.u32 %v4272, 4294901760
          %v4436 = vsub.f32 %v4272, %v4435
          %v4437 = vand.u32 %v4436, 4294901760
          %v4438 = vsub.f32 %v4436, %v4437
          %v4439 = vand.u32 %v4438, 4294901760
          %4440 = vmatpush.msra.mxu0 %v4439
          %v4441 = vand.u32 %v4302, 4294901760
          %4442 = vmatmul.f32.gmra.mxu0 %v4441
          %v4443 = vpop.f32.mrf.mxu0
          %v4444 = vadd.f32 %v4343, %v4443
          %4445 = vdwg.mxu0
          %v4446 = vand.u32 %v4287, 4294901760
          %v4447 = vsub.f32 %v4287, %v4446
          %4448 = vmatpush.msra.mxu0 %v4447
          %v4449 = vand.u32 %v4286, 4294901760
          %v4450 = vsub.f32 %v4286, %v4449
          %4451 = vmatpush.msra.mxu0 %v4450
          %v4452 = vand.u32 %v4285, 4294901760
          %v4453 = vsub.f32 %v4285, %v4452
          %4454 = vmatpush.msra.mxu0 %v4453
          %v4455 = vand.u32 %v4284, 4294901760
          %v4456 = vsub.f32 %v4284, %v4455
          %4457 = vmatpush.msra.mxu0 %v4456
          %v4458 = vand.u32 %v4283, 4294901760
          %v4459 = vsub.f32 %v4283, %v4458
          %4460 = vmatpush.msra.mxu0 %v4459
          %v4461 = vand.u32 %v4282, 4294901760
          %v4462 = vsub.f32 %v4282, %v4461
          %4463 = vmatpush.msra.mxu0 %v4462
          %v4464 = vand.u32 %v4281, 4294901760
          %v4465 = vsub.f32 %v4281, %v4464
          %4466 = vmatpush.msra.mxu0 %v4465
          %v4467 = vand.u32 %v4280, 4294901760
          %v4468 = vsub.f32 %v4280, %v4467
          %4469 = vmatpush.msra.mxu0 %v4468
          %v4470 = vand.u32 %v4279, 4294901760
          %v4471 = vsub.f32 %v4279, %v4470
          %4472 = vmatpush.msra.mxu0 %v4471
          %v4473 = vand.u32 %v4278, 4294901760
          %v4474 = vsub.f32 %v4278, %v4473
          %4475 = vmatpush.msra.mxu0 %v4474
          %v4476 = vand.u32 %v4277, 4294901760
          %v4477 = vsub.f32 %v4277, %v4476
          %4478 = vmatpush.msra.mxu0 %v4477
          %v4479 = vand.u32 %v4276, 4294901760
          %v4480 = vsub.f32 %v4276, %v4479
          %4481 = vmatpush.msra.mxu0 %v4480
          %v4482 = vand.u32 %v4275, 4294901760
          %v4483 = vsub.f32 %v4275, %v4482
          %4484 = vmatpush.msra.mxu0 %v4483
          %v4485 = vand.u32 %v4274, 4294901760
          %v4486 = vsub.f32 %v4274, %v4485
          %4487 = vmatpush.msra.mxu0 %v4486
          %v4488 = vand.u32 %v4273, 4294901760
          %v4489 = vsub.f32 %v4273, %v4488
          %4490 = vmatpush.msra.mxu0 %v4489
          %v4491 = vand.u32 %v4272, 4294901760
          %v4492 = vsub.f32 %v4272, %v4491
          %4493 = vmatpush.msra.mxu0 %v4492
          %v4494 = vand.u32 %v4302, 4294901760
          %v4495 = vsub.f32 %v4302, %v4494
          %4496 = vmatmul.f32.gmra.mxu0 %v4495
          %v4497 = vpop.f32.mrf.mxu0
          %v4498 = vadd.f32 %v4444, %v4497
          %4499 = vdwg.mxu0
          %v4500 = vand.u32 %v4287, 4294901760
          %4501 = vmatpush.msra.mxu0 %v4500
          %v4502 = vand.u32 %v4286, 4294901760
          %4503 = vmatpush.msra.mxu0 %v4502
          %v4504 = vand.u32 %v4285, 4294901760
          %4505 = vmatpush.msra.mxu0 %v4504
          %v4506 = vand.u32 %v4284, 4294901760
          %4507 = vmatpush.msra.mxu0 %v4506
          %v4508 = vand.u32 %v4283, 4294901760
          %4509 = vmatpush.msra.mxu0 %v4508
          %v4510 = vand.u32 %v4282, 4294901760
          %4511 = vmatpush.msra.mxu0 %v4510
          %v4512 = vand.u32 %v4281, 4294901760
          %4513 = vmatpush.msra.mxu0 %v4512
          %v4514 = vand.u32 %v4280, 4294901760
          %4515 = vmatpush.msra.mxu0 %v4514
          %v4516 = vand.u32 %v4279, 4294901760
          %4517 = vmatpush.msra.mxu0 %v4516
          %v4518 = vand.u32 %v4278, 4294901760
          %4519 = vmatpush.msra.mxu0 %v4518
          %v4520 = vand.u32 %v4277, 4294901760
          %4521 = vmatpush.msra.mxu0 %v4520
          %v4522 = vand.u32 %v4276, 4294901760
          %4523 = vmatpush.msra.mxu0 %v4522
          %v4524 = vand.u32 %v4275, 4294901760
          %4525 = vmatpush.msra.mxu0 %v4524
          %v4526 = vand.u32 %v4274, 4294901760
          %4527 = vmatpush.msra.mxu0 %v4526
          %v4528 = vand.u32 %v4273, 4294901760
          %4529 = vmatpush.msra.mxu0 %v4528
          %v4530 = vand.u32 %v4272, 4294901760
          %4531 = vmatpush.msra.mxu0 %v4530
          %v4532 = vand.u32 %v4302, 4294901760
          %v4533 = vsub.f32 %v4302, %v4532
          %v4534 = vand.u32 %v4533, 4294901760
          %4535 = vmatmul.f32.gmra.mxu0 %v4534
          %v4536 = vpop.f32.mrf.mxu0
          %v4537 = vadd.f32 %v4498, %v4536
          %4538 = vdwg.mxu0
          %v4539 = vand.u32 %v4287, 4294901760
          %v4540 = vsub.f32 %v4287, %v4539
          %v4541 = vand.u32 %v4540, 4294901760
          %4542 = vmatpush.msra.mxu0 %v4541
          %v4543 = vand.u32 %v4286, 4294901760
          %v4544 = vsub.f32 %v4286, %v4543
          %v4545 = vand.u32 %v4544, 4294901760
          %4546 = vmatpush.msra.mxu0 %v4545
          %v4547 = vand.u32 %v4285, 4294901760
          %v4548 = vsub.f32 %v4285, %v4547
          %v4549 = vand.u32 %v4548, 4294901760
          %4550 = vmatpush.msra.mxu0 %v4549
          %v4551 = vand.u32 %v4284, 4294901760
          %v4552 = vsub.f32 %v4284, %v4551
          %v4553 = vand.u32 %v4552, 4294901760
          %4554 = vmatpush.msra.mxu0 %v4553
          %v4555 = vand.u32 %v4283, 4294901760
          %v4556 = vsub.f32 %v4283, %v4555
          %v4557 = vand.u32 %v4556, 4294901760
          %4558 = vmatpush.msra.mxu0 %v4557
          %v4559 = vand.u32 %v4282, 4294901760
          %v4560 = vsub.f32 %v4282, %v4559
          %v4561 = vand.u32 %v4560, 4294901760
          %4562 = vmatpush.msra.mxu0 %v4561
          %v4563 = vand.u32 %v4281, 4294901760
          %v4564 = vsub.f32 %v4281, %v4563
          %v4565 = vand.u32 %v4564, 4294901760
          %4566 = vmatpush.msra.mxu0 %v4565
          %v4567 = vand.u32 %v4280, 4294901760
          %v4568 = vsub.f32 %v4280, %v4567
          %v4569 = vand.u32 %v4568, 4294901760
          %4570 = vmatpush.msra.mxu0 %v4569
          %v4571 = vand.u32 %v4279, 4294901760
          %v4572 = vsub.f32 %v4279, %v4571
          %v4573 = vand.u32 %v4572, 4294901760
          %4574 = vmatpush.msra.mxu0 %v4573
          %v4575 = vand.u32 %v4278, 4294901760
          %v4576 = vsub.f32 %v4278, %v4575
          %v4577 = vand.u32 %v4576, 4294901760
          %4578 = vmatpush.msra.mxu0 %v4577
          %v4579 = vand.u32 %v4277, 4294901760
          %v4580 = vsub.f32 %v4277, %v4579
          %v4581 = vand.u32 %v4580, 4294901760
          %4582 = vmatpush.msra.mxu0 %v4581
          %v4583 = vand.u32 %v4276, 4294901760
          %v4584 = vsub.f32 %v4276, %v4583
          %v4585 = vand.u32 %v4584, 4294901760
          %4586 = vmatpush.msra.mxu0 %v4585
          %v4587 = vand.u32 %v4275, 4294901760
          %v4588 = vsub.f32 %v4275, %v4587
          %v4589 = vand.u32 %v4588, 4294901760
          %4590 = vmatpush.msra.mxu0 %v4589
          %v4591 = vand.u32 %v4274, 4294901760
          %v4592 = vsub.f32 %v4274, %v4591
          %v4593 = vand.u32 %v4592, 4294901760
          %4594 = vmatpush.msra.mxu0 %v4593
          %v4595 = vand.u32 %v4273, 4294901760
          %v4596 = vsub.f32 %v4273, %v4595
          %v4597 = vand.u32 %v4596, 4294901760
          %4598 = vmatpush.msra.mxu0 %v4597
          %v4599 = vand.u32 %v4272, 4294901760
          %v4600 = vsub.f32 %v4272, %v4599
          %v4601 = vand.u32 %v4600, 4294901760
          %4602 = vmatpush.msra.mxu0 %v4601
          %v4603 = vand.u32 %v4302, 4294901760
          %4604 = vmatmul.f32.gmra.mxu0 %v4603
          %v4605 = vpop.f32.mrf.mxu0
          %v4606 = vadd.f32 %v4537, %v4605
          %4607 = vdwg.mxu0
          %v4608 = vand.u32 %v4287, 4294901760
          %4609 = vmatpush.msra.mxu0 %v4608
          %v4610 = vand.u32 %v4286, 4294901760
          %4611 = vmatpush.msra.mxu0 %v4610
          %v4612 = vand.u32 %v4285, 4294901760
          %4613 = vmatpush.msra.mxu0 %v4612
          %v4614 = vand.u32 %v4284, 4294901760
          %4615 = vmatpush.msra.mxu0 %v4614
          %v4616 = vand.u32 %v4283, 4294901760
          %4617 = vmatpush.msra.mxu0 %v4616
          %v4618 = vand.u32 %v4282, 4294901760
          %4619 = vmatpush.msra.mxu0 %v4618
          %v4620 = vand.u32 %v4281, 4294901760
          %4621 = vmatpush.msra.mxu0 %v4620
          %v4622 = vand.u32 %v4280, 4294901760
          %4623 = vmatpush.msra.mxu0 %v4622
          %v4624 = vand.u32 %v4279, 4294901760
          %4625 = vmatpush.msra.mxu0 %v4624
          %v4626 = vand.u32 %v4278, 4294901760
          %4627 = vmatpush.msra.mxu0 %v4626
          %v4628 = vand.u32 %v4277, 4294901760
          %4629 = vmatpush.msra.mxu0 %v4628
          %v4630 = vand.u32 %v4276, 4294901760
          %4631 = vmatpush.msra.mxu0 %v4630
          %v4632 = vand.u32 %v4275, 4294901760
          %4633 = vmatpush.msra.mxu0 %v4632
          %v4634 = vand.u32 %v4274, 4294901760
          %4635 = vmatpush.msra.mxu0 %v4634
          %v4636 = vand.u32 %v4273, 4294901760
          %4637 = vmatpush.msra.mxu0 %v4636
          %v4638 = vand.u32 %v4272, 4294901760
          %4639 = vmatpush.msra.mxu0 %v4638
          %v4640 = vand.u32 %v4302, 4294901760
          %4641 = vmatmul.f32.gmra.mxu0 %v4640
          %v4642 = vpop.f32.mrf.mxu0
          %v4643 = vadd.f32 %v4606, %v4642
          %4644 = vdwg.mxu0
          %v4645 = vand.u32 %v4271, 4294901760
          %4646 = vmatpush.msra.mxu0 %v4645
          %v4647 = vand.u32 %v4270, 4294901760
          %4648 = vmatpush.msra.mxu0 %v4647
          %v4649 = vand.u32 %v4269, 4294901760
          %4650 = vmatpush.msra.mxu0 %v4649
          %v4651 = vand.u32 %v4268, 4294901760
          %4652 = vmatpush.msra.mxu0 %v4651
          %v4653 = vand.u32 %v4267, 4294901760
          %4654 = vmatpush.msra.mxu0 %v4653
          %v4655 = vand.u32 %v4266, 4294901760
          %4656 = vmatpush.msra.mxu0 %v4655
          %v4657 = vand.u32 %v4265, 4294901760
          %4658 = vmatpush.msra.mxu0 %v4657
          %v4659 = vand.u32 %v4264, 4294901760
          %4660 = vmatpush.msra.mxu0 %v4659
          %v4661 = vand.u32 %v4263, 4294901760
          %4662 = vmatpush.msra.mxu0 %v4661
          %v4663 = vand.u32 %v4262, 4294901760
          %4664 = vmatpush.msra.mxu0 %v4663
          %v4665 = vand.u32 %v4261, 4294901760
          %4666 = vmatpush.msra.mxu0 %v4665
          %v4667 = vand.u32 %v4260, 4294901760
          %4668 = vmatpush.msra.mxu0 %v4667
          %v4669 = vand.u32 %v4259, 4294901760
          %4670 = vmatpush.msra.mxu0 %v4669
          %v4671 = vand.u32 %v4258, 4294901760
          %4672 = vmatpush.msra.mxu0 %v4671
          %v4673 = vand.u32 %v4257, 4294901760
          %4674 = vmatpush.msra.mxu0 %v4673
          %v4675 = vand.u32 %v4256, 4294901760
          %4676 = vmatpush.msra.mxu0 %v4675
          %v4677 = vand.u32 %v4255, 4294901760
          %v4678 = vsub.f32 %v4255, %v4677
          %v4679 = vand.u32 %v4678, 4294901760
          %v4680 = vsub.f32 %v4678, %v4679
          %v4681 = vand.u32 %v4680, 4294901760
          %4682 = vmatmul.f32.gmra.mxu0 %v4681
          %v4683 = vpop.f32.mrf.mxu0
          %v4684 = vadd.f32 %v4643, %v4683
          %4685 = vdwg.mxu0
          %v4686 = vand.u32 %v4271, 4294901760
          %v4687 = vsub.f32 %v4271, %v4686
          %v4688 = vand.u32 %v4687, 4294901760
          %v4689 = vsub.f32 %v4687, %v4688
          %v4690 = vand.u32 %v4689, 4294901760
          %4691 = vmatpush.msra.mxu0 %v4690
          %v4692 = vand.u32 %v4270, 4294901760
          %v4693 = vsub.f32 %v4270, %v4692
          %v4694 = vand.u32 %v4693, 4294901760
          %v4695 = vsub.f32 %v4693, %v4694
          %v4696 = vand.u32 %v4695, 4294901760
          %4697 = vmatpush.msra.mxu0 %v4696
          %v4698 = vand.u32 %v4269, 4294901760
          %v4699 = vsub.f32 %v4269, %v4698
          %v4700 = vand.u32 %v4699, 4294901760
          %v4701 = vsub.f32 %v4699, %v4700
          %v4702 = vand.u32 %v4701, 4294901760
          %4703 = vmatpush.msra.mxu0 %v4702
          %v4704 = vand.u32 %v4268, 4294901760
          %v4705 = vsub.f32 %v4268, %v4704
          %v4706 = vand.u32 %v4705, 4294901760
          %v4707 = vsub.f32 %v4705, %v4706
          %v4708 = vand.u32 %v4707, 4294901760
          %4709 = vmatpush.msra.mxu0 %v4708
          %v4710 = vand.u32 %v4267, 4294901760
          %v4711 = vsub.f32 %v4267, %v4710
          %v4712 = vand.u32 %v4711, 4294901760
          %v4713 = vsub.f32 %v4711, %v4712
          %v4714 = vand.u32 %v4713, 4294901760
          %4715 = vmatpush.msra.mxu0 %v4714
          %v4716 = vand.u32 %v4266, 4294901760
          %v4717 = vsub.f32 %v4266, %v4716
          %v4718 = vand.u32 %v4717, 4294901760
          %v4719 = vsub.f32 %v4717, %v4718
          %v4720 = vand.u32 %v4719, 4294901760
          %4721 = vmatpush.msra.mxu0 %v4720
          %v4722 = vand.u32 %v4265, 4294901760
          %v4723 = vsub.f32 %v4265, %v4722
          %v4724 = vand.u32 %v4723, 4294901760
          %v4725 = vsub.f32 %v4723, %v4724
          %v4726 = vand.u32 %v4725, 4294901760
          %4727 = vmatpush.msra.mxu0 %v4726
          %v4728 = vand.u32 %v4264, 4294901760
          %v4729 = vsub.f32 %v4264, %v4728
          %v4730 = vand.u32 %v4729, 4294901760
          %v4731 = vsub.f32 %v4729, %v4730
          %v4732 = vand.u32 %v4731, 4294901760
          %4733 = vmatpush.msra.mxu0 %v4732
          %v4734 = vand.u32 %v4263, 4294901760
          %v4735 = vsub.f32 %v4263, %v4734
          %v4736 = vand.u32 %v4735, 4294901760
          %v4737 = vsub.f32 %v4735, %v4736
          %v4738 = vand.u32 %v4737, 4294901760
          %4739 = vmatpush.msra.mxu0 %v4738
          %v4740 = vand.u32 %v4262, 4294901760
          %v4741 = vsub.f32 %v4262, %v4740
          %v4742 = vand.u32 %v4741, 4294901760
          %v4743 = vsub.f32 %v4741, %v4742
          %v4744 = vand.u32 %v4743, 4294901760
          %4745 = vmatpush.msra.mxu0 %v4744
          %v4746 = vand.u32 %v4261, 4294901760
          %v4747 = vsub.f32 %v4261, %v4746
          %v4748 = vand.u32 %v4747, 4294901760
          %v4749 = vsub.f32 %v4747, %v4748
          %v4750 = vand.u32 %v4749, 4294901760
          %4751 = vmatpush.msra.mxu0 %v4750
          %v4752 = vand.u32 %v4260, 4294901760
          %v4753 = vsub.f32 %v4260, %v4752
          %v4754 = vand.u32 %v4753, 4294901760
          %v4755 = vsub.f32 %v4753, %v4754
          %v4756 = vand.u32 %v4755, 4294901760
          %4757 = vmatpush.msra.mxu0 %v4756
          %v4758 = vand.u32 %v4259, 4294901760
          %v4759 = vsub.f32 %v4259, %v4758
          %v4760 = vand.u32 %v4759, 4294901760
          %v4761 = vsub.f32 %v4759, %v4760
          %v4762 = vand.u32 %v4761, 4294901760
          %4763 = vmatpush.msra.mxu0 %v4762
          %v4764 = vand.u32 %v4258, 4294901760
          %v4765 = vsub.f32 %v4258, %v4764
          %v4766 = vand.u32 %v4765, 4294901760
          %v4767 = vsub.f32 %v4765, %v4766
          %v4768 = vand.u32 %v4767, 4294901760
          %4769 = vmatpush.msra.mxu0 %v4768
          %v4770 = vand.u32 %v4257, 4294901760
          %v4771 = vsub.f32 %v4257, %v4770
          %v4772 = vand.u32 %v4771, 4294901760
          %v4773 = vsub.f32 %v4771, %v4772
          %v4774 = vand.u32 %v4773, 4294901760
          %4775 = vmatpush.msra.mxu0 %v4774
          %v4776 = vand.u32 %v4256, 4294901760
          %v4777 = vsub.f32 %v4256, %v4776
          %v4778 = vand.u32 %v4777, 4294901760
          %v4779 = vsub.f32 %v4777, %v4778
          %v4780 = vand.u32 %v4779, 4294901760
          %4781 = vmatpush.msra.mxu0 %v4780
          %v4782 = vand.u32 %v4255, 4294901760
          %4783 = vmatmul.f32.gmra.mxu0 %v4782
          %v4784 = vpop.f32.mrf.mxu0
          %v4785 = vadd.f32 %v4684, %v4784
          %4786 = vdwg.mxu0
          %v4787 = vand.u32 %v4271, 4294901760
          %v4788 = vsub.f32 %v4271, %v4787
          %4789 = vmatpush.msra.mxu0 %v4788
          %v4790 = vand.u32 %v4270, 4294901760
          %v4791 = vsub.f32 %v4270, %v4790
          %4792 = vmatpush.msra.mxu0 %v4791
          %v4793 = vand.u32 %v4269, 4294901760
          %v4794 = vsub.f32 %v4269, %v4793
          %4795 = vmatpush.msra.mxu0 %v4794
          %v4796 = vand.u32 %v4268, 4294901760
          %v4797 = vsub.f32 %v4268, %v4796
          %4798 = vmatpush.msra.mxu0 %v4797
          %v4799 = vand.u32 %v4267, 4294901760
          %v4800 = vsub.f32 %v4267, %v4799
          %4801 = vmatpush.msra.mxu0 %v4800
          %v4802 = vand.u32 %v4266, 4294901760
          %v4803 = vsub.f32 %v4266, %v4802
          %4804 = vmatpush.msra.mxu0 %v4803
          %v4805 = vand.u32 %v4265, 4294901760
          %v4806 = vsub.f32 %v4265, %v4805
          %4807 = vmatpush.msra.mxu0 %v4806
          %v4808 = vand.u32 %v4264, 4294901760
          %v4809 = vsub.f32 %v4264, %v4808
          %4810 = vmatpush.msra.mxu0 %v4809
          %v4811 = vand.u32 %v4263, 4294901760
          %v4812 = vsub.f32 %v4263, %v4811
          %4813 = vmatpush.msra.mxu0 %v4812
          %v4814 = vand.u32 %v4262, 4294901760
          %v4815 = vsub.f32 %v4262, %v4814
          %4816 = vmatpush.msra.mxu0 %v4815
          %v4817 = vand.u32 %v4261, 4294901760
          %v4818 = vsub.f32 %v4261, %v4817
          %4819 = vmatpush.msra.mxu0 %v4818
          %v4820 = vand.u32 %v4260, 4294901760
          %v4821 = vsub.f32 %v4260, %v4820
          %4822 = vmatpush.msra.mxu0 %v4821
          %v4823 = vand.u32 %v4259, 4294901760
          %v4824 = vsub.f32 %v4259, %v4823
          %4825 = vmatpush.msra.mxu0 %v4824
          %v4826 = vand.u32 %v4258, 4294901760
          %v4827 = vsub.f32 %v4258, %v4826
          %4828 = vmatpush.msra.mxu0 %v4827
          %v4829 = vand.u32 %v4257, 4294901760
          %v4830 = vsub.f32 %v4257, %v4829
          %4831 = vmatpush.msra.mxu0 %v4830
          %v4832 = vand.u32 %v4256, 4294901760
          %v4833 = vsub.f32 %v4256, %v4832
          %4834 = vmatpush.msra.mxu0 %v4833
          %v4835 = vand.u32 %v4255, 4294901760
          %v4836 = vsub.f32 %v4255, %v4835
          %4837 = vmatmul.f32.gmra.mxu0 %v4836
          %v4838 = vpop.f32.mrf.mxu0
          %v4839 = vadd.f32 %v4785, %v4838
          %4840 = vdwg.mxu0
          %v4841 = vand.u32 %v4271, 4294901760
          %4842 = vmatpush.msra.mxu0 %v4841
          %v4843 = vand.u32 %v4270, 4294901760
          %4844 = vmatpush.msra.mxu0 %v4843
          %v4845 = vand.u32 %v4269, 4294901760
          %4846 = vmatpush.msra.mxu0 %v4845
          %v4847 = vand.u32 %v4268, 4294901760
          %4848 = vmatpush.msra.mxu0 %v4847
          %v4849 = vand.u32 %v4267, 4294901760
          %4850 = vmatpush.msra.mxu0 %v4849
          %v4851 = vand.u32 %v4266, 4294901760
          %4852 = vmatpush.msra.mxu0 %v4851
          %v4853 = vand.u32 %v4265, 4294901760
          %4854 = vmatpush.msra.mxu0 %v4853
          %v4855 = vand.u32 %v4264, 4294901760
          %4856 = vmatpush.msra.mxu0 %v4855
          %v4857 = vand.u32 %v4263, 4294901760
          %4858 = vmatpush.msra.mxu0 %v4857
          %v4859 = vand.u32 %v4262, 4294901760
          %4860 = vmatpush.msra.mxu0 %v4859
          %v4861 = vand.u32 %v4261, 4294901760
          %4862 = vmatpush.msra.mxu0 %v4861
          %v4863 = vand.u32 %v4260, 4294901760
          %4864 = vmatpush.msra.mxu0 %v4863
          %v4865 = vand.u32 %v4259, 4294901760
          %4866 = vmatpush.msra.mxu0 %v4865
          %v4867 = vand.u32 %v4258, 4294901760
          %4868 = vmatpush.msra.mxu0 %v4867
          %v4869 = vand.u32 %v4257, 4294901760
          %4870 = vmatpush.msra.mxu0 %v4869
          %v4871 = vand.u32 %v4256, 4294901760
          %4872 = vmatpush.msra.mxu0 %v4871
          %v4873 = vand.u32 %v4255, 4294901760
          %v4874 = vsub.f32 %v4255, %v4873
          %v4875 = vand.u32 %v4874, 4294901760
          %4876 = vmatmul.f32.gmra.mxu0 %v4875
          %v4877 = vpop.f32.mrf.mxu0
          %v4878 = vadd.f32 %v4839, %v4877
          %4879 = vdwg.mxu0
          %v4880 = vand.u32 %v4271, 4294901760
          %v4881 = vsub.f32 %v4271, %v4880
          %v4882 = vand.u32 %v4881, 4294901760
          %4883 = vmatpush.msra.mxu0 %v4882
          %v4884 = vand.u32 %v4270, 4294901760
          %v4885 = vsub.f32 %v4270, %v4884
          %v4886 = vand.u32 %v4885, 4294901760
          %4887 = vmatpush.msra.mxu0 %v4886
          %v4888 = vand.u32 %v4269, 4294901760
          %v4889 = vsub.f32 %v4269, %v4888
          %v4890 = vand.u32 %v4889, 4294901760
          %4891 = vmatpush.msra.mxu0 %v4890
          %v4892 = vand.u32 %v4268, 4294901760
          %v4893 = vsub.f32 %v4268, %v4892
          %v4894 = vand.u32 %v4893, 4294901760
          %4895 = vmatpush.msra.mxu0 %v4894
          %v4896 = vand.u32 %v4267, 4294901760
          %v4897 = vsub.f32 %v4267, %v4896
          %v4898 = vand.u32 %v4897, 4294901760
          %4899 = vmatpush.msra.mxu0 %v4898
          %v4900 = vand.u32 %v4266, 4294901760
          %v4901 = vsub.f32 %v4266, %v4900
          %v4902 = vand.u32 %v4901, 4294901760
          %4903 = vmatpush.msra.mxu0 %v4902
          %v4904 = vand.u32 %v4265, 4294901760
          %v4905 = vsub.f32 %v4265, %v4904
          %v4906 = vand.u32 %v4905, 4294901760
          %4907 = vmatpush.msra.mxu0 %v4906
          %v4908 = vand.u32 %v4264, 4294901760
          %v4909 = vsub.f32 %v4264, %v4908
          %v4910 = vand.u32 %v4909, 4294901760
          %4911 = vmatpush.msra.mxu0 %v4910
          %v4912 = vand.u32 %v4263, 4294901760
          %v4913 = vsub.f32 %v4263, %v4912
          %v4914 = vand.u32 %v4913, 4294901760
          %4915 = vmatpush.msra.mxu0 %v4914
          %v4916 = vand.u32 %v4262, 4294901760
          %v4917 = vsub.f32 %v4262, %v4916
          %v4918 = vand.u32 %v4917, 4294901760
          %4919 = vmatpush.msra.mxu0 %v4918
          %v4920 = vand.u32 %v4261, 4294901760
          %v4921 = vsub.f32 %v4261, %v4920
          %v4922 = vand.u32 %v4921, 4294901760
          %4923 = vmatpush.msra.mxu0 %v4922
          %v4924 = vand.u32 %v4260, 4294901760
          %v4925 = vsub.f32 %v4260, %v4924
          %v4926 = vand.u32 %v4925, 4294901760
          %4927 = vmatpush.msra.mxu0 %v4926
          %v4928 = vand.u32 %v4259, 4294901760
          %v4929 = vsub.f32 %v4259, %v4928
          %v4930 = vand.u32 %v4929, 4294901760
          %4931 = vmatpush.msra.mxu0 %v4930
          %v4932 = vand.u32 %v4258, 4294901760
          %v4933 = vsub.f32 %v4258, %v4932
          %v4934 = vand.u32 %v4933, 4294901760
          %4935 = vmatpush.msra.mxu0 %v4934
          %v4936 = vand.u32 %v4257, 4294901760
          %v4937 = vsub.f32 %v4257, %v4936
          %v4938 = vand.u32 %v4937, 4294901760
          %4939 = vmatpush.msra.mxu0 %v4938
          %v4940 = vand.u32 %v4256, 4294901760
          %v4941 = vsub.f32 %v4256, %v4940
          %v4942 = vand.u32 %v4941, 4294901760
          %4943 = vmatpush.msra.mxu0 %v4942
          %v4944 = vand.u32 %v4255, 4294901760
          %4945 = vmatmul.f32.gmra.mxu0 %v4944
          %v4946 = vpop.f32.mrf.mxu0
          %v4947 = vadd.f32 %v4878, %v4946
          %4948 = vdwg.mxu0
          %v4949 = vand.u32 %v4271, 4294901760
          %4950 = vmatpush.msra.mxu0 %v4949
          %v4951 = vand.u32 %v4270, 4294901760
          %4952 = vmatpush.msra.mxu0 %v4951
          %v4953 = vand.u32 %v4269, 4294901760
          %4954 = vmatpush.msra.mxu0 %v4953
          %v4955 = vand.u32 %v4268, 4294901760
          %4956 = vmatpush.msra.mxu0 %v4955
          %v4957 = vand.u32 %v4267, 4294901760
          %4958 = vmatpush.msra.mxu0 %v4957
          %v4959 = vand.u32 %v4266, 4294901760
          %4960 = vmatpush.msra.mxu0 %v4959
          %v4961 = vand.u32 %v4265, 4294901760
          %4962 = vmatpush.msra.mxu0 %v4961
          %v4963 = vand.u32 %v4264, 4294901760
          %4964 = vmatpush.msra.mxu0 %v4963
          %v4965 = vand.u32 %v4263, 4294901760
          %4966 = vmatpush.msra.mxu0 %v4965
          %v4967 = vand.u32 %v4262, 4294901760
          %4968 = vmatpush.msra.mxu0 %v4967
          %v4969 = vand.u32 %v4261, 4294901760
          %4970 = vmatpush.msra.mxu0 %v4969
          %v4971 = vand.u32 %v4260, 4294901760
          %4972 = vmatpush.msra.mxu0 %v4971
          %v4973 = vand.u32 %v4259, 4294901760
          %4974 = vmatpush.msra.mxu0 %v4973
          %v4975 = vand.u32 %v4258, 4294901760
          %4976 = vmatpush.msra.mxu0 %v4975
          %v4977 = vand.u32 %v4257, 4294901760
          %4978 = vmatpush.msra.mxu0 %v4977
          %v4979 = vand.u32 %v4256, 4294901760
          %4980 = vmatpush.msra.mxu0 %v4979
          %v4981 = vand.u32 %v4255, 4294901760
          %4982 = vmatmul.f32.gmra.mxu0 %v4981
          %v4983 = vpop.f32.mrf.mxu0
          %v4984 = vadd.f32 %v4947, %v4983
          %4985 = vdwg.mxu0
          %v4986 = vld [vmem:[#allocation15] sm:$0xff]
          %v4987 = vld [vmem:[#allocation15 + $0x8] sm:$0xff]
          %v4988 = vld [vmem:[#allocation15 + $0x10] sm:$0xff]
          %v4989 = vld [vmem:[#allocation15 + $0x18] sm:$0xff]
          %v4990 = vld [vmem:[#allocation15 + $0x20] sm:$0xff]
          %v4991 = vld [vmem:[#allocation15 + $0x28] sm:$0xff]
          %v4992 = vld [vmem:[#allocation15 + $0x30] sm:$0xff]
          %v4993 = vld [vmem:[#allocation15 + $0x38] sm:$0xff]
          %v4994 = vld [vmem:[#allocation15 + $0x40] sm:$0xff]
          %v4995 = vld [vmem:[#allocation15 + $0x48] sm:$0xff]
          %v4996 = vld [vmem:[#allocation15 + $0x50] sm:$0xff]
          %v4997 = vld [vmem:[#allocation15 + $0x58] sm:$0xff]
          %v4998 = vld [vmem:[#allocation15 + $0x60] sm:$0xff]
          %v4999 = vld [vmem:[#allocation15 + $0x68] sm:$0xff]
          %v5000 = vld [vmem:[#allocation15 + $0x70] sm:$0xff]
          %v5001 = vld [vmem:[#allocation15 + $0x78] sm:$0xff]
          %v5002 = vand.u32 %v5001, 4294901760
          %5003 = vmatpush.msra.mxu0 %v5002
          %v5004 = vand.u32 %v5000, 4294901760
          %5005 = vmatpush.msra.mxu0 %v5004
          %v5006 = vand.u32 %v4999, 4294901760
          %5007 = vmatpush.msra.mxu0 %v5006
          %v5008 = vand.u32 %v4998, 4294901760
          %5009 = vmatpush.msra.mxu0 %v5008
          %v5010 = vand.u32 %v4997, 4294901760
          %5011 = vmatpush.msra.mxu0 %v5010
          %v5012 = vand.u32 %v4996, 4294901760
          %5013 = vmatpush.msra.mxu0 %v5012
          %v5014 = vand.u32 %v4995, 4294901760
          %5015 = vmatpush.msra.mxu0 %v5014
          %v5016 = vand.u32 %v4994, 4294901760
          %5017 = vmatpush.msra.mxu0 %v5016
          %v5018 = vand.u32 %v4993, 4294901760
          %5019 = vmatpush.msra.mxu0 %v5018
          %v5020 = vand.u32 %v4992, 4294901760
          %5021 = vmatpush.msra.mxu0 %v5020
          %v5022 = vand.u32 %v4991, 4294901760
          %5023 = vmatpush.msra.mxu0 %v5022
          %v5024 = vand.u32 %v4990, 4294901760
          %5025 = vmatpush.msra.mxu0 %v5024
          %v5026 = vand.u32 %v4989, 4294901760
          %5027 = vmatpush.msra.mxu0 %v5026
          %v5028 = vand.u32 %v4988, 4294901760
          %5029 = vmatpush.msra.mxu0 %v5028
          %v5030 = vand.u32 %v4987, 4294901760
          %5031 = vmatpush.msra.mxu0 %v5030
          %v5032 = vand.u32 %v4986, 4294901760
          %5033 = vmatpush.msra.mxu0 %v5032
          %v5034 = vand.u32 %v647, 4294901760
          %v5035 = vsub.f32 %v647, %v5034
          %v5036 = vand.u32 %v5035, 4294901760
          %v5037 = vsub.f32 %v5035, %v5036
          %v5038 = vand.u32 %v5037, 4294901760
          %5039 = vmatmul.f32.gmra.mxu0 %v5038
          %v5040 = vpop.f32.mrf.mxu0
          %v5041 = vadd.f32 0.0, %v5040
          %5042 = vdwg.mxu0
          %v5043 = vand.u32 %v5001, 4294901760
          %v5044 = vsub.f32 %v5001, %v5043
          %v5045 = vand.u32 %v5044, 4294901760
          %v5046 = vsub.f32 %v5044, %v5045
          %v5047 = vand.u32 %v5046, 4294901760
          %5048 = vmatpush.msra.mxu0 %v5047
          %v5049 = vand.u32 %v5000, 4294901760
          %v5050 = vsub.f32 %v5000, %v5049
          %v5051 = vand.u32 %v5050, 4294901760
          %v5052 = vsub.f32 %v5050, %v5051
          %v5053 = vand.u32 %v5052, 4294901760
          %5054 = vmatpush.msra.mxu0 %v5053
          %v5055 = vand.u32 %v4999, 4294901760
          %v5056 = vsub.f32 %v4999, %v5055
          %v5057 = vand.u32 %v5056, 4294901760
          %v5058 = vsub.f32 %v5056, %v5057
          %v5059 = vand.u32 %v5058, 4294901760
          %5060 = vmatpush.msra.mxu0 %v5059
          %v5061 = vand.u32 %v4998, 4294901760
          %v5062 = vsub.f32 %v4998, %v5061
          %v5063 = vand.u32 %v5062, 4294901760
          %v5064 = vsub.f32 %v5062, %v5063
          %v5065 = vand.u32 %v5064, 4294901760
          %5066 = vmatpush.msra.mxu0 %v5065
          %v5067 = vand.u32 %v4997, 4294901760
          %v5068 = vsub.f32 %v4997, %v5067
          %v5069 = vand.u32 %v5068, 4294901760
          %v5070 = vsub.f32 %v5068, %v5069
          %v5071 = vand.u32 %v5070, 4294901760
          %5072 = vmatpush.msra.mxu0 %v5071
          %v5073 = vand.u32 %v4996, 4294901760
          %v5074 = vsub.f32 %v4996, %v5073
          %v5075 = vand.u32 %v5074, 4294901760
          %v5076 = vsub.f32 %v5074, %v5075
          %v5077 = vand.u32 %v5076, 4294901760
          %5078 = vmatpush.msra.mxu0 %v5077
          %v5079 = vand.u32 %v4995, 4294901760
          %v5080 = vsub.f32 %v4995, %v5079
          %v5081 = vand.u32 %v5080, 4294901760
          %v5082 = vsub.f32 %v5080, %v5081
          %v5083 = vand.u32 %v5082, 4294901760
          %5084 = vmatpush.msra.mxu0 %v5083
          %v5085 = vand.u32 %v4994, 4294901760
          %v5086 = vsub.f32 %v4994, %v5085
          %v5087 = vand.u32 %v5086, 4294901760
          %v5088 = vsub.f32 %v5086, %v5087
          %v5089 = vand.u32 %v5088, 4294901760
          %5090 = vmatpush.msra.mxu0 %v5089
          %v5091 = vand.u32 %v4993, 4294901760
          %v5092 = vsub.f32 %v4993, %v5091
          %v5093 = vand.u32 %v5092, 4294901760
          %v5094 = vsub.f32 %v5092, %v5093
          %v5095 = vand.u32 %v5094, 4294901760
          %5096 = vmatpush.msra.mxu0 %v5095
          %v5097 = vand.u32 %v4992, 4294901760
          %v5098 = vsub.f32 %v4992, %v5097
          %v5099 = vand.u32 %v5098, 4294901760
          %v5100 = vsub.f32 %v5098, %v5099
          %v5101 = vand.u32 %v5100, 4294901760
          %5102 = vmatpush.msra.mxu0 %v5101
          %v5103 = vand.u32 %v4991, 4294901760
          %v5104 = vsub.f32 %v4991, %v5103
          %v5105 = vand.u32 %v5104, 4294901760
          %v5106 = vsub.f32 %v5104, %v5105
          %v5107 = vand.u32 %v5106, 4294901760
          %5108 = vmatpush.msra.mxu0 %v5107
          %v5109 = vand.u32 %v4990, 4294901760
          %v5110 = vsub.f32 %v4990, %v5109
          %v5111 = vand.u32 %v5110, 4294901760
          %v5112 = vsub.f32 %v5110, %v5111
          %v5113 = vand.u32 %v5112, 4294901760
          %5114 = vmatpush.msra.mxu0 %v5113
          %v5115 = vand.u32 %v4989, 4294901760
          %v5116 = vsub.f32 %v4989, %v5115
          %v5117 = vand.u32 %v5116, 4294901760
          %v5118 = vsub.f32 %v5116, %v5117
          %v5119 = vand.u32 %v5118, 4294901760
          %5120 = vmatpush.msra.mxu0 %v5119
          %v5121 = vand.u32 %v4988, 4294901760
          %v5122 = vsub.f32 %v4988, %v5121
          %v5123 = vand.u32 %v5122, 4294901760
          %v5124 = vsub.f32 %v5122, %v5123
          %v5125 = vand.u32 %v5124, 4294901760
          %5126 = vmatpush.msra.mxu0 %v5125
          %v5127 = vand.u32 %v4987, 4294901760
          %v5128 = vsub.f32 %v4987, %v5127
          %v5129 = vand.u32 %v5128, 4294901760
          %v5130 = vsub.f32 %v5128, %v5129
          %v5131 = vand.u32 %v5130, 4294901760
          %5132 = vmatpush.msra.mxu0 %v5131
          %v5133 = vand.u32 %v4986, 4294901760
          %v5134 = vsub.f32 %v4986, %v5133
          %v5135 = vand.u32 %v5134, 4294901760
          %v5136 = vsub.f32 %v5134, %v5135
          %v5137 = vand.u32 %v5136, 4294901760
          %5138 = vmatpush.msra.mxu0 %v5137
          %v5139 = vand.u32 %v647, 4294901760
          %5140 = vmatmul.f32.gmra.mxu0 %v5139
          %v5141 = vpop.f32.mrf.mxu0
          %v5142 = vadd.f32 %v5041, %v5141
          %5143 = vdwg.mxu0
          %v5144 = vand.u32 %v5001, 4294901760
          %v5145 = vsub.f32 %v5001, %v5144
          %5146 = vmatpush.msra.mxu0 %v5145
          %v5147 = vand.u32 %v5000, 4294901760
          %v5148 = vsub.f32 %v5000, %v5147
          %5149 = vmatpush.msra.mxu0 %v5148
          %v5150 = vand.u32 %v4999, 4294901760
          %v5151 = vsub.f32 %v4999, %v5150
          %5152 = vmatpush.msra.mxu0 %v5151
          %v5153 = vand.u32 %v4998, 4294901760
          %v5154 = vsub.f32 %v4998, %v5153
          %5155 = vmatpush.msra.mxu0 %v5154
          %v5156 = vand.u32 %v4997, 4294901760
          %v5157 = vsub.f32 %v4997, %v5156
          %5158 = vmatpush.msra.mxu0 %v5157
          %v5159 = vand.u32 %v4996, 4294901760
          %v5160 = vsub.f32 %v4996, %v5159
          %5161 = vmatpush.msra.mxu0 %v5160
          %v5162 = vand.u32 %v4995, 4294901760
          %v5163 = vsub.f32 %v4995, %v5162
          %5164 = vmatpush.msra.mxu0 %v5163
          %v5165 = vand.u32 %v4994, 4294901760
          %v5166 = vsub.f32 %v4994, %v5165
          %5167 = vmatpush.msra.mxu0 %v5166
          %v5168 = vand.u32 %v4993, 4294901760
          %v5169 = vsub.f32 %v4993, %v5168
          %5170 = vmatpush.msra.mxu0 %v5169
          %v5171 = vand.u32 %v4992, 4294901760
          %v5172 = vsub.f32 %v4992, %v5171
          %5173 = vmatpush.msra.mxu0 %v5172
          %v5174 = vand.u32 %v4991, 4294901760
          %v5175 = vsub.f32 %v4991, %v5174
          %5176 = vmatpush.msra.mxu0 %v5175
          %v5177 = vand.u32 %v4990, 4294901760
          %v5178 = vsub.f32 %v4990, %v5177
          %5179 = vmatpush.msra.mxu0 %v5178
          %v5180 = vand.u32 %v4989, 4294901760
          %v5181 = vsub.f32 %v4989, %v5180
          %5182 = vmatpush.msra.mxu0 %v5181
          %v5183 = vand.u32 %v4988, 4294901760
          %v5184 = vsub.f32 %v4988, %v5183
          %5185 = vmatpush.msra.mxu0 %v5184
          %v5186 = vand.u32 %v4987, 4294901760
          %v5187 = vsub.f32 %v4987, %v5186
          %5188 = vmatpush.msra.mxu0 %v5187
          %v5189 = vand.u32 %v4986, 4294901760
          %v5190 = vsub.f32 %v4986, %v5189
          %5191 = vmatpush.msra.mxu0 %v5190
          %v5192 = vand.u32 %v647, 4294901760
          %v5193 = vsub.f32 %v647, %v5192
          %5194 = vmatmul.f32.gmra.mxu0 %v5193
          %v5195 = vpop.f32.mrf.mxu0
          %v5196 = vadd.f32 %v5142, %v5195
          %5197 = vdwg.mxu0
          %v5198 = vand.u32 %v5001, 4294901760
          %5199 = vmatpush.msra.mxu0 %v5198
          %v5200 = vand.u32 %v5000, 4294901760
          %5201 = vmatpush.msra.mxu0 %v5200
          %v5202 = vand.u32 %v4999, 4294901760
          %5203 = vmatpush.msra.mxu0 %v5202
          %v5204 = vand.u32 %v4998, 4294901760
          %5205 = vmatpush.msra.mxu0 %v5204
          %v5206 = vand.u32 %v4997, 4294901760
          %5207 = vmatpush.msra.mxu0 %v5206
          %v5208 = vand.u32 %v4996, 4294901760
          %5209 = vmatpush.msra.mxu0 %v5208
          %v5210 = vand.u32 %v4995, 4294901760
          %5211 = vmatpush.msra.mxu0 %v5210
          %v5212 = vand.u32 %v4994, 4294901760
          %5213 = vmatpush.msra.mxu0 %v5212
          %v5214 = vand.u32 %v4993, 4294901760
          %5215 = vmatpush.msra.mxu0 %v5214
          %v5216 = vand.u32 %v4992, 4294901760
          %5217 = vmatpush.msra.mxu0 %v5216
          %v5218 = vand.u32 %v4991, 4294901760
          %5219 = vmatpush.msra.mxu0 %v5218
          %v5220 = vand.u32 %v4990, 4294901760
          %5221 = vmatpush.msra.mxu0 %v5220
          %v5222 = vand.u32 %v4989, 4294901760
          %5223 = vmatpush.msra.mxu0 %v5222
          %v5224 = vand.u32 %v4988, 4294901760
          %5225 = vmatpush.msra.mxu0 %v5224
          %v5226 = vand.u32 %v4987, 4294901760
          %5227 = vmatpush.msra.mxu0 %v5226
          %v5228 = vand.u32 %v4986, 4294901760
          %5229 = vmatpush.msra.mxu0 %v5228
          %v5230 = vand.u32 %v647, 4294901760
          %v5231 = vsub.f32 %v647, %v5230
          %v5232 = vand.u32 %v5231, 4294901760
          %5233 = vmatmul.f32.gmra.mxu0 %v5232
          %v5234 = vpop.f32.mrf.mxu0
          %v5235 = vadd.f32 %v5196, %v5234
          %5236 = vdwg.mxu0
          %v5237 = vand.u32 %v5001, 4294901760
          %v5238 = vsub.f32 %v5001, %v5237
          %v5239 = vand.u32 %v5238, 4294901760
          %5240 = vmatpush.msra.mxu0 %v5239
          %v5241 = vand.u32 %v5000, 4294901760
          %v5242 = vsub.f32 %v5000, %v5241
          %v5243 = vand.u32 %v5242, 4294901760
          %5244 = vmatpush.msra.mxu0 %v5243
          %v5245 = vand.u32 %v4999, 4294901760
          %v5246 = vsub.f32 %v4999, %v5245
          %v5247 = vand.u32 %v5246, 4294901760
          %5248 = vmatpush.msra.mxu0 %v5247
          %v5249 = vand.u32 %v4998, 4294901760
          %v5250 = vsub.f32 %v4998, %v5249
          %v5251 = vand.u32 %v5250, 4294901760
          %5252 = vmatpush.msra.mxu0 %v5251
          %v5253 = vand.u32 %v4997, 4294901760
          %v5254 = vsub.f32 %v4997, %v5253
          %v5255 = vand.u32 %v5254, 4294901760
          %5256 = vmatpush.msra.mxu0 %v5255
          %v5257 = vand.u32 %v4996, 4294901760
          %v5258 = vsub.f32 %v4996, %v5257
          %v5259 = vand.u32 %v5258, 4294901760
          %5260 = vmatpush.msra.mxu0 %v5259
          %v5261 = vand.u32 %v4995, 4294901760
          %v5262 = vsub.f32 %v4995, %v5261
          %v5263 = vand.u32 %v5262, 4294901760
          %5264 = vmatpush.msra.mxu0 %v5263
          %v5265 = vand.u32 %v4994, 4294901760
          %v5266 = vsub.f32 %v4994, %v5265
          %v5267 = vand.u32 %v5266, 4294901760
          %5268 = vmatpush.msra.mxu0 %v5267
          %v5269 = vand.u32 %v4993, 4294901760
          %v5270 = vsub.f32 %v4993, %v5269
          %v5271 = vand.u32 %v5270, 4294901760
          %5272 = vmatpush.msra.mxu0 %v5271
          %v5273 = vand.u32 %v4992, 4294901760
          %v5274 = vsub.f32 %v4992, %v5273
          %v5275 = vand.u32 %v5274, 4294901760
          %5276 = vmatpush.msra.mxu0 %v5275
          %v5277 = vand.u32 %v4991, 4294901760
          %v5278 = vsub.f32 %v4991, %v5277
          %v5279 = vand.u32 %v5278, 4294901760
          %5280 = vmatpush.msra.mxu0 %v5279
          %v5281 = vand.u32 %v4990, 4294901760
          %v5282 = vsub.f32 %v4990, %v5281
          %v5283 = vand.u32 %v5282, 4294901760
          %5284 = vmatpush.msra.mxu0 %v5283
          %v5285 = vand.u32 %v4989, 4294901760
          %v5286 = vsub.f32 %v4989, %v5285
          %v5287 = vand.u32 %v5286, 4294901760
          %5288 = vmatpush.msra.mxu0 %v5287
          %v5289 = vand.u32 %v4988, 4294901760
          %v5290 = vsub.f32 %v4988, %v5289
          %v5291 = vand.u32 %v5290, 4294901760
          %5292 = vmatpush.msra.mxu0 %v5291
          %v5293 = vand.u32 %v4987, 4294901760
          %v5294 = vsub.f32 %v4987, %v5293
          %v5295 = vand.u32 %v5294, 4294901760
          %5296 = vmatpush.msra.mxu0 %v5295
          %v5297 = vand.u32 %v4986, 4294901760
          %v5298 = vsub.f32 %v4986, %v5297
          %v5299 = vand.u32 %v5298, 4294901760
          %5300 = vmatpush.msra.mxu0 %v5299
          %v5301 = vand.u32 %v647, 4294901760
          %5302 = vmatmul.f32.gmra.mxu0 %v5301
          %v5303 = vpop.f32.mrf.mxu0
          %v5304 = vadd.f32 %v5235, %v5303
          %5305 = vdwg.mxu0
          %v5306 = vand.u32 %v5001, 4294901760
          %5307 = vmatpush.msra.mxu0 %v5306
          %v5308 = vand.u32 %v5000, 4294901760
          %5309 = vmatpush.msra.mxu0 %v5308
          %v5310 = vand.u32 %v4999, 4294901760
          %5311 = vmatpush.msra.mxu0 %v5310
          %v5312 = vand.u32 %v4998, 4294901760
          %5313 = vmatpush.msra.mxu0 %v5312
          %v5314 = vand.u32 %v4997, 4294901760
          %5315 = vmatpush.msra.mxu0 %v5314
          %v5316 = vand.u32 %v4996, 4294901760
          %5317 = vmatpush.msra.mxu0 %v5316
          %v5318 = vand.u32 %v4995, 4294901760
          %5319 = vmatpush.msra.mxu0 %v5318
          %v5320 = vand.u32 %v4994, 4294901760
          %5321 = vmatpush.msra.mxu0 %v5320
          %v5322 = vand.u32 %v4993, 4294901760
          %5323 = vmatpush.msra.mxu0 %v5322
          %v5324 = vand.u32 %v4992, 4294901760
          %5325 = vmatpush.msra.mxu0 %v5324
          %v5326 = vand.u32 %v4991, 4294901760
          %5327 = vmatpush.msra.mxu0 %v5326
          %v5328 = vand.u32 %v4990, 4294901760
          %5329 = vmatpush.msra.mxu0 %v5328
          %v5330 = vand.u32 %v4989, 4294901760
          %5331 = vmatpush.msra.mxu0 %v5330
          %v5332 = vand.u32 %v4988, 4294901760
          %5333 = vmatpush.msra.mxu0 %v5332
          %v5334 = vand.u32 %v4987, 4294901760
          %5335 = vmatpush.msra.mxu0 %v5334
          %v5336 = vand.u32 %v4986, 4294901760
          %5337 = vmatpush.msra.mxu0 %v5336
          %v5338 = vand.u32 %v647, 4294901760
          %5339 = vmatmul.f32.gmra.mxu0 %v5338
          %v5340 = vpop.f32.mrf.mxu0
          %v5341 = vadd.f32 %v5304, %v5340
          %5342 = vdwg.mxu0
          %v5343 = vadd.f32 %v4984, %v5341
          %v5344 = vld [vmem:[%s7] sm:$0x1]
          %v5346 = vperm.slane %v5344, 0
          %v5348 = vadd.f32 %v5343, %v5346
          %v5349 = vtanh.pop %v5348
          %5350 = vst [vmem:[#allocation19] sm:$0xff] %v5349
          %v5351 = vpack.c.bf16 %v5349, %v5349
          %5352 = vst [vmem:[#allocation3] sm:$0xf] %v5351
        $region84: #{decoder_with_attention_forward.1} parent=51 // pred_fallthru
          _
        %v5353 = vld [vmem:[#allocation3] sm:$0xf]
        %v5354 = vld [vmem:[%s448] sm:$0xff]
        %v5355 = vld [vmem:[%s448 + $0x8] sm:$0xff]
        %v5356 = vld [vmem:[%s448 + $0x10] sm:$0xff]
        %v5357 = vld [vmem:[%s448 + $0x18] sm:$0xff]
        %v5358 = vld [vmem:[%s448 + $0x20] sm:$0xff]
        %v5359 = vld [vmem:[%s448 + $0x28] sm:$0xff]
        %v5360 = vld [vmem:[%s448 + $0x30] sm:$0xff]
        %v5361 = vld [vmem:[%s448 + $0x38] sm:$0xff]
        %v5362 = vld [vmem:[%s448 + $0x40] sm:$0xff]
        %v5363 = vld [vmem:[%s448 + $0x48] sm:$0xff]
        %v5364 = vld [vmem:[%s448 + $0x50] sm:$0xff]
        %v5365 = vld [vmem:[%s448 + $0x58] sm:$0xff]
        %v5366 = vld [vmem:[%s448 + $0x60] sm:$0xff]
        %v5367 = vld [vmem:[%s448 + $0x68] sm:$0xff]
        %v5368 = vld [vmem:[%s448 + $0x70] sm:$0xff]
        %v5369 = vld [vmem:[%s448 + $0x78] sm:$0xff]
        %v5370 = vld [vmem:[%s458] sm:$0x3]
        %v5372 = vperm.slane %v5370, 0
        %v5373 = vperm.slane %v5370, 1
        %v5392 = vunpack.c.l.b16 %v5354
        %v5393 = vunpack.c.h.b16 %v5354
        %v5394 = vunpack.c.l.b16 %v5355
        %v5395 = vunpack.c.h.b16 %v5355
        %v5396 = vunpack.c.l.b16 %v5356
        %v5397 = vunpack.c.h.b16 %v5356
        %v5398 = vunpack.c.l.b16 %v5357
        %v5399 = vunpack.c.h.b16 %v5357
        %v5400 = vunpack.c.l.b16 %v5358
        %v5401 = vunpack.c.h.b16 %v5358
        %v5402 = vunpack.c.l.b16 %v5359
        %v5403 = vunpack.c.h.b16 %v5359
        %v5404 = vunpack.c.l.b16 %v5360
        %v5405 = vunpack.c.h.b16 %v5360
        %v5406 = vunpack.c.l.b16 %v5361
        %v5407 = vunpack.c.h.b16 %v5361
        %v5408 = vunpack.c.l.b16 %v5362
        %v5409 = vunpack.c.h.b16 %v5362
        %v5410 = vunpack.c.l.b16 %v5363
        %v5411 = vunpack.c.h.b16 %v5363
        %v5412 = vunpack.c.l.b16 %v5364
        %v5413 = vunpack.c.h.b16 %v5364
        %v5414 = vunpack.c.l.b16 %v5365
        %v5415 = vunpack.c.h.b16 %v5365
        %v5416 = vunpack.c.l.b16 %v5366
        %v5417 = vunpack.c.h.b16 %v5366
        %v5418 = vunpack.c.l.b16 %v5367
        %v5419 = vunpack.c.h.b16 %v5367
        %v5420 = vunpack.c.l.b16 %v5368
        %v5421 = vunpack.c.h.b16 %v5368
        %v5422 = vunpack.c.l.b16 %v5369
        %v5423 = vunpack.c.h.b16 %v5369
        %v5424 = vpack.c.b16 %v5394, %v5392
        %v5425 = vpack.c.b16 %v5395, %v5393
        %v5426 = vpack.c.b16 %v5398, %v5396
        %v5427 = vpack.c.b16 %v5399, %v5397
        %v5428 = vpack.c.b16 %v5402, %v5400
        %v5429 = vpack.c.b16 %v5403, %v5401
        %v5430 = vpack.c.b16 %v5406, %v5404
        %v5431 = vpack.c.b16 %v5407, %v5405
        %v5432 = vpack.c.b16 %v5410, %v5408
        %v5433 = vpack.c.b16 %v5411, %v5409
        %v5434 = vpack.c.b16 %v5414, %v5412
        %v5435 = vpack.c.b16 %v5415, %v5413
        %v5436 = vpack.c.b16 %v5418, %v5416
        %v5437 = vpack.c.b16 %v5419, %v5417
        %v5438 = vpack.c.b16 %v5422, %v5420
        %v5439 = vpack.c.b16 %v5423, %v5421
        %5456 = vmatpush.bf16.msra.mxu0 %v5438
        %5457 = vmatpush.bf16.msra.mxu0 %v5436
        %5458 = vmatpush.bf16.msra.mxu0 %v5434
        %5459 = vmatpush.bf16.msra.mxu0 %v5432
        %5460 = vmatpush.bf16.msra.mxu0 %v5430
        %5461 = vmatpush.bf16.msra.mxu0 %v5428
        %5462 = vmatpush.bf16.msra.mxu0 %v5426
        %5463 = vmatpush.bf16.msra.mxu0 %v5424
        %5464 = vmatmul.bf16.gmra.mxu0 %v5353
        %v5465 = vpop.f32.mrf.mxu0
        %v5466 = vadd.f32 %v5372, %v5465
        %v5467 = vpop.f32.mrf.mxu0
        %5468 = vdwg.mxu0
        %5469 = vmatpush.bf16.msra.mxu0 %v5439
        %5470 = vmatpush.bf16.msra.mxu0 %v5437
        %5471 = vmatpush.bf16.msra.mxu0 %v5435
        %5472 = vmatpush.bf16.msra.mxu0 %v5433
        %5473 = vmatpush.bf16.msra.mxu0 %v5431
        %5474 = vmatpush.bf16.msra.mxu0 %v5429
        %5475 = vmatpush.bf16.msra.mxu0 %v5427
        %5476 = vmatpush.bf16.msra.mxu0 %v5425
        %5477 = vmatmul.bf16.gmra.mxu0 %v5353
        %v5478 = vpop.f32.mrf.mxu0
        %v5479 = vadd.f32 %v5373, %v5478
        %v5480 = vpop.f32.mrf.mxu0
        %5481 = vdwg.mxu0
        %5482 = vst [vmem:[%s507] sm:$0xff] %v5466
        %5483 = vst [vmem:[%s507 + $0x8] sm:$0xff] %v5479
        %s5484 = smul.u32 2, %s40
        %p5485 = scmp.lt.s32.totalorder %s5484, 7
        %s5486 = scalar_select %p5485, %s5484, 7
        %s5487 = smul.addr %s5486, 8
        %s5488 = scalar_lea.vmem %s10, %s5487
        // Predicated region
        $region117: #{decoder_with_attention_forward.1} parent=51 // pred_check
          %p5489 = pneg %p236
        $region118: #{decoder_with_attention_forward.1} parent=51 // pred_check_branch
          %5491 = sbr.rel (%p5489) target = $region120
        $region119: #{decoder_with_attention_forward.1} parent=51 // pred_region
          %s5492 = smul.u32 2, %s40
        $region120: #{decoder_with_attention_forward.1} parent=51 // pred_fallthru
          _
        // Predicated region
        $region121: #{decoder_with_attention_forward.1} parent=51 // pred_check
          %p5493 = pneg %p257
        $region122: #{decoder_with_attention_forward.1} parent=51 // pred_check_branch
          %5495 = sbr.rel (%p5493) target = $region124
        $region123: #{decoder_with_attention_forward.1} parent=51 // pred_region
          %5497 = vsyncadd [#allocation9], 0
          %s5499 = sshll.u32 [#allocation19], 4
          %s5500 = int_to_ptr.vmem [resolvable:$true] %s5499
          %s5501 = sshll.u32 %s11, 4
          %s5502 = int_to_ptr.hbm [resolvable:$true] %s5501
          %5504 = dma.vmem_to_hbm [thread:$0]  %s5500, 128, %s5502, [#allocation9]
        $region124: #{decoder_with_attention_forward.1} parent=51 // pred_fallthru
          _
        // Predicated region
        $region125: #{decoder_with_attention_forward.1} parent=51 // pred_check
          %p5505 = pneg %p278
        $region126: #{decoder_with_attention_forward.1} parent=51 // pred_check_branch
          %5507 = sbr.rel (%p5505) target = $region128
        $region127: #{decoder_with_attention_forward.1} parent=51 // pred_region
          %5509 = vsyncadd [#allocation21], 0
          %s5511 = sshll.u32 [#allocation20], 4
          %s5512 = int_to_ptr.vmem [resolvable:$true] %s5511
          %s5513 = sshll.u32 %s12, 4
          %s5514 = int_to_ptr.hbm [resolvable:$true] %s5513
          %5516 = dma.vmem_to_hbm [thread:$0]  %s5512, 128, %s5514, [#allocation21]
        $region128: #{decoder_with_attention_forward.1} parent=51 // pred_fallthru
          _
        // Predicated region
        $region129: #{decoder_with_attention_forward.1} parent=51 // pred_check
          %p5517 = pneg %p257
        $region130: #{decoder_with_attention_forward.1} parent=51 // pred_check_branch
          %5519 = sbr.rel (%p5517) target = $region132
        $region131: #{decoder_with_attention_forward.1} parent=51 // pred_region
          %5521 = dma.done [#allocation9], 128
        $region132: #{decoder_with_attention_forward.1} parent=51 // pred_fallthru
          _
        // Predicated region
        $region133: #{decoder_with_attention_forward.1} parent=51 // pred_check
          %p5522 = pneg %p278
        $region134: #{decoder_with_attention_forward.1} parent=51 // pred_check_branch
          %5524 = sbr.rel (%p5522) target = $region136
        $region135: #{decoder_with_attention_forward.1} parent=51 // pred_region
          %5526 = dma.done [#allocation21], 128
        $region136: #{decoder_with_attention_forward.1} parent=51 // pred_fallthru
          _
      $region52: #{decoder_with_attention_forward.1} parent=5 // pred_fallthru
        _
      %p5527 = scmp.le.s32.totalorder 2, %s35
      // Predicated region
      $region137: #{decoder_with_attention_forward.1} parent=5 // pred_check
        %p5528 = pneg %p5527
      $region138: #{decoder_with_attention_forward.1} parent=5 // pred_check_branch
        %5530 = sbr.rel (%p5528) target = $region140
      $region139: #{decoder_with_attention_forward.1} parent=5 // pred_region
        %s5531 = ssub.s32 %s35, 2
        // Predicated region
        $region141: #{decoder_with_attention_forward.1} parent=139 // pred_check
          %p5532 = pneg %p242
        $region142: #{decoder_with_attention_forward.1} parent=139 // pred_check_branch
          %5534 = sbr.rel (%p5532) target = $region144
        $region143: #{decoder_with_attention_forward.1} parent=139 // pred_region
          %s5535 = smul.u32 2, %s41
          %p5536 = scmp.lt.s32.totalorder %s5535, 7
          %s5537 = scalar_select %p5536, %s5535, 7
          %s5538 = smul.addr %s5537, 8
          %s5539 = scalar_lea.vmem %s10, %s5538
        $region144: #{decoder_with_attention_forward.1} parent=139 // pred_fallthru
          _
      $region140: #{decoder_with_attention_forward.1} parent=5 // pred_fallthru
        _
    $region6: #{decoder_with_attention_forward.1} parent=1 // loop_footer
      %s39 = sadd.s32 1, %s35
    $region7: #{decoder_with_attention_forward.1} parent=1 // loop_footer_branch
      %34 = sbr.rel target = $region3
    $region8: #{decoder_with_attention_forward.1} parent=1 // loop_exit
      _
    %5540 = vsyncpa [#allocation8], 1
    %s5541 = scalar_lea.sflag [#allocation8], 1
    %5542 = vsyncpa %s5541, 1
    %5543 = vsyncpa [#allocation11], 1
    %5544 = vsyncpa [#allocation14], 1
    %5545 = vsyncpa [#allocation17], 1
    %s5546 = scalar_lea.sflag [#allocation17], 1
    %5547 = vsyncpa %s5546, 1
    %5548 = vsyncpa [#allocation9], 1
    %s5549 = scalar_lea.sflag [#allocation9], 1
    %5550 = vsyncpa %s5549, 1
    %5551 = vsyncpa [#allocation21], 1
  %5552 = vsyncmov [#allocation4]
  %s5553 = vpop.sfrf %5552
  %p5554 = scmp.eq.s32.totalorder %s5553, 0
  %p5555 = pneg %p5554
  %5557 = shalt.err (%p5555)
  %s5558 = scalar_lea.sflag [#allocation4], 1
  %5559 = vsyncmov %s5558
  %s5560 = vpop.sfrf %5559
  %p5561 = scmp.eq.s32.totalorder %s5560, 0
  %p5562 = pneg %p5561
  %5564 = shalt.err (%p5562)
  %s5565 = scalar_lea.sflag [#allocation4], 2
  %5566 = vsyncmov %s5565
  %s5567 = vpop.sfrf %5566
  %p5568 = scmp.eq.s32.totalorder %s5567, 0
  %p5569 = pneg %p5568
  %5571 = shalt.err (%p5569)
  %s5572 = scalar_lea.sflag [#allocation4], 3
  %5573 = vsyncmov %s5572
  %s5574 = vpop.sfrf %5573
  %p5575 = scmp.eq.s32.totalorder %s5574, 0
  %p5576 = pneg %p5575
  %5578 = shalt.err (%p5576)
  %s5579 = scalar_lea.sflag [#allocation4], 4
  %5580 = vsyncmov %s5579
  %s5581 = vpop.sfrf %5580
  %p5582 = scmp.eq.s32.totalorder %s5581, 0
  %p5583 = pneg %p5582
  %5585 = shalt.err (%p5583)
  %s5586 = scalar_lea.sflag [#allocation4], 5
  %5587 = vsyncmov %s5586
  %s5588 = vpop.sfrf %5587
  %p5589 = scmp.eq.s32.totalorder %s5588, 0
  %p5590 = pneg %p5589
  %5592 = shalt.err (%p5590)
  %s5593 = scalar_lea.sflag [#allocation4], 6
  %5594 = vsyncmov %s5593
  %s5595 = vpop.sfrf %5594
  %p5596 = scmp.eq.s32.totalorder %s5595, 0
  %p5597 = pneg %p5596
  %5599 = shalt.err (%p5597)
  %s5600 = scalar_lea.sflag [#allocation4], 7
  %5601 = vsyncmov %s5600
  %s5602 = vpop.sfrf %5601
  %p5603 = scmp.eq.s32.totalorder %s5602, 0
  %p5604 = pneg %p5603
  %5606 = shalt.err (%p5604)

</llo_original>
